<compile_context>
chip_gen: v7x
topology: tpu7x:2x2x1
jax: 0.10.0
libtpu: 0.0.40
codegen_flags: <defaults>
</compile_context>

<pallas_src>
import functools

import jax
import jax.numpy as jnp
from jax.experimental import pallas as pl
from jax.experimental.pallas import tpu as pltpu


_MIB = 1024 * 1024
# Tile-selection budget sized for v7x's 64 MiB/TC (v5e/v6e have 128 MiB -> extra headroom).
_VMEM_BUDGET = 32 * _MIB
_VMEM_LIMIT_CAP = 40 * _MIB


# ---------------------------------------------------------------------------
# Fused kernel: teacher matmul + student matmul + l1_cos per-row loss
# ---------------------------------------------------------------------------
def _fused_distill_kernel(
    x_ref, wt_ref, ws_ref, bt_ref, bs_ref,          # inputs
    y_ref, rl_ref,                                  # outputs: teacher out (bf16), per-row loss
    acc_t, acc_s, r_abs, r_dot, r_na2, r_ny2,       # scratch
    *, d_out,
):
    # NOTE: the cross-j loss accumulation in r_* scratch relies on grid order (i, j, k)
    # with j and k executed SEQUENTIALLY on one core, i.e. dimension_semantics must stay
    # ("parallel", "arbitrary", "arbitrary"). Do not mark j/k parallel or reorder the grid.
    j = pl.program_id(1)
    k = pl.program_id(2)
    nj = pl.num_programs(1)
    nk = pl.num_programs(2)

    # --- K-reduction accumulators: bias folded into the init (removes two (tm,tn)
    #     adds from the epilogue, which has no MXU work to hide them behind) ------
    @pl.when(k == 0)
    def _():
        acc_t[...] = jnp.broadcast_to(bt_ref[...].astype(jnp.float32), acc_t.shape)
        acc_s[...] = jnp.broadcast_to(bs_ref[...].astype(jnp.float32), acc_s.shape)

    x = x_ref[...]                                   # [tm, tk] (loaded once, feeds both MXUs)
    if x.dtype != jnp.bfloat16:
        # In-kernel cast: saves a full wrapper-side HBM pass over x when nj <= 2.
        x = x.astype(jnp.bfloat16)
    acc_t[...] += jnp.dot(x, wt_ref[...], preferred_element_type=jnp.float32)
    acc_s[...] += jnp.dot(x, ws_ref[...], preferred_element_type=jnp.float32)

    # --- epilogue at last K step: store y (bf16), loss partial sums ---------------
    @pl.when(k == nk - 1)
    def _epilogue():
        y = acc_t[...]                               # [tm, tn] f32 (bias already included)
        a = acc_s[...]                               # [tm, tn] f32
        y_ref[...] = y.astype(y_ref.dtype)           # bf16 writeback: halves HBM write traffic

        @pl.when(j == 0)
        def _():
            r_abs[...] = jnp.zeros_like(r_abs)
            r_dot[...] = jnp.zeros_like(r_dot)
            r_na2[...] = jnp.zeros_like(r_na2)
            r_ny2[...] = jnp.zeros_like(r_ny2)

        diff = a - y
        r_abs[...] += jnp.sum(jnp.abs(diff), axis=-1, keepdims=True)   # [tm, 1]
        r_dot[...] += jnp.sum(a * y, axis=-1, keepdims=True)
        r_na2[...] += jnp.sum(a * a, axis=-1, keepdims=True)
        r_ny2[...] += jnp.sum(y * y, axis=-1, keepdims=True)

        @pl.when(j == nj - 1)
        def _():
            # torch cosine_similarity eps clamp on each norm, done on squared norms:
            #   max(||v||, eps) == sqrt(max(||v||^2, eps^2))
            eps2 = jnp.float32(1e-8) * jnp.float32(1e-8)
            l1 = r_abs[...] * jnp.float32(1.0 / d_out)
            denom2 = jnp.maximum(r_na2[...], eps2) * jnp.maximum(r_ny2[...], eps2)
            cos = r_dot[...] * jax.lax.rsqrt(denom2)
            # log(sigmoid(cos)) = -softplus(-cos), numerically stable
            log_sig = -jnp.logaddexp(jnp.float32(0.0), -cos)
            rl_ref[...] = l1 - log_sig                                  # [tm, 1]


# ---------------------------------------------------------------------------
# Tile selection / VMEM sizing
# ---------------------------------------------------------------------------
def _divisor_tile(dim, pref, align):
    """Largest multiple of `align` <= pref that divides dim, else the full dim."""
    t = min(dim, (pref // align) * align)
    while t >= align:
        if dim % t == 0:
            return t
        t -= align
    return dim


def _vmem_footprint(tm, tn, tk, x_itemsize):
    """Approximate VMEM bytes used by the pipelined kernel at these tiles."""
    dbl = 2                                    # double buffering of pipelined blocks
    x_blk = tm * tk * x_itemsize
    w_blk = tk * tn * 2                        # bf16 weights (two of them)
    b_blk = tn * 4                             # f32 biases (two of them)
    y_blk = tm * tn * 2                        # bf16 output block
    rl_blk = tm * 4
    acc = 2 * tm * tn * 4                      # f32 accumulators (scratch, single copy)
    r_scr = 4 * tm * 4
    return dbl * (x_blk + 2 * w_blk + 2 * b_blk + y_blk + rl_blk) + acc + r_scr


def _largest_tm(m, tn, tk, x_itemsize, budget, pref=1024):
    cands = [t for t in range(min(m, pref) // 16 * 16, 15, -16) if m % t == 0]
    if not cands:
        cands = [t for t in range(min(m, pref) // 8 * 8, 7, -8) if m % t == 0]
    if not cands and m <= pref:
        cands = [m]
    for t in cands:
        if _vmem_footprint(t, tn, tk, x_itemsize) <= budget:
            # v7x has two TensorCores and only the i axis is "parallel": prefer an even
            # number of i-blocks when the tile is large enough to afford halving it.
            if (m // t) % 2 == 1 and t >= 512 and t % 32 == 0:
                t //= 2
            return t
    return None


def _auto_config(m, d_in, d_out, x_itemsize, budget=_VMEM_BUDGET):
    """Returns (tm, tn, tk). Prefers tn = d_out (x read once, no cross-j carry)."""
    tk = _divisor_tile(d_in, 1024, 128)

    # Preferred: tn = Dout (single j pass). x stays in its native dtype (cast in-kernel).
    tm = _largest_tm(m, d_out, tk, x_itemsize, budget, pref=1024)
    if tm is not None:
        return tm, d_out, tk

    # Fallback: tile Dout; x is re-streamed nj times, pre-cast to bf16 when nj >= 3.
    tn = _divisor_tile(d_out, 512, 128)
    nj = d_out // tn
    eff_itemsize = 2 if (x_itemsize > 2 and nj >= 3) else x_itemsize
    tm = _largest_tm(m, tn, tk, eff_itemsize, budget, pref=512)
    if tm is None:
        tm = _divisor_tile(m, 16, 8)
    return tm, tn, tk


# ---------------------------------------------------------------------------
# Wrapper around the fused pallas_call
# ---------------------------------------------------------------------------
def distill_fused(x2d, wt, ws, bt, bs, *, tm=None, tn=None, tk=None):
    """x2d: [M, Din] (f32 or bf16), wt/ws: [Din, Dout] bf16, bt/bs: [1, Dout] f32.
    Returns (y [M, Dout] bf16, per_row_loss [M, 1] f32)."""
    m, d_in = x2d.shape
    d_out = wt.shape[1]

    if tm is None or tn is None or tk is None:
        a_tm, a_tn, a_tk = _auto_config(m, d_in, d_out, x2d.dtype.itemsize)
        tm = a_tm if tm is None else tm
        tn = a_tn if tn is None else tn
        tk = a_tk if tk is None else tk

    assert m % tm == 0 and d_out % tn == 0 and d_in % tk == 0, (
        f"shapes must divide tiles: M={m}, Din={d_in}, Dout={d_out}, tiles=({tm},{tn},{tk})")
    # TODO(synk): non-divisible shapes (e.g. hidden=11008 with an awkward batch*seq) need a
    # padding + row-masking path so padded rows do not pollute the loss mean.

    nj = d_out // tn
    # Pre-cast x to bf16 only when the kernel re-streams it >= 3 times; otherwise the
    # extra wrapper HBM pass costs more than reading f32 once or twice.
    if x2d.dtype != jnp.bfloat16 and nj >= 3:
        x2d = x2d.astype(jnp.bfloat16)

    grid = (m // tm, nj, d_in // tk)
    ni, _, nk = grid
    kernel = functools.partial(_fused_distill_kernel, d_out=d_out)

    x_itemsize = x2d.dtype.itemsize
    # True DMA volume: weights re-read once per i block, x once per j block.
    bytes_accessed = (
        nj * m * d_in * x_itemsize
        + ni * (wt.size + ws.size) * 2
        + ni * nj * (bt.size + bs.size) * 4
        + m * d_out * 2 + m * 4)
    cost = pl.CostEstimate(
        flops=2 * 2 * m * d_in * d_out,       # two matmuls
        transcendentals=3 * m,                # rsqrt + exp + log per row
        bytes_accessed=int(bytes_accessed),
    )

    footprint = _vmem_footprint(tm, tn, tk, x_itemsize)
    vmem_limit = int(min(max(footprint * 5 // 4, 16 * _MIB), _VMEM_LIMIT_CAP))
    vmem_limit = max(vmem_limit, footprint + 2 * _MIB)   # never below the real footprint

    y, row_loss = pl.pallas_call(
        kernel,
        out_shape=(
            jax.ShapeDtypeStruct((m, d_out), jnp.bfloat16),
            jax.ShapeDtypeStruct((m, 1), jnp.float32),
        ),
        grid_spec=pltpu.PrefetchScalarGridSpec(
            num_scalar_prefetch=0,
            grid=grid,
            in_specs=[
                pl.BlockSpec((tm, tk), lambda i, j, k: (i, k)),   # x
                pl.BlockSpec((tk, tn), lambda i, j, k: (k, j)),   # teacher W
                pl.BlockSpec((tk, tn), lambda i, j, k: (k, j)),   # student W
                pl.BlockSpec((1, tn), lambda i, j, k: (0, j)),    # teacher b
                pl.BlockSpec((1, tn), lambda i, j, k: (0, j)),    # student b
            ],
            out_specs=[
                pl.BlockSpec((tm, tn), lambda i, j, k: (i, j)),   # y (bf16)
                pl.BlockSpec((tm, 1), lambda i, j, k: (i, 0)),    # per-row loss
            ],
            scratch_shapes=[
                pltpu.VMEM((tm, tn), jnp.float32),   # teacher accumulator
                pltpu.VMEM((tm, tn), jnp.float32),   # student accumulator
                pltpu.VMEM((tm, 1), jnp.float32),    # sum |a - y|
                pltpu.VMEM((tm, 1), jnp.float32),    # sum a*y
                pltpu.VMEM((tm, 1), jnp.float32),    # sum a*a
                pltpu.VMEM((tm, 1), jnp.float32),    # sum y*y
            ],
        ),
        compiler_params=pltpu.CompilerParams(
            dimension_semantics=("parallel", "arbitrary", "arbitrary"),
            vmem_limit_bytes=vmem_limit,
        ),
        cost_estimate=cost,
    )(x2d, wt, ws, bt, bs)
    return y, row_loss


# ---------------------------------------------------------------------------
# Distiller wrapper (pure-JAX glue around the fused Pallas hot path)
# ---------------------------------------------------------------------------
class DistillerPallas:
    """Teacher & student are dense Linear(hidden -> hidden) layers (bf16 weights)."""

    def __init__(self, hidden: int, key, tiles=(None, None, None)):
        kt_w, kt_b, ks_w, ks_b = jax.random.split(key, 4)
        scale = 1.0 / jnp.sqrt(hidden)
        # Weights stored as [D_in, D_out] bf16 (x @ W + b == PyTorch x @ W.T + b with W.T stored).
        self.teacher_w = (jax.random.normal(kt_w, (hidden, hidden), jnp.float32) * scale
                          ).astype(jnp.bfloat16)
        self.teacher_b = jax.random.normal(kt_b, (1, hidden), jnp.float32) * 0.01
        self.student_w = (jax.random.normal(ks_w, (hidden, hidden), jnp.float32) * scale
                          ).astype(jnp.bfloat16)
        self.student_b = jax.random.normal(ks_b, (1, hidden), jnp.float32) * 0.01
        self._tiles = tiles

    @functools.partial(jax.jit, static_argnums=0)
    def forward(self, x):
        """x: [batch, seq, hidden]. Returns (teacher_output [bf16], distillation_loss)."""
        b, s, d = x.shape
        # Distiller.detach(): distillation is local, gradients do not flow into inputs.
        x = jax.lax.stop_gradient(x)
        x2d = x.reshape(b * s, d)                            # dtype handled inside distill_fused

        tm, tn, tk = self._tiles
        y, row_loss = distill_fused(
            x2d, self.teacher_w, self.student_w, self.teacher_b, self.student_b,
            tm=tm, tn=tn, tk=tk)

        loss = jnp.mean(row_loss)                            # tiny final reduction
        return y.reshape(b, s, d), loss


# ---------------------------------------------------------------------------
# Reference (pure jnp, same bf16 matmul inputs / f32 accumulation)
# ---------------------------------------------------------------------------
def _reference(x, dist: DistillerPallas):
    b, s, d = x.shape
    x2d = x.reshape(b * s, d).astype(jnp.bfloat16)
    y = jnp.dot(x2d, dist.teacher_w, preferred_element_type=jnp.float32) + dist.teacher_b
    a = jnp.dot(x2d, dist.student_w, preferred_element_type=jnp.float32) + dist.student_b
    l1 = jnp.mean(jnp.abs(a - y), axis=-1)
    eps = 1e-8
    cos = jnp.sum(a * y, -1) / (
        jnp.maximum(jnp.linalg.norm(a, axis=-1), eps)
        * jnp.maximum(jnp.linalg.norm(y, axis=-1), eps))
    loss = jnp.mean(l1 - jnp.log(jax.nn.sigmoid(cos)))
    return y.reshape(b, s, d), loss


if __name__ == "__main__":
    key = jax.random.PRNGKey(0)
    k_param, k_x = jax.random.split(key)

    # Small but tiling-exercising shapes: M=256 rows, hidden=256.
    batch, seq, hidden = 2, 128, 256
    x = jax.random.normal(k_x, (batch, seq, hidden), jnp.float32)

    # 1) Default (auto) tiles: tn = hidden -> single j pass, x read once, cast in-kernel.
    dist_auto = DistillerPallas(hidden, k_param)
    y0, loss0 = dist_auto.forward(x)
    jax.block_until_ready((y0, loss0))

    # 2) Explicit small tiles (64, 128, 128) -> grid (4, 2, 2): exercises the K accumulator,
    #    the cross-j per-row loss carry, and multiple parallel i blocks.
    dist_tiled = DistillerPallas(hidden, k_param, tiles=(64, 128, 128))
    y1, loss1 = dist_tiled.forward(x)
    jax.block_until_ready((y1, loss1))

    y_ref, loss_ref = _reference(x, dist_auto)
    for name, yk, lk in (("auto", y0, loss0), ("tiled", y1, loss1)):
        assert jnp.allclose(yk.astype(jnp.float32), y_ref, atol=2e-2, rtol=2e-2), \
            f"{name}: teacher output mismatch"
        assert jnp.allclose(lk, loss_ref, atol=2e-3, rtol=2e-3), f"{name}: loss mismatch"

    print("KERNEL_OK")
</pallas_src>

<mosaic_0001>
module attributes {stable_mosaic.version = 11 : i64} {
  func.func @_fused_distill_kernel(%arg0: i32, %arg1: i32, %arg2: i32, %arg3: memref<256x256xf32, #tpu.memory_space<vmem>>, %arg4: memref<256x256xbf16, #tpu.memory_space<vmem>>, %arg5: memref<256x256xbf16, #tpu.memory_space<vmem>>, %arg6: memref<1x256xf32, #tpu.memory_space<vmem>>, %arg7: memref<1x256xf32, #tpu.memory_space<vmem>>, %arg8: memref<256x256xbf16, #tpu.memory_space<vmem>>, %arg9: memref<256x1xf32, #tpu.memory_space<vmem>>, %arg10: memref<256x256xf32, #tpu.memory_space<vmem>>, %arg11: memref<256x256xf32, #tpu.memory_space<vmem>>, %arg12: memref<256x1xf32, #tpu.memory_space<vmem>>, %arg13: memref<256x1xf32, #tpu.memory_space<vmem>>, %arg14: memref<256x1xf32, #tpu.memory_space<vmem>>, %arg15: memref<256x1xf32, #tpu.memory_space<vmem>>) attributes {dimension_semantics = [#tpu.dimension_semantics<parallel>, #tpu.dimension_semantics<arbitrary>, #tpu.dimension_semantics<arbitrary>], iteration_bounds = array<i64: 1, 1, 1>, scalar_prefetch = 0 : i64, scratch_operands = 6 : i64, tpu.core_type = #tpu.core_type<tc>, window_params = [{transform_indices = @transform_0, window_bounds = array<i64: 256, 256>}, {transform_indices = @transform_1, window_bounds = array<i64: 256, 256>}, {transform_indices = @transform_2, window_bounds = array<i64: 256, 256>}, {transform_indices = @transform_3, window_bounds = array<i64: 1, 256>}, {transform_indices = @transform_4, window_bounds = array<i64: 1, 256>}, {transform_indices = @transform_5, window_bounds = array<i64: 256, 256>}, {transform_indices = @transform_6, window_bounds = array<i64: 256, 1>}]} {
    %c0_i32 = arith.constant 0 : i32
    %0 = arith.cmpi eq, %arg2, %c0_i32 : i32
    %1 = arith.extui %0 : i1 to i32
    %c0_i32_0 = arith.constant 0 : i32
    %2 = arith.cmpi ne, %1, %c0_i32_0 : i32
    scf.if %2 {
      %c0_17 = arith.constant 0 : index
      %c0_18 = arith.constant 0 : index
      %18 = vector.load %arg6[%c0_17, %c0_18] : memref<1x256xf32, #tpu.memory_space<vmem>>, vector<1x256xf32>
      %19 = vector.shape_cast %18 : vector<1x256xf32> to vector<1x256xf32>
      %20 = vector.broadcast %19 : vector<1x256xf32> to vector<256x256xf32>
      %c0_19 = arith.constant 0 : index
      %c0_20 = arith.constant 0 : index
      %21 = vector.load %arg10[%c0_19, %c0_20] : memref<256x256xf32, #tpu.memory_space<vmem>>, vector<256x256xf32>
      tpu.vector_store %arg10[%c0_19, %c0_20], %20 {strides = array<i32>} : memref<256x256xf32, #tpu.memory_space<vmem>>, vector<256x256xf32>,
      %c0_21 = arith.constant 0 : index
      %c0_22 = arith.constant 0 : index
      %22 = vector.load %arg7[%c0_21, %c0_22] : memref<1x256xf32, #tpu.memory_space<vmem>>, vector<1x256xf32>
      %23 = vector.shape_cast %22 : vector<1x256xf32> to vector<1x256xf32>
      %24 = vector.broadcast %23 : vector<1x256xf32> to vector<256x256xf32>
      %c0_23 = arith.constant 0 : index
      %c0_24 = arith.constant 0 : index
      %25 = vector.load %arg11[%c0_23, %c0_24] : memref<256x256xf32, #tpu.memory_space<vmem>>, vector<256x256xf32>
      tpu.vector_store %arg11[%c0_23, %c0_24], %24 {strides = array<i32>} : memref<256x256xf32, #tpu.memory_space<vmem>>, vector<256x256xf32>,
    } else {
    }
    %c0 = arith.constant 0 : index
    %c0_1 = arith.constant 0 : index
    %3 = vector.load %arg3[%c0, %c0_1] : memref<256x256xf32, #tpu.memory_space<vmem>>, vector<256x256xf32>
    %4 = arith.truncf %3 : vector<256x256xf32> to vector<256x256xbf16>
    %c0_2 = arith.constant 0 : index
    %c0_3 = arith.constant 0 : index
    %5 = vector.load %arg10[%c0_2, %c0_3] : memref<256x256xf32, #tpu.memory_space<vmem>>, vector<256x256xf32>
    %c0_4 = arith.constant 0 : index
    %c0_5 = arith.constant 0 : index
    %6 = vector.load %arg4[%c0_4, %c0_5] : memref<256x256xbf16, #tpu.memory_space<vmem>>, vector<256x256xbf16>
    %cst = arith.constant dense<0.000000e+00> : vector<256x256xf32>
    %7 = tpu.matmul %4, %6, %cst {dimension_numbers = #tpu.dot_dimension_numbers<[1], [0], [0], [1], [0, 0, 1, 1], [], []>} : vector<256x256xbf16>, vector<256x256xbf16>, vector<256x256xf32> -> vector<256x256xf32>
    %8 = arith.addf %5, %7 : vector<256x256xf32>
    %c0_6 = arith.constant 0 : index
    %c0_7 = arith.constant 0 : index
    %9 = vector.load %arg10[%c0_6, %c0_7] : memref<256x256xf32, #tpu.memory_space<vmem>>, vector<256x256xf32>
    tpu.vector_store %arg10[%c0_6, %c0_7], %8 {strides = array<i32>} : memref<256x256xf32, #tpu.memory_space<vmem>>, vector<256x256xf32>,
    %c0_8 = arith.constant 0 : index
    %c0_9 = arith.constant 0 : index
    %10 = vector.load %arg11[%c0_8, %c0_9] : memref<256x256xf32, #tpu.memory_space<vmem>>, vector<256x256xf32>
    %c0_10 = arith.constant 0 : index
    %c0_11 = arith.constant 0 : index
    %11 = vector.load %arg5[%c0_10, %c0_11] : memref<256x256xbf16, #tpu.memory_space<vmem>>, vector<256x256xbf16>
    %cst_12 = arith.constant dense<0.000000e+00> : vector<256x256xf32>
    %12 = tpu.matmul %4, %11, %cst_12 {dimension_numbers = #tpu.dot_dimension_numbers<[1], [0], [0], [1], [0, 0, 1, 1], [], []>} : vector<256x256xbf16>, vector<256x256xbf16>, vector<256x256xf32> -> vector<256x256xf32>
    %13 = arith.addf %10, %12 : vector<256x256xf32>
    %c0_13 = arith.constant 0 : index
    %c0_14 = arith.constant 0 : index
    %14 = vector.load %arg11[%c0_13, %c0_14] : memref<256x256xf32, #tpu.memory_space<vmem>>, vector<256x256xf32>
    tpu.vector_store %arg11[%c0_13, %c0_14], %13 {strides = array<i32>} : memref<256x256xf32, #tpu.memory_space<vmem>>, vector<256x256xf32>,
    %c0_i32_15 = arith.constant 0 : i32
    %15 = arith.cmpi eq, %arg2, %c0_i32_15 : i32
    %16 = arith.extui %15 : i1 to i32
    %c0_i32_16 = arith.constant 0 : i32
    %17 = arith.cmpi ne, %16, %c0_i32_16 : i32
    scf.if %17 {
      %c0_17 = arith.constant 0 : index
      %c0_18 = arith.constant 0 : index
      %18 = vector.load %arg10[%c0_17, %c0_18] : memref<256x256xf32, #tpu.memory_space<vmem>>, vector<256x256xf32>
      %c0_19 = arith.constant 0 : index
      %c0_20 = arith.constant 0 : index
      %19 = vector.load %arg11[%c0_19, %c0_20] : memref<256x256xf32, #tpu.memory_space<vmem>>, vector<256x256xf32>
      %20 = arith.truncf %18 : vector<256x256xf32> to vector<256x256xbf16>
      %c0_21 = arith.constant 0 : index
      %c0_22 = arith.constant 0 : index
      %21 = vector.load %arg8[%c0_21, %c0_22] : memref<256x256xbf16, #tpu.memory_space<vmem>>, vector<256x256xbf16>
      tpu.vector_store %arg8[%c0_21, %c0_22], %20 {strides = array<i32>} : memref<256x256xbf16, #tpu.memory_space<vmem>>, vector<256x256xbf16>,
      %c0_i32_23 = arith.constant 0 : i32
      %22 = arith.cmpi eq, %arg1, %c0_i32_23 : i32
      %23 = arith.extui %22 : i1 to i32
      %c0_i32_24 = arith.constant 0 : i32
      %24 = arith.cmpi ne, %23, %c0_i32_24 : i32
      scf.if %24 {
        %cst_47 = arith.constant 0.000000e+00 : f32
        %53 = vector.broadcast %cst_47 : f32 to vector<256x1xf32>
        %c0_48 = arith.constant 0 : index
        %c0_49 = arith.constant 0 : index
        %54 = vector.load %arg12[%c0_48, %c0_49] : memref<256x1xf32, #tpu.memory_space<vmem>>, vector<256x1xf32>
        tpu.vector_store %arg12[%c0_48, %c0_49], %53 {strides = array<i32>} : memref<256x1xf32, #tpu.memory_space<vmem>>, vector<256x1xf32>,
        %cst_50 = arith.constant 0.000000e+00 : f32
        %55 = vector.broadcast %cst_50 : f32 to vector<256x1xf32>
        %c0_51 = arith.constant 0 : index
        %c0_52 = arith.constant 0 : index
        %56 = vector.load %arg13[%c0_51, %c0_52] : memref<256x1xf32, #tpu.memory_space<vmem>>, vector<256x1xf32>
        tpu.vector_store %arg13[%c0_51, %c0_52], %55 {strides = array<i32>} : memref<256x1xf32, #tpu.memory_space<vmem>>, vector<256x1xf32>,
        %cst_53 = arith.constant 0.000000e+00 : f32
        %57 = vector.broadcast %cst_53 : f32 to vector<256x1xf32>
        %c0_54 = arith.constant 0 : index
        %c0_55 = arith.constant 0 : index
        %58 = vector.load %arg14[%c0_54, %c0_55] : memref<256x1xf32, #tpu.memory_space<vmem>>, vector<256x1xf32>
        tpu.vector_store %arg14[%c0_54, %c0_55], %57 {strides = array<i32>} : memref<256x1xf32, #tpu.memory_space<vmem>>, vector<256x1xf32>,
        %cst_56 = arith.constant 0.000000e+00 : f32
        %59 = vector.broadcast %cst_56 : f32 to vector<256x1xf32>
        %c0_57 = arith.constant 0 : index
        %c0_58 = arith.constant 0 : index
        %60 = vector.load %arg15[%c0_57, %c0_58] : memref<256x1xf32, #tpu.memory_space<vmem>>, vector<256x1xf32>
        tpu.vector_store %arg15[%c0_57, %c0_58], %59 {strides = array<i32>} : memref<256x1xf32, #tpu.memory_space<vmem>>, vector<256x1xf32>,
      } else {
      }
      %25 = arith.subf %19, %18 : vector<256x256xf32>
      %c0_25 = arith.constant 0 : index
      %c0_26 = arith.constant 0 : index
      %26 = vector.load %arg12[%c0_25, %c0_26] : memref<256x1xf32, #tpu.memory_space<vmem>>, vector<256x1xf32>
      %27 = math.absf %25 : vector<256x256xf32>
      %cst_27 = arith.constant dense<0.000000e+00> : vector<256xf32>
      %28 = vector.multi_reduction <add>, %27, %cst_27 [1] : vector<256x256xf32> to vector<256xf32>
      %29 = vector.shape_cast %28 : vector<256xf32> to vector<256x1xf32>
      %30 = arith.addf %26, %29 : vector<256x1xf32>
      %c0_28 = arith.constant 0 : index
      %c0_29 = arith.constant 0 : index
      %31 = vector.load %arg12[%c0_28, %c0_29] : memref<256x1xf32, #tpu.memory_space<vmem>>, vector<256x1xf32>
      tpu.vector_store %arg12[%c0_28, %c0_29], %30 {strides = array<i32>} : memref<256x1xf32, #tpu.memory_space<vmem>>, vector<256x1xf32>,
      %c0_30 = arith.constant 0 : index
      %c0_31 = arith.constant 0 : index
      %32 = vector.load %arg13[%c0_30, %c0_31] : memref<256x1xf32, #tpu.memory_space<vmem>>, vector<256x1xf32>
      %33 = arith.mulf %19, %18 : vector<256x256xf32>
      %cst_32 = arith.constant dense<0.000000e+00> : vector<256xf32>
      %34 = vector.multi_reduction <add>, %33, %cst_32 [1] : vector<256x256xf32> to vector<256xf32>
      %35 = vector.shape_cast %34 : vector<256xf32> to vector<256x1xf32>
      %36 = arith.addf %32, %35 : vector<256x1xf32>
      %c0_33 = arith.constant 0 : index
      %c0_34 = arith.constant 0 : index
      %37 = vector.load %arg13[%c0_33, %c0_34] : memref<256x1xf32, #tpu.memory_space<vmem>>, vector<256x1xf32>
      tpu.vector_store %arg13[%c0_33, %c0_34], %36 {strides = array<i32>} : memref<256x1xf32, #tpu.memory_space<vmem>>, vector<256x1xf32>,
      %c0_35 = arith.constant 0 : index
      %c0_36 = arith.constant 0 : index
      %38 = vector.load %arg14[%c0_35, %c0_36] : memref<256x1xf32, #tpu.memory_space<vmem>>, vector<256x1xf32>
      %39 = arith.mulf %19, %19 : vector<256x256xf32>
      %cst_37 = arith.constant dense<0.000000e+00> : vector<256xf32>
      %40 = vector.multi_reduction <add>, %39, %cst_37 [1] : vector<256x256xf32> to vector<256xf32>
      %41 = vector.shape_cast %40 : vector<256xf32> to vector<256x1xf32>
      %42 = arith.addf %38, %41 : vector<256x1xf32>
      %c0_38 = arith.constant 0 : index
      %c0_39 = arith.constant 0 : index
      %43 = vector.load %arg14[%c0_38, %c0_39] : memref<256x1xf32, #tpu.memory_space<vmem>>, vector<256x1xf32>
      tpu.vector_store %arg14[%c0_38, %c0_39], %42 {strides = array<i32>} : memref<256x1xf32, #tpu.memory_space<vmem>>, vector<256x1xf32>,
      %c0_40 = arith.constant 0 : index
      %c0_41 = arith.constant 0 : index
      %44 = vector.load %arg15[%c0_40, %c0_41] : memref<256x1xf32, #tpu.memory_space<vmem>>, vector<256x1xf32>
      %45 = arith.mulf %18, %18 : vector<256x256xf32>
      %cst_42 = arith.constant dense<0.000000e+00> : vector<256xf32>
      %46 = vector.multi_reduction <add>, %45, %cst_42 [1] : vector<256x256xf32> to vector<256xf32>
      %47 = vector.shape_cast %46 : vector<256xf32> to vector<256x1xf32>
      %48 = arith.addf %44, %47 : vector<256x1xf32>
      %c0_43 = arith.constant 0 : index
      %c0_44 = arith.constant 0 : index
      %49 = vector.load %arg15[%c0_43, %c0_44] : memref<256x1xf32, #tpu.memory_space<vmem>>, vector<256x1xf32>
      tpu.vector_store %arg15[%c0_43, %c0_44], %48 {strides = array<i32>} : memref<256x1xf32, #tpu.memory_space<vmem>>, vector<256x1xf32>,
      %c0_i32_45 = arith.constant 0 : i32
      %50 = arith.cmpi eq, %arg1, %c0_i32_45 : i32
      %51 = arith.extui %50 : i1 to i32
      %c0_i32_46 = arith.constant 0 : i32
      %52 = arith.cmpi ne, %51, %c0_i32_46 : i32
      scf.if %52 {
        %cst_47 = arith.constant 9.99999993E-9 : f32
        %cst_48 = arith.constant 9.99999993E-9 : f32
        %53 = arith.mulf %cst_47, %cst_48 : f32
        %c0_49 = arith.constant 0 : index
        %c0_50 = arith.constant 0 : index
        %54 = vector.load %arg12[%c0_49, %c0_50] : memref<256x1xf32, #tpu.memory_space<vmem>>, vector<256x1xf32>
        %cst_51 = arith.constant 3.906250e-03 : f32
        %55 = vector.broadcast %cst_51 : f32 to vector<256x1xf32>
        %56 = arith.mulf %54, %55 : vector<256x1xf32>
        %c0_52 = arith.constant 0 : index
        %c0_53 = arith.constant 0 : index
        %57 = vector.load %arg14[%c0_52, %c0_53] : memref<256x1xf32, #tpu.memory_space<vmem>>, vector<256x1xf32>
        %58 = vector.broadcast %53 : f32 to vector<256x1xf32>
        %59 = arith.maximumf %57, %58 : vector<256x1xf32>
        %c0_54 = arith.constant 0 : index
        %c0_55 = arith.constant 0 : index
        %60 = vector.load %arg15[%c0_54, %c0_55] : memref<256x1xf32, #tpu.memory_space<vmem>>, vector<256x1xf32>
        %61 = vector.broadcast %53 : f32 to vector<256x1xf32>
        %62 = arith.maximumf %60, %61 : vector<256x1xf32>
        %63 = arith.mulf %59, %62 : vector<256x1xf32>
        %c0_56 = arith.constant 0 : index
        %c0_57 = arith.constant 0 : index
        %64 = vector.load %arg13[%c0_56, %c0_57] : memref<256x1xf32, #tpu.memory_space<vmem>>, vector<256x1xf32>
        %65 = math.rsqrt %63 : vector<256x1xf32>
        %66 = arith.mulf %64, %65 : vector<256x1xf32>
        %cst_58 = arith.constant 0.000000e+00 : f32
        %67 = vector.broadcast %cst_58 : f32 to vector<256x1xf32>
        %68 = arith.subf %67, %66 : vector<256x1xf32>
        %cst_59 = arith.constant 0.000000e+00 : f32
        %69 = vector.broadcast %cst_59 : f32 to vector<256x1xf32>
        %70 = arith.maximumf %69, %68 : vector<256x1xf32>
        %71 = vector.broadcast %cst_59 : f32 to vector<256x1xf32>
        %72 = arith.subf %71, %68 : vector<256x1xf32>
        %73 = arith.cmpf one, %72, %72 : vector<256x1xf32>
        %74 = vector.broadcast %cst_59 : f32 to vector<256x1xf32>
        %75 = arith.addf %74, %68 : vector<256x1xf32>
        %76 = math.absf %72 : vector<256x1xf32>
        %cst_60 = arith.constant 0.000000e+00 : f32
        %77 = vector.broadcast %cst_60 : f32 to vector<256x1xf32>
        %78 = arith.subf %77, %76 : vector<256x1xf32>
        %79 = math.exp %78 : vector<256x1xf32>
        %80 = math.log1p %79 : vector<256x1xf32>
        %81 = arith.addf %70, %80 : vector<256x1xf32>
        %82 = arith.select %73, %75, %81 : vector<256x1xi1>, vector<256x1xf32>
        %cst_61 = arith.constant 0.000000e+00 : f32
        %83 = vector.broadcast %cst_61 : f32 to vector<256x1xf32>
        %84 = arith.subf %83, %82 : vector<256x1xf32>
        %85 = arith.subf %56, %84 : vector<256x1xf32>
        %c0_62 = arith.constant 0 : index
        %c0_63 = arith.constant 0 : index
        %86 = vector.load %arg9[%c0_62, %c0_63] : memref<256x1xf32, #tpu.memory_space<vmem>>, vector<256x1xf32>
        tpu.vector_store %arg9[%c0_62, %c0_63], %85 {strides = array<i32>} : memref<256x1xf32, #tpu.memory_space<vmem>>, vector<256x1xf32>,
      } else {
      }
    } else {
    }
    return
  }
  func.func @transform_0(%arg0: i32, %arg1: i32, %arg2: i32) -> (i32, i32) {
    %c0_i32 = arith.constant 0 : i32
    return %arg0, %arg2 : i32, i32
  }
  func.func @transform_1(%arg0: i32, %arg1: i32, %arg2: i32) -> (i32, i32) {
    %c0_i32 = arith.constant 0 : i32
    return %arg2, %arg1 : i32, i32
  }
  func.func @transform_2(%arg0: i32, %arg1: i32, %arg2: i32) -> (i32, i32) {
    %c0_i32 = arith.constant 0 : i32
    return %arg2, %arg1 : i32, i32
  }
  func.func @transform_3(%arg0: i32, %arg1: i32, %arg2: i32) -> (i32, i32) {
    %c0_i32 = arith.constant 0 : i32
    %c0_i32_0 = arith.constant 0 : i32
    return %c0_i32, %arg1 : i32, i32
  }
  func.func @transform_4(%arg0: i32, %arg1: i32, %arg2: i32) -> (i32, i32) {
    %c0_i32 = arith.constant 0 : i32
    %c0_i32_0 = arith.constant 0 : i32
    return %c0_i32, %arg1 : i32, i32
  }
  func.func @transform_5(%arg0: i32, %arg1: i32, %arg2: i32) -> (i32, i32) {
    %c0_i32 = arith.constant 0 : i32
    return %arg0, %arg1 : i32, i32
  }
  func.func @transform_6(%arg0: i32, %arg1: i32, %arg2: i32) -> (i32, i32) {
    %c0_i32 = arith.constant 0 : i32
    %c0_i32_0 = arith.constant 0 : i32
    return %arg0, %c0_i32 : i32, i32
  }
}

</mosaic_0001>

<llo_original>
// kernel: forward.1
$region0: #{forward.1}
  #allocation0 [shape = 'u32[]', space=smem, size = 0x4, offset = 0x4, fixed_abs, tag = 'smem constant byte address 0x4 - core index']
  #allocation1 [shape = 'u32[144,128]{1,0:T(1,128)}', space=vmem, size = 0x12000, scoped, tag = 'internal scratch']
  #allocation2 [shape = 'f32[256,256]{1,0:T(8,128)}', space=vmem, size = 0x40000, scoped, tag = 'scratch operand']
  #allocation3 [shape = 'f32[256,256]{1,0:T(8,128)}', space=vmem, size = 0x40000, scoped, tag = 'scratch operand']
  #allocation4 [shape = 'f32[256,1]{1,0:T(8,128)}', space=vmem, size = 0x20000, scoped, tag = 'scratch operand']
  #allocation5 [shape = 'f32[256,1]{1,0:T(8,128)}', space=vmem, size = 0x20000, scoped, tag = 'scratch operand']
  #allocation6 [shape = 'f32[256,1]{1,0:T(8,128)}', space=vmem, size = 0x20000, scoped, tag = 'scratch operand']
  #allocation7 [shape = 'f32[256,1]{1,0:T(8,128)}', space=vmem, size = 0x20000, scoped, tag = 'scratch operand']
  %s0 = inlined_call_operand.vmem [shape: f32[256,256], index: 0, kind: input, shape index: {}]
  %s1 = inlined_call_operand.vmem [shape: bf16[256,256], index: 1, kind: input, shape index: {}]
  %s2 = inlined_call_operand.vmem [shape: bf16[256,256], index: 2, kind: input, shape index: {}]
  %s3 = inlined_call_operand.vmem [shape: f32[1,256], index: 3, kind: input, shape index: {}]
  %s4 = inlined_call_operand.vmem [shape: f32[1,256], index: 4, kind: input, shape index: {}]
  %s5 = inlined_call_operand.hbm [shape: bf16[256,256], index: 5, kind: output, shape index: {0}]
  %s6 = inlined_call_operand.vmem [shape: f32[256,1], index: 6, kind: output, shape index: {1}]
  %7 = xla_tuple %s5, %s6
  %s8 = sld [smem:[#allocation0]]
  $region54: #{forward.1} parent=0
    _
  %s10 = ssub.s32 1, %s8
  %s11 = scalar_select 0, %s10, %s8
  $region1: #{forward.1} parent=0
    #allocation8 [shape = 'u8[131072]{0}', space=vmem, size = 0x20000, scoped, tag = 'output window, operand 0, single buffered']
    #allocation9 [shape = 's32[1]{0}', space=sflag, size = 0x4, scoped, tag = 'scoped memory for forward.1']
    %12 = vsyncpa [#allocation9], 0
    // Predicated region
    $region2: #{forward.1} parent=1 // pred_check
      _
    $region3: #{forward.1} parent=1 // pred_check_branch
      %14 = sbr.rel (0) target = $region5
    $region4: #{forward.1} parent=1 // pred_region
      _
    $region5: #{forward.1} parent=1 // pred_fallthru
      _
    // Predicated region
    $region6: #{forward.1} parent=1 // pred_check
      _
    $region7: #{forward.1} parent=1 // pred_check_branch
      %16 = sbr.rel (0) target = $region9
    $region8: #{forward.1} parent=1 // pred_region
      _
    $region9: #{forward.1} parent=1 // pred_fallthru
      _
    // Predicated region
    $region10: #{forward.1} parent=1 // pred_check
      _
    $region11: #{forward.1} parent=1 // pred_check_branch
      %18 = sbr.rel (0) target = $region13
    $region12: #{forward.1} parent=1 // pred_region
      _
    $region13: #{forward.1} parent=1 // pred_fallthru
      _
    // Predicated region
    $region14: #{forward.1} parent=1 // pred_check
      _
    $region15: #{forward.1} parent=1 // pred_check_branch
      %20 = sbr.rel (0) target = $region17
    $region16: #{forward.1} parent=1 // pred_region
      _
    $region17: #{forward.1} parent=1 // pred_fallthru
      _
    // Predicated region
    $region18: #{forward.1} parent=1 // pred_check
      _
    $region19: #{forward.1} parent=1 // pred_check_branch
      %22 = sbr.rel (0) target = $region21
    $region20: #{forward.1} parent=1 // pred_region
      _
    $region21: #{forward.1} parent=1 // pred_fallthru
      _
    %p23 = scmp.eq.s32.totalorder 0, 0
    // Predicated region
    $region22: #{forward.1} parent=1 // pred_check
      %p24 = pneg %p23
    $region23: #{forward.1} parent=1 // pred_check_branch
      %26 = sbr.rel (%p24) target = $region25
    $region24: #{forward.1} parent=1 // pred_region
      %v27 = vld [vmem:[%s3] sm:$0x3]
      %v29 = vlaneseq
      %v30 = vshrl.u32 %v29, 7
      %v31 = vsub.s32 0, %v30
      %v32 = vrot.slane %v27, %v31
      %v33 = vlaneseq
      %v34 = vshrl.u32 %v33, 7
      %v35 = vsub.s32 1, %v34
      %v36 = vrot.slane %v27, %v35
      %39 = vst [vmem:[#allocation2] sm:$0xff] %v32
      %40 = vst [vmem:[#allocation2 + $0x8] sm:$0xff] %v36
      %41 = vst [vmem:[#allocation2 + $0x10] sm:$0xff] %v32
      %42 = vst [vmem:[#allocation2 + $0x18] sm:$0xff] %v36
      %43 = vst [vmem:[#allocation2 + $0x20] sm:$0xff] %v32
      %44 = vst [vmem:[#allocation2 + $0x28] sm:$0xff] %v36
      %45 = vst [vmem:[#allocation2 + $0x30] sm:$0xff] %v32
      %46 = vst [vmem:[#allocation2 + $0x38] sm:$0xff] %v36
      %47 = vst [vmem:[#allocation2 + $0x40] sm:$0xff] %v32
      %48 = vst [vmem:[#allocation2 + $0x48] sm:$0xff] %v36
      %49 = vst [vmem:[#allocation2 + $0x50] sm:$0xff] %v32
      %50 = vst [vmem:[#allocation2 + $0x58] sm:$0xff] %v36
      %51 = vst [vmem:[#allocation2 + $0x60] sm:$0xff] %v32
      %52 = vst [vmem:[#allocation2 + $0x68] sm:$0xff] %v36
      %53 = vst [vmem:[#allocation2 + $0x70] sm:$0xff] %v32
      %54 = vst [vmem:[#allocation2 + $0x78] sm:$0xff] %v36
      %55 = vst [vmem:[#allocation2 + $0x80] sm:$0xff] %v32
      %56 = vst [vmem:[#allocation2 + $0x88] sm:$0xff] %v36
      %57 = vst [vmem:[#allocation2 + $0x90] sm:$0xff] %v32
      %58 = vst [vmem:[#allocation2 + $0x98] sm:$0xff] %v36
      %59 = vst [vmem:[#allocation2 + $0xa0] sm:$0xff] %v32
      %60 = vst [vmem:[#allocation2 + $0xa8] sm:$0xff] %v36
      %61 = vst [vmem:[#allocation2 + $0xb0] sm:$0xff] %v32
      %62 = vst [vmem:[#allocation2 + $0xb8] sm:$0xff] %v36
      %63 = vst [vmem:[#allocation2 + $0xc0] sm:$0xff] %v32
      %64 = vst [vmem:[#allocation2 + $0xc8] sm:$0xff] %v36
      %65 = vst [vmem:[#allocation2 + $0xd0] sm:$0xff] %v32
      %66 = vst [vmem:[#allocation2 + $0xd8] sm:$0xff] %v36
      %67 = vst [vmem:[#allocation2 + $0xe0] sm:$0xff] %v32
      %68 = vst [vmem:[#allocation2 + $0xe8] sm:$0xff] %v36
      %69 = vst [vmem:[#allocation2 + $0xf0] sm:$0xff] %v32
      %70 = vst [vmem:[#allocation2 + $0xf8] sm:$0xff] %v36
      %71 = vst [vmem:[#allocation2 + $0x100] sm:$0xff] %v32
      %72 = vst [vmem:[#allocation2 + $0x108] sm:$0xff] %v36
      %73 = vst [vmem:[#allocation2 + $0x110] sm:$0xff] %v32
      %74 = vst [vmem:[#allocation2 + $0x118] sm:$0xff] %v36
      %75 = vst [vmem:[#allocation2 + $0x120] sm:$0xff] %v32
      %76 = vst [vmem:[#allocation2 + $0x128] sm:$0xff] %v36
      %77 = vst [vmem:[#allocation2 + $0x130] sm:$0xff] %v32
      %78 = vst [vmem:[#allocation2 + $0x138] sm:$0xff] %v36
      %79 = vst [vmem:[#allocation2 + $0x140] sm:$0xff] %v32
      %80 = vst [vmem:[#allocation2 + $0x148] sm:$0xff] %v36
      %81 = vst [vmem:[#allocation2 + $0x150] sm:$0xff] %v32
      %82 = vst [vmem:[#allocation2 + $0x158] sm:$0xff] %v36
      %83 = vst [vmem:[#allocation2 + $0x160] sm:$0xff] %v32
      %84 = vst [vmem:[#allocation2 + $0x168] sm:$0xff] %v36
      %85 = vst [vmem:[#allocation2 + $0x170] sm:$0xff] %v32
      %86 = vst [vmem:[#allocation2 + $0x178] sm:$0xff] %v36
      %87 = vst [vmem:[#allocation2 + $0x180] sm:$0xff] %v32
      %88 = vst [vmem:[#allocation2 + $0x188] sm:$0xff] %v36
      %89 = vst [vmem:[#allocation2 + $0x190] sm:$0xff] %v32
      %90 = vst [vmem:[#allocation2 + $0x198] sm:$0xff] %v36
      %91 = vst [vmem:[#allocation2 + $0x1a0] sm:$0xff] %v32
      %92 = vst [vmem:[#allocation2 + $0x1a8] sm:$0xff] %v36
      %93 = vst [vmem:[#allocation2 + $0x1b0] sm:$0xff] %v32
      %94 = vst [vmem:[#allocation2 + $0x1b8] sm:$0xff] %v36
      %95 = vst [vmem:[#allocation2 + $0x1c0] sm:$0xff] %v32
      %96 = vst [vmem:[#allocation2 + $0x1c8] sm:$0xff] %v36
      %97 = vst [vmem:[#allocation2 + $0x1d0] sm:$0xff] %v32
      %98 = vst [vmem:[#allocation2 + $0x1d8] sm:$0xff] %v36
      %99 = vst [vmem:[#allocation2 + $0x1e0] sm:$0xff] %v32
      %100 = vst [vmem:[#allocation2 + $0x1e8] sm:$0xff] %v36
      %101 = vst [vmem:[#allocation2 + $0x1f0] sm:$0xff] %v32
      %102 = vst [vmem:[#allocation2 + $0x1f8] sm:$0xff] %v36
      %v103 = vld [vmem:[%s4] sm:$0x3]
      %v105 = vlaneseq
      %v106 = vshrl.u32 %v105, 7
      %v107 = vsub.s32 0, %v106
      %v108 = vrot.slane %v103, %v107
      %v109 = vlaneseq
      %v110 = vshrl.u32 %v109, 7
      %v111 = vsub.s32 1, %v110
      %v112 = vrot.slane %v103, %v111
      %115 = vst [vmem:[#allocation3] sm:$0xff] %v108
      %116 = vst [vmem:[#allocation3 + $0x8] sm:$0xff] %v112
      %117 = vst [vmem:[#allocation3 + $0x10] sm:$0xff] %v108
      %118 = vst [vmem:[#allocation3 + $0x18] sm:$0xff] %v112
      %119 = vst [vmem:[#allocation3 + $0x20] sm:$0xff] %v108
      %120 = vst [vmem:[#allocation3 + $0x28] sm:$0xff] %v112
      %121 = vst [vmem:[#allocation3 + $0x30] sm:$0xff] %v108
      %122 = vst [vmem:[#allocation3 + $0x38] sm:$0xff] %v112
      %123 = vst [vmem:[#allocation3 + $0x40] sm:$0xff] %v108
      %124 = vst [vmem:[#allocation3 + $0x48] sm:$0xff] %v112
      %125 = vst [vmem:[#allocation3 + $0x50] sm:$0xff] %v108
      %126 = vst [vmem:[#allocation3 + $0x58] sm:$0xff] %v112
      %127 = vst [vmem:[#allocation3 + $0x60] sm:$0xff] %v108
      %128 = vst [vmem:[#allocation3 + $0x68] sm:$0xff] %v112
      %129 = vst [vmem:[#allocation3 + $0x70] sm:$0xff] %v108
      %130 = vst [vmem:[#allocation3 + $0x78] sm:$0xff] %v112
      %131 = vst [vmem:[#allocation3 + $0x80] sm:$0xff] %v108
      %132 = vst [vmem:[#allocation3 + $0x88] sm:$0xff] %v112
      %133 = vst [vmem:[#allocation3 + $0x90] sm:$0xff] %v108
      %134 = vst [vmem:[#allocation3 + $0x98] sm:$0xff] %v112
      %135 = vst [vmem:[#allocation3 + $0xa0] sm:$0xff] %v108
      %136 = vst [vmem:[#allocation3 + $0xa8] sm:$0xff] %v112
      %137 = vst [vmem:[#allocation3 + $0xb0] sm:$0xff] %v108
      %138 = vst [vmem:[#allocation3 + $0xb8] sm:$0xff] %v112
      %139 = vst [vmem:[#allocation3 + $0xc0] sm:$0xff] %v108
      %140 = vst [vmem:[#allocation3 + $0xc8] sm:$0xff] %v112
      %141 = vst [vmem:[#allocation3 + $0xd0] sm:$0xff] %v108
      %142 = vst [vmem:[#allocation3 + $0xd8] sm:$0xff] %v112
      %143 = vst [vmem:[#allocation3 + $0xe0] sm:$0xff] %v108
      %144 = vst [vmem:[#allocation3 + $0xe8] sm:$0xff] %v112
      %145 = vst [vmem:[#allocation3 + $0xf0] sm:$0xff] %v108
      %146 = vst [vmem:[#allocation3 + $0xf8] sm:$0xff] %v112
      %147 = vst [vmem:[#allocation3 + $0x100] sm:$0xff] %v108
      %148 = vst [vmem:[#allocation3 + $0x108] sm:$0xff] %v112
      %149 = vst [vmem:[#allocation3 + $0x110] sm:$0xff] %v108
      %150 = vst [vmem:[#allocation3 + $0x118] sm:$0xff] %v112
      %151 = vst [vmem:[#allocation3 + $0x120] sm:$0xff] %v108
      %152 = vst [vmem:[#allocation3 + $0x128] sm:$0xff] %v112
      %153 = vst [vmem:[#allocation3 + $0x130] sm:$0xff] %v108
      %154 = vst [vmem:[#allocation3 + $0x138] sm:$0xff] %v112
      %155 = vst [vmem:[#allocation3 + $0x140] sm:$0xff] %v108
      %156 = vst [vmem:[#allocation3 + $0x148] sm:$0xff] %v112
      %157 = vst [vmem:[#allocation3 + $0x150] sm:$0xff] %v108
      %158 = vst [vmem:[#allocation3 + $0x158] sm:$0xff] %v112
      %159 = vst [vmem:[#allocation3 + $0x160] sm:$0xff] %v108
      %160 = vst [vmem:[#allocation3 + $0x168] sm:$0xff] %v112
      %161 = vst [vmem:[#allocation3 + $0x170] sm:$0xff] %v108
      %162 = vst [vmem:[#allocation3 + $0x178] sm:$0xff] %v112
      %163 = vst [vmem:[#allocation3 + $0x180] sm:$0xff] %v108
      %164 = vst [vmem:[#allocation3 + $0x188] sm:$0xff] %v112
      %165 = vst [vmem:[#allocation3 + $0x190] sm:$0xff] %v108
      %166 = vst [vmem:[#allocation3 + $0x198] sm:$0xff] %v112
      %167 = vst [vmem:[#allocation3 + $0x1a0] sm:$0xff] %v108
      %168 = vst [vmem:[#allocation3 + $0x1a8] sm:$0xff] %v112
      %169 = vst [vmem:[#allocation3 + $0x1b0] sm:$0xff] %v108
      %170 = vst [vmem:[#allocation3 + $0x1b8] sm:$0xff] %v112
      %171 = vst [vmem:[#allocation3 + $0x1c0] sm:$0xff] %v108
      %172 = vst [vmem:[#allocation3 + $0x1c8] sm:$0xff] %v112
      %173 = vst [vmem:[#allocation3 + $0x1d0] sm:$0xff] %v108
      %174 = vst [vmem:[#allocation3 + $0x1d8] sm:$0xff] %v112
      %175 = vst [vmem:[#allocation3 + $0x1e0] sm:$0xff] %v108
      %176 = vst [vmem:[#allocation3 + $0x1e8] sm:$0xff] %v112
      %177 = vst [vmem:[#allocation3 + $0x1f0] sm:$0xff] %v108
      %178 = vst [vmem:[#allocation3 + $0x1f8] sm:$0xff] %v112
    $region25: #{forward.1} parent=1 // pred_fallthru
      _
    %v179 = vld [vmem:[%s0] sm:$0xff]
    %v180 = vld [vmem:[%s0 + $0x8] sm:$0xff]
    %v181 = vld [vmem:[%s0 + $0x10] sm:$0xff]
    %v182 = vld [vmem:[%s0 + $0x18] sm:$0xff]
    %v183 = vld [vmem:[%s0 + $0x20] sm:$0xff]
    %v184 = vld [vmem:[%s0 + $0x28] sm:$0xff]
    %v185 = vld [vmem:[%s0 + $0x30] sm:$0xff]
    %v186 = vld [vmem:[%s0 + $0x38] sm:$0xff]
    %v187 = vld [vmem:[%s0 + $0x40] sm:$0xff]
    %v188 = vld [vmem:[%s0 + $0x48] sm:$0xff]
    %v189 = vld [vmem:[%s0 + $0x50] sm:$0xff]
    %v190 = vld [vmem:[%s0 + $0x58] sm:$0xff]
    %v191 = vld [vmem:[%s0 + $0x60] sm:$0xff]
    %v192 = vld [vmem:[%s0 + $0x68] sm:$0xff]
    %v193 = vld [vmem:[%s0 + $0x70] sm:$0xff]
    %v194 = vld [vmem:[%s0 + $0x78] sm:$0xff]
    %v195 = vld [vmem:[%s0 + $0x80] sm:$0xff]
    %v196 = vld [vmem:[%s0 + $0x88] sm:$0xff]
    %v197 = vld [vmem:[%s0 + $0x90] sm:$0xff]
    %v198 = vld [vmem:[%s0 + $0x98] sm:$0xff]
    %v199 = vld [vmem:[%s0 + $0xa0] sm:$0xff]
    %v200 = vld [vmem:[%s0 + $0xa8] sm:$0xff]
    %v201 = vld [vmem:[%s0 + $0xb0] sm:$0xff]
    %v202 = vld [vmem:[%s0 + $0xb8] sm:$0xff]
    %v203 = vld [vmem:[%s0 + $0xc0] sm:$0xff]
    %v204 = vld [vmem:[%s0 + $0xc8] sm:$0xff]
    %v205 = vld [vmem:[%s0 + $0xd0] sm:$0xff]
    %v206 = vld [vmem:[%s0 + $0xd8] sm:$0xff]
    %v207 = vld [vmem:[%s0 + $0xe0] sm:$0xff]
    %v208 = vld [vmem:[%s0 + $0xe8] sm:$0xff]
    %v209 = vld [vmem:[%s0 + $0xf0] sm:$0xff]
    %v210 = vld [vmem:[%s0 + $0xf8] sm:$0xff]
    %v211 = vld [vmem:[%s0 + $0x100] sm:$0xff]
    %v212 = vld [vmem:[%s0 + $0x108] sm:$0xff]
    %v213 = vld [vmem:[%s0 + $0x110] sm:$0xff]
    %v214 = vld [vmem:[%s0 + $0x118] sm:$0xff]
    %v215 = vld [vmem:[%s0 + $0x120] sm:$0xff]
    %v216 = vld [vmem:[%s0 + $0x128] sm:$0xff]
    %v217 = vld [vmem:[%s0 + $0x130] sm:$0xff]
    %v218 = vld [vmem:[%s0 + $0x138] sm:$0xff]
    %v219 = vld [vmem:[%s0 + $0x140] sm:$0xff]
    %v220 = vld [vmem:[%s0 + $0x148] sm:$0xff]
    %v221 = vld [vmem:[%s0 + $0x150] sm:$0xff]
    %v222 = vld [vmem:[%s0 + $0x158] sm:$0xff]
    %v223 = vld [vmem:[%s0 + $0x160] sm:$0xff]
    %v224 = vld [vmem:[%s0 + $0x168] sm:$0xff]
    %v225 = vld [vmem:[%s0 + $0x170] sm:$0xff]
    %v226 = vld [vmem:[%s0 + $0x178] sm:$0xff]
    %v227 = vld [vmem:[%s0 + $0x180] sm:$0xff]
    %v228 = vld [vmem:[%s0 + $0x188] sm:$0xff]
    %v229 = vld [vmem:[%s0 + $0x190] sm:$0xff]
    %v230 = vld [vmem:[%s0 + $0x198] sm:$0xff]
    %v231 = vld [vmem:[%s0 + $0x1a0] sm:$0xff]
    %v232 = vld [vmem:[%s0 + $0x1a8] sm:$0xff]
    %v233 = vld [vmem:[%s0 + $0x1b0] sm:$0xff]
    %v234 = vld [vmem:[%s0 + $0x1b8] sm:$0xff]
    %v235 = vld [vmem:[%s0 + $0x1c0] sm:$0xff]
    %v236 = vld [vmem:[%s0 + $0x1c8] sm:$0xff]
    %v237 = vld [vmem:[%s0 + $0x1d0] sm:$0xff]
    %v238 = vld [vmem:[%s0 + $0x1d8] sm:$0xff]
    %v239 = vld [vmem:[%s0 + $0x1e0] sm:$0xff]
    %v240 = vld [vmem:[%s0 + $0x1e8] sm:$0xff]
    %v241 = vld [vmem:[%s0 + $0x1f0] sm:$0xff]
    %v242 = vld [vmem:[%s0 + $0x1f8] sm:$0xff]
    %v243 = vpack.c.bf16 %v181, %v179
    %v244 = vpack.c.bf16 %v182, %v180
    %v245 = vpack.c.bf16 %v185, %v183
    %v246 = vpack.c.bf16 %v186, %v184
    %v247 = vpack.c.bf16 %v189, %v187
    %v248 = vpack.c.bf16 %v190, %v188
    %v249 = vpack.c.bf16 %v193, %v191
    %v250 = vpack.c.bf16 %v194, %v192
    %v251 = vpack.c.bf16 %v197, %v195
    %v252 = vpack.c.bf16 %v198, %v196
    %v253 = vpack.c.bf16 %v201, %v199
    %v254 = vpack.c.bf16 %v202, %v200
    %v255 = vpack.c.bf16 %v205, %v203
    %v256 = vpack.c.bf16 %v206, %v204
    %v257 = vpack.c.bf16 %v209, %v207
    %v258 = vpack.c.bf16 %v210, %v208
    %v259 = vpack.c.bf16 %v213, %v211
    %v260 = vpack.c.bf16 %v214, %v212
    %v261 = vpack.c.bf16 %v217, %v215
    %v262 = vpack.c.bf16 %v218, %v216
    %v263 = vpack.c.bf16 %v221, %v219
    %v264 = vpack.c.bf16 %v222, %v220
    %v265 = vpack.c.bf16 %v225, %v223
    %v266 = vpack.c.bf16 %v226, %v224
    %v267 = vpack.c.bf16 %v229, %v227
    %v268 = vpack.c.bf16 %v230, %v228
    %v269 = vpack.c.bf16 %v233, %v231
    %v270 = vpack.c.bf16 %v234, %v232
    %v271 = vpack.c.bf16 %v237, %v235
    %v272 = vpack.c.bf16 %v238, %v236
    %v273 = vpack.c.bf16 %v241, %v239
    %v274 = vpack.c.bf16 %v242, %v240
    %v275 = vld [vmem:[#allocation2] sm:$0xff]
    %v276 = vld [vmem:[#allocation2 + $0x8] sm:$0xff]
    %v277 = vld [vmem:[#allocation2 + $0x10] sm:$0xff]
    %v278 = vld [vmem:[#allocation2 + $0x18] sm:$0xff]
    %v279 = vld [vmem:[#allocation2 + $0x20] sm:$0xff]
    %v280 = vld [vmem:[#allocation2 + $0x28] sm:$0xff]
    %v281 = vld [vmem:[#allocation2 + $0x30] sm:$0xff]
    %v282 = vld [vmem:[#allocation2 + $0x38] sm:$0xff]
    %v283 = vld [vmem:[#allocation2 + $0x40] sm:$0xff]
    %v284 = vld [vmem:[#allocation2 + $0x48] sm:$0xff]
    %v285 = vld [vmem:[#allocation2 + $0x50] sm:$0xff]
    %v286 = vld [vmem:[#allocation2 + $0x58] sm:$0xff]
    %v287 = vld [vmem:[#allocation2 + $0x60] sm:$0xff]
    %v288 = vld [vmem:[#allocation2 + $0x68] sm:$0xff]
    %v289 = vld [vmem:[#allocation2 + $0x70] sm:$0xff]
    %v290 = vld [vmem:[#allocation2 + $0x78] sm:$0xff]
    %v291 = vld [vmem:[#allocation2 + $0x80] sm:$0xff]
    %v292 = vld [vmem:[#allocation2 + $0x88] sm:$0xff]
    %v293 = vld [vmem:[#allocation2 + $0x90] sm:$0xff]
    %v294 = vld [vmem:[#allocation2 + $0x98] sm:$0xff]
    %v295 = vld [vmem:[#allocation2 + $0xa0] sm:$0xff]
    %v296 = vld [vmem:[#allocation2 + $0xa8] sm:$0xff]
    %v297 = vld [vmem:[#allocation2 + $0xb0] sm:$0xff]
    %v298 = vld [vmem:[#allocation2 + $0xb8] sm:$0xff]
    %v299 = vld [vmem:[#allocation2 + $0xc0] sm:$0xff]
    %v300 = vld [vmem:[#allocation2 + $0xc8] sm:$0xff]
    %v301 = vld [vmem:[#allocation2 + $0xd0] sm:$0xff]
    %v302 = vld [vmem:[#allocation2 + $0xd8] sm:$0xff]
    %v303 = vld [vmem:[#allocation2 + $0xe0] sm:$0xff]
    %v304 = vld [vmem:[#allocation2 + $0xe8] sm:$0xff]
    %v305 = vld [vmem:[#allocation2 + $0xf0] sm:$0xff]
    %v306 = vld [vmem:[#allocation2 + $0xf8] sm:$0xff]
    %v307 = vld [vmem:[#allocation2 + $0x100] sm:$0xff]
    %v308 = vld [vmem:[#allocation2 + $0x108] sm:$0xff]
    %v309 = vld [vmem:[#allocation2 + $0x110] sm:$0xff]
    %v310 = vld [vmem:[#allocation2 + $0x118] sm:$0xff]
    %v311 = vld [vmem:[#allocation2 + $0x120] sm:$0xff]
    %v312 = vld [vmem:[#allocation2 + $0x128] sm:$0xff]
    %v313 = vld [vmem:[#allocation2 + $0x130] sm:$0xff]
    %v314 = vld [vmem:[#allocation2 + $0x138] sm:$0xff]
    %v315 = vld [vmem:[#allocation2 + $0x140] sm:$0xff]
    %v316 = vld [vmem:[#allocation2 + $0x148] sm:$0xff]
    %v317 = vld [vmem:[#allocation2 + $0x150] sm:$0xff]
    %v318 = vld [vmem:[#allocation2 + $0x158] sm:$0xff]
    %v319 = vld [vmem:[#allocation2 + $0x160] sm:$0xff]
    %v320 = vld [vmem:[#allocation2 + $0x168] sm:$0xff]
    %v321 = vld [vmem:[#allocation2 + $0x170] sm:$0xff]
    %v322 = vld [vmem:[#allocation2 + $0x178] sm:$0xff]
    %v323 = vld [vmem:[#allocation2 + $0x180] sm:$0xff]
    %v324 = vld [vmem:[#allocation2 + $0x188] sm:$0xff]
    %v325 = vld [vmem:[#allocation2 + $0x190] sm:$0xff]
    %v326 = vld [vmem:[#allocation2 + $0x198] sm:$0xff]
    %v327 = vld [vmem:[#allocation2 + $0x1a0] sm:$0xff]
    %v328 = vld [vmem:[#allocation2 + $0x1a8] sm:$0xff]
    %v329 = vld [vmem:[#allocation2 + $0x1b0] sm:$0xff]
    %v330 = vld [vmem:[#allocation2 + $0x1b8] sm:$0xff]
    %v331 = vld [vmem:[#allocation2 + $0x1c0] sm:$0xff]
    %v332 = vld [vmem:[#allocation2 + $0x1c8] sm:$0xff]
    %v333 = vld [vmem:[#allocation2 + $0x1d0] sm:$0xff]
    %v334 = vld [vmem:[#allocation2 + $0x1d8] sm:$0xff]
    %v335 = vld [vmem:[#allocation2 + $0x1e0] sm:$0xff]
    %v336 = vld [vmem:[#allocation2 + $0x1e8] sm:$0xff]
    %v337 = vld [vmem:[#allocation2 + $0x1f0] sm:$0xff]
    %v338 = vld [vmem:[#allocation2 + $0x1f8] sm:$0xff]
    %v339 = vld [vmem:[%s1] sm:$0xff]
    %v340 = vld [vmem:[%s1 + $0x8] sm:$0xff]
    %v341 = vld [vmem:[%s1 + $0x10] sm:$0xff]
    %v342 = vld [vmem:[%s1 + $0x18] sm:$0xff]
    %v343 = vld [vmem:[%s1 + $0x20] sm:$0xff]
    %v344 = vld [vmem:[%s1 + $0x28] sm:$0xff]
    %v345 = vld [vmem:[%s1 + $0x30] sm:$0xff]
    %v346 = vld [vmem:[%s1 + $0x38] sm:$0xff]
    %v347 = vld [vmem:[%s1 + $0x40] sm:$0xff]
    %v348 = vld [vmem:[%s1 + $0x48] sm:$0xff]
    %v349 = vld [vmem:[%s1 + $0x50] sm:$0xff]
    %v350 = vld [vmem:[%s1 + $0x58] sm:$0xff]
    %v351 = vld [vmem:[%s1 + $0x60] sm:$0xff]
    %v352 = vld [vmem:[%s1 + $0x68] sm:$0xff]
    %v353 = vld [vmem:[%s1 + $0x70] sm:$0xff]
    %v354 = vld [vmem:[%s1 + $0x78] sm:$0xff]
    %v355 = vld [vmem:[%s1 + $0x80] sm:$0xff]
    %v356 = vld [vmem:[%s1 + $0x88] sm:$0xff]
    %v357 = vld [vmem:[%s1 + $0x90] sm:$0xff]
    %v358 = vld [vmem:[%s1 + $0x98] sm:$0xff]
    %v359 = vld [vmem:[%s1 + $0xa0] sm:$0xff]
    %v360 = vld [vmem:[%s1 + $0xa8] sm:$0xff]
    %v361 = vld [vmem:[%s1 + $0xb0] sm:$0xff]
    %v362 = vld [vmem:[%s1 + $0xb8] sm:$0xff]
    %v363 = vld [vmem:[%s1 + $0xc0] sm:$0xff]
    %v364 = vld [vmem:[%s1 + $0xc8] sm:$0xff]
    %v365 = vld [vmem:[%s1 + $0xd0] sm:$0xff]
    %v366 = vld [vmem:[%s1 + $0xd8] sm:$0xff]
    %v367 = vld [vmem:[%s1 + $0xe0] sm:$0xff]
    %v368 = vld [vmem:[%s1 + $0xe8] sm:$0xff]
    %v369 = vld [vmem:[%s1 + $0xf0] sm:$0xff]
    %v370 = vld [vmem:[%s1 + $0xf8] sm:$0xff]
    %v403 = vunpack.c.l.b16 %v339
    %v404 = vunpack.c.h.b16 %v339
    %v405 = vunpack.c.l.b16 %v340
    %v406 = vunpack.c.h.b16 %v340
    %v407 = vunpack.c.l.b16 %v341
    %v408 = vunpack.c.h.b16 %v341
    %v409 = vunpack.c.l.b16 %v342
    %v410 = vunpack.c.h.b16 %v342
    %v411 = vunpack.c.l.b16 %v343
    %v412 = vunpack.c.h.b16 %v343
    %v413 = vunpack.c.l.b16 %v344
    %v414 = vunpack.c.h.b16 %v344
    %v415 = vunpack.c.l.b16 %v345
    %v416 = vunpack.c.h.b16 %v345
    %v417 = vunpack.c.l.b16 %v346
    %v418 = vunpack.c.h.b16 %v346
    %v419 = vunpack.c.l.b16 %v347
    %v420 = vunpack.c.h.b16 %v347
    %v421 = vunpack.c.l.b16 %v348
    %v422 = vunpack.c.h.b16 %v348
    %v423 = vunpack.c.l.b16 %v349
    %v424 = vunpack.c.h.b16 %v349
    %v425 = vunpack.c.l.b16 %v350
    %v426 = vunpack.c.h.b16 %v350
    %v427 = vunpack.c.l.b16 %v351
    %v428 = vunpack.c.h.b16 %v351
    %v429 = vunpack.c.l.b16 %v352
    %v430 = vunpack.c.h.b16 %v352
    %v431 = vunpack.c.l.b16 %v353
    %v432 = vunpack.c.h.b16 %v353
    %v433 = vunpack.c.l.b16 %v354
    %v434 = vunpack.c.h.b16 %v354
    %v435 = vunpack.c.l.b16 %v355
    %v436 = vunpack.c.h.b16 %v355
    %v437 = vunpack.c.l.b16 %v356
    %v438 = vunpack.c.h.b16 %v356
    %v439 = vunpack.c.l.b16 %v357
    %v440 = vunpack.c.h.b16 %v357
    %v441 = vunpack.c.l.b16 %v358
    %v442 = vunpack.c.h.b16 %v358
    %v443 = vunpack.c.l.b16 %v359
    %v444 = vunpack.c.h.b16 %v359
    %v445 = vunpack.c.l.b16 %v360
    %v446 = vunpack.c.h.b16 %v360
    %v447 = vunpack.c.l.b16 %v361
    %v448 = vunpack.c.h.b16 %v361
    %v449 = vunpack.c.l.b16 %v362
    %v450 = vunpack.c.h.b16 %v362
    %v451 = vunpack.c.l.b16 %v363
    %v452 = vunpack.c.h.b16 %v363
    %v453 = vunpack.c.l.b16 %v364
    %v454 = vunpack.c.h.b16 %v364
    %v455 = vunpack.c.l.b16 %v365
    %v456 = vunpack.c.h.b16 %v365
    %v457 = vunpack.c.l.b16 %v366
    %v458 = vunpack.c.h.b16 %v366
    %v459 = vunpack.c.l.b16 %v367
    %v460 = vunpack.c.h.b16 %v367
    %v461 = vunpack.c.l.b16 %v368
    %v462 = vunpack.c.h.b16 %v368
    %v463 = vunpack.c.l.b16 %v369
    %v464 = vunpack.c.h.b16 %v369
    %v465 = vunpack.c.l.b16 %v370
    %v466 = vunpack.c.h.b16 %v370
    %v467 = vpack.c.b16 %v405, %v403
    %v468 = vpack.c.b16 %v406, %v404
    %v469 = vpack.c.b16 %v409, %v407
    %v470 = vpack.c.b16 %v410, %v408
    %v471 = vpack.c.b16 %v413, %v411
    %v472 = vpack.c.b16 %v414, %v412
    %v473 = vpack.c.b16 %v417, %v415
    %v474 = vpack.c.b16 %v418, %v416
    %v475 = vpack.c.b16 %v421, %v419
    %v476 = vpack.c.b16 %v422, %v420
    %v477 = vpack.c.b16 %v425, %v423
    %v478 = vpack.c.b16 %v426, %v424
    %v479 = vpack.c.b16 %v429, %v427
    %v480 = vpack.c.b16 %v430, %v428
    %v481 = vpack.c.b16 %v433, %v431
    %v482 = vpack.c.b16 %v434, %v432
    %v483 = vpack.c.b16 %v437, %v435
    %v484 = vpack.c.b16 %v438, %v436
    %v485 = vpack.c.b16 %v441, %v439
    %v486 = vpack.c.b16 %v442, %v440
    %v487 = vpack.c.b16 %v445, %v443
    %v488 = vpack.c.b16 %v446, %v444
    %v489 = vpack.c.b16 %v449, %v447
    %v490 = vpack.c.b16 %v450, %v448
    %v491 = vpack.c.b16 %v453, %v451
    %v492 = vpack.c.b16 %v454, %v452
    %v493 = vpack.c.b16 %v457, %v455
    %v494 = vpack.c.b16 %v458, %v456
    %v495 = vpack.c.b16 %v461, %v459
    %v496 = vpack.c.b16 %v462, %v460
    %v497 = vpack.c.b16 %v465, %v463
    %v498 = vpack.c.b16 %v466, %v464
    %531 = vmatprep.subr.bf16.mxu0 %v468
    %532 = vmatpush1.bf16.msra.mxu0 %v467
    %533 = vmatprep.subr.bf16.mxu0 %v470
    %534 = vmatpush1.bf16.msra.mxu0 %v469
    %535 = vmatprep.subr.bf16.mxu0 %v472
    %536 = vmatpush1.bf16.msra.mxu0 %v471
    %537 = vmatprep.subr.bf16.mxu0 %v474
    %538 = vmatpush1.bf16.msra.mxu0 %v473
    %539 = vmatprep.subr.bf16.mxu0 %v476
    %540 = vmatpush1.bf16.msra.mxu0 %v475
    %541 = vmatprep.subr.bf16.mxu0 %v478
    %542 = vmatpush1.bf16.msra.mxu0 %v477
    %543 = vmatprep.subr.bf16.mxu0 %v480
    %544 = vmatpush1.bf16.msra.mxu0 %v479
    %545 = vmatprep.subr.bf16.mxu0 %v482
    %546 = vmatpush1.bf16.msra.mxu0 %v481
    %547 = vmatprep.subr.bf16.mxu0 %v484
    %548 = vmatpush1.bf16.msra.mxu0 %v483
    %549 = vmatprep.subr.bf16.mxu0 %v486
    %550 = vmatpush1.bf16.msra.mxu0 %v485
    %551 = vmatprep.subr.bf16.mxu0 %v488
    %552 = vmatpush1.bf16.msra.mxu0 %v487
    %553 = vmatprep.subr.bf16.mxu0 %v490
    %554 = vmatpush1.bf16.msra.mxu0 %v489
    %555 = vmatprep.subr.bf16.mxu0 %v492
    %556 = vmatpush1.bf16.msra.mxu0 %v491
    %557 = vmatprep.subr.bf16.mxu0 %v494
    %558 = vmatpush1.bf16.msra.mxu0 %v493
    %559 = vmatprep.subr.bf16.mxu0 %v496
    %560 = vmatpush1.bf16.msra.mxu0 %v495
    %561 = vmatprep.subr.bf16.mxu0 %v498
    %562 = vmatpush1.bf16.msra.mxu0 %v497
    %563 = vmatprep.mubr.bf16.mxu0 %v244
    %564 = vmatmul.mubr.bf16.gmra.mrb[0].mxu0 %v243
    %v565 = vpop.f32.mrb[0].mxu0
    %v566 = vadd.f32 0.0, %v565
    %v567 = vpop.f32.mrb[0].mxu0
    %v568 = vadd.f32 0.0, %v567
    %v569 = vpop.f32.mrb[0].mxu0
    %v570 = vadd.f32 0.0, %v569
    %v571 = vpop.f32.mrb[0].mxu0
    %v572 = vadd.f32 0.0, %v571
    %573 = vmatprep.mubr.bf16.mxu0 %v246
    %574 = vmatmul.mubr.bf16.gmra.mrb[0].mxu0 %v245
    %v575 = vpop.f32.mrb[0].mxu0
    %v576 = vadd.f32 0.0, %v575
    %v577 = vpop.f32.mrb[0].mxu0
    %v578 = vadd.f32 0.0, %v577
    %v579 = vpop.f32.mrb[0].mxu0
    %v580 = vadd.f32 0.0, %v579
    %v581 = vpop.f32.mrb[0].mxu0
    %v582 = vadd.f32 0.0, %v581
    %583 = vmatprep.mubr.bf16.mxu0 %v248
    %584 = vmatmul.mubr.bf16.gmra.mrb[0].mxu0 %v247
    %v585 = vpop.f32.mrb[0].mxu0
    %v586 = vadd.f32 0.0, %v585
    %v587 = vpop.f32.mrb[0].mxu0
    %v588 = vadd.f32 0.0, %v587
    %v589 = vpop.f32.mrb[0].mxu0
    %v590 = vadd.f32 0.0, %v589
    %v591 = vpop.f32.mrb[0].mxu0
    %v592 = vadd.f32 0.0, %v591
    %593 = vmatprep.mubr.bf16.mxu0 %v250
    %594 = vmatmul.mubr.bf16.gmra.mrb[0].mxu0 %v249
    %v595 = vpop.f32.mrb[0].mxu0
    %v596 = vadd.f32 0.0, %v595
    %v597 = vpop.f32.mrb[0].mxu0
    %v598 = vadd.f32 0.0, %v597
    %v599 = vpop.f32.mrb[0].mxu0
    %v600 = vadd.f32 0.0, %v599
    %v601 = vpop.f32.mrb[0].mxu0
    %v602 = vadd.f32 0.0, %v601
    %603 = vmatprep.mubr.bf16.mxu0 %v252
    %604 = vmatmul.mubr.bf16.gmra.mrb[0].mxu0 %v251
    %v605 = vpop.f32.mrb[0].mxu0
    %v606 = vadd.f32 0.0, %v605
    %v607 = vpop.f32.mrb[0].mxu0
    %v608 = vadd.f32 0.0, %v607
    %v609 = vpop.f32.mrb[0].mxu0
    %v610 = vadd.f32 0.0, %v609
    %v611 = vpop.f32.mrb[0].mxu0
    %v612 = vadd.f32 0.0, %v611
    %613 = vmatprep.mubr.bf16.mxu0 %v254
    %614 = vmatmul.mubr.bf16.gmra.mrb[0].mxu0 %v253
    %v615 = vpop.f32.mrb[0].mxu0
    %v616 = vadd.f32 0.0, %v615
    %v617 = vpop.f32.mrb[0].mxu0
    %v618 = vadd.f32 0.0, %v617
    %v619 = vpop.f32.mrb[0].mxu0
    %v620 = vadd.f32 0.0, %v619
    %v621 = vpop.f32.mrb[0].mxu0
    %v622 = vadd.f32 0.0, %v621
    %623 = vmatprep.mubr.bf16.mxu0 %v256
    %624 = vmatmul.mubr.bf16.gmra.mrb[0].mxu0 %v255
    %v625 = vpop.f32.mrb[0].mxu0
    %v626 = vadd.f32 0.0, %v625
    %v627 = vpop.f32.mrb[0].mxu0
    %v628 = vadd.f32 0.0, %v627
    %v629 = vpop.f32.mrb[0].mxu0
    %v630 = vadd.f32 0.0, %v629
    %v631 = vpop.f32.mrb[0].mxu0
    %v632 = vadd.f32 0.0, %v631
    %633 = vmatprep.mubr.bf16.mxu0 %v258
    %634 = vmatmul.mubr.bf16.gmra.mrb[0].mxu0 %v257
    %v635 = vpop.f32.mrb[0].mxu0
    %v636 = vadd.f32 0.0, %v635
    %v637 = vpop.f32.mrb[0].mxu0
    %v638 = vadd.f32 0.0, %v637
    %v639 = vpop.f32.mrb[0].mxu0
    %v640 = vadd.f32 0.0, %v639
    %v641 = vpop.f32.mrb[0].mxu0
    %v642 = vadd.f32 0.0, %v641
    %643 = vmatprep.mubr.bf16.mxu0 %v260
    %644 = vmatmul.mubr.bf16.gmra.mrb[0].mxu0 %v259
    %v645 = vpop.f32.mrb[0].mxu0
    %v646 = vadd.f32 0.0, %v645
    %v647 = vpop.f32.mrb[0].mxu0
    %v648 = vadd.f32 0.0, %v647
    %v649 = vpop.f32.mrb[0].mxu0
    %v650 = vadd.f32 0.0, %v649
    %v651 = vpop.f32.mrb[0].mxu0
    %v652 = vadd.f32 0.0, %v651
    %653 = vmatprep.mubr.bf16.mxu0 %v262
    %654 = vmatmul.mubr.bf16.gmra.mrb[0].mxu0 %v261
    %v655 = vpop.f32.mrb[0].mxu0
    %v656 = vadd.f32 0.0, %v655
    %v657 = vpop.f32.mrb[0].mxu0
    %v658 = vadd.f32 0.0, %v657
    %v659 = vpop.f32.mrb[0].mxu0
    %v660 = vadd.f32 0.0, %v659
    %v661 = vpop.f32.mrb[0].mxu0
    %v662 = vadd.f32 0.0, %v661
    %663 = vmatprep.mubr.bf16.mxu0 %v264
    %664 = vmatmul.mubr.bf16.gmra.mrb[0].mxu0 %v263
    %v665 = vpop.f32.mrb[0].mxu0
    %v666 = vadd.f32 0.0, %v665
    %v667 = vpop.f32.mrb[0].mxu0
    %v668 = vadd.f32 0.0, %v667
    %v669 = vpop.f32.mrb[0].mxu0
    %v670 = vadd.f32 0.0, %v669
    %v671 = vpop.f32.mrb[0].mxu0
    %v672 = vadd.f32 0.0, %v671
    %673 = vmatprep.mubr.bf16.mxu0 %v266
    %674 = vmatmul.mubr.bf16.gmra.mrb[0].mxu0 %v265
    %v675 = vpop.f32.mrb[0].mxu0
    %v676 = vadd.f32 0.0, %v675
    %v677 = vpop.f32.mrb[0].mxu0
    %v678 = vadd.f32 0.0, %v677
    %v679 = vpop.f32.mrb[0].mxu0
    %v680 = vadd.f32 0.0, %v679
    %v681 = vpop.f32.mrb[0].mxu0
    %v682 = vadd.f32 0.0, %v681
    %683 = vmatprep.mubr.bf16.mxu0 %v268
    %684 = vmatmul.mubr.bf16.gmra.mrb[0].mxu0 %v267
    %v685 = vpop.f32.mrb[0].mxu0
    %v686 = vadd.f32 0.0, %v685
    %v687 = vpop.f32.mrb[0].mxu0
    %v688 = vadd.f32 0.0, %v687
    %v689 = vpop.f32.mrb[0].mxu0
    %v690 = vadd.f32 0.0, %v689
    %v691 = vpop.f32.mrb[0].mxu0
    %v692 = vadd.f32 0.0, %v691
    %693 = vmatprep.mubr.bf16.mxu0 %v270
    %694 = vmatmul.mubr.bf16.gmra.mrb[0].mxu0 %v269
    %v695 = vpop.f32.mrb[0].mxu0
    %v696 = vadd.f32 0.0, %v695
    %v697 = vpop.f32.mrb[0].mxu0
    %v698 = vadd.f32 0.0, %v697
    %v699 = vpop.f32.mrb[0].mxu0
    %v700 = vadd.f32 0.0, %v699
    %v701 = vpop.f32.mrb[0].mxu0
    %v702 = vadd.f32 0.0, %v701
    %703 = vmatprep.mubr.bf16.mxu0 %v272
    %704 = vmatmul.mubr.bf16.gmra.mrb[0].mxu0 %v271
    %v705 = vpop.f32.mrb[0].mxu0
    %v706 = vadd.f32 0.0, %v705
    %v707 = vpop.f32.mrb[0].mxu0
    %v708 = vadd.f32 0.0, %v707
    %v709 = vpop.f32.mrb[0].mxu0
    %v710 = vadd.f32 0.0, %v709
    %v711 = vpop.f32.mrb[0].mxu0
    %v712 = vadd.f32 0.0, %v711
    %713 = vmatprep.mubr.bf16.mxu0 %v274
    %714 = vmatmul.mubr.bf16.gmra.mrb[0].mxu0 %v273
    %v715 = vpop.f32.mrb[0].mxu0
    %v716 = vadd.f32 0.0, %v715
    %v717 = vpop.f32.mrb[0].mxu0
    %v718 = vadd.f32 0.0, %v717
    %v719 = vpop.f32.mrb[0].mxu0
    %v720 = vadd.f32 0.0, %v719
    %v721 = vpop.f32.mrb[0].mxu0
    %v722 = vadd.f32 0.0, %v721
    %723 = vdwg.mxu0
    %v724 = vadd.f32 %v275, %v566
    %v725 = vadd.f32 %v276, %v568
    %v726 = vadd.f32 %v277, %v570
    %v727 = vadd.f32 %v278, %v572
    %v728 = vadd.f32 %v279, %v576
    %v729 = vadd.f32 %v280, %v578
    %v730 = vadd.f32 %v281, %v580
    %v731 = vadd.f32 %v282, %v582
    %v732 = vadd.f32 %v283, %v586
    %v733 = vadd.f32 %v284, %v588
    %v734 = vadd.f32 %v285, %v590
    %v735 = vadd.f32 %v286, %v592
    %v736 = vadd.f32 %v287, %v596
    %v737 = vadd.f32 %v288, %v598
    %v738 = vadd.f32 %v289, %v600
    %v739 = vadd.f32 %v290, %v602
    %v740 = vadd.f32 %v291, %v606
    %v741 = vadd.f32 %v292, %v608
    %v742 = vadd.f32 %v293, %v610
    %v743 = vadd.f32 %v294, %v612
    %v744 = vadd.f32 %v295, %v616
    %v745 = vadd.f32 %v296, %v618
    %v746 = vadd.f32 %v297, %v620
    %v747 = vadd.f32 %v298, %v622
    %v748 = vadd.f32 %v299, %v626
    %v749 = vadd.f32 %v300, %v628
    %v750 = vadd.f32 %v301, %v630
    %v751 = vadd.f32 %v302, %v632
    %v752 = vadd.f32 %v303, %v636
    %v753 = vadd.f32 %v304, %v638
    %v754 = vadd.f32 %v305, %v640
    %v755 = vadd.f32 %v306, %v642
    %v756 = vadd.f32 %v307, %v646
    %v757 = vadd.f32 %v308, %v648
    %v758 = vadd.f32 %v309, %v650
    %v759 = vadd.f32 %v310, %v652
    %v760 = vadd.f32 %v311, %v656
    %v761 = vadd.f32 %v312, %v658
    %v762 = vadd.f32 %v313, %v660
    %v763 = vadd.f32 %v314, %v662
    %v764 = vadd.f32 %v315, %v666
    %v765 = vadd.f32 %v316, %v668
    %v766 = vadd.f32 %v317, %v670
    %v767 = vadd.f32 %v318, %v672
    %v768 = vadd.f32 %v319, %v676
    %v769 = vadd.f32 %v320, %v678
    %v770 = vadd.f32 %v321, %v680
    %v771 = vadd.f32 %v322, %v682
    %v772 = vadd.f32 %v323, %v686
    %v773 = vadd.f32 %v324, %v688
    %v774 = vadd.f32 %v325, %v690
    %v775 = vadd.f32 %v326, %v692
    %v776 = vadd.f32 %v327, %v696
    %v777 = vadd.f32 %v328, %v698
    %v778 = vadd.f32 %v329, %v700
    %v779 = vadd.f32 %v330, %v702
    %v780 = vadd.f32 %v331, %v706
    %v781 = vadd.f32 %v332, %v708
    %v782 = vadd.f32 %v333, %v710
    %v783 = vadd.f32 %v334, %v712
    %v784 = vadd.f32 %v335, %v716
    %v785 = vadd.f32 %v336, %v718
    %v786 = vadd.f32 %v337, %v720
    %v787 = vadd.f32 %v338, %v722
    %788 = vst [vmem:[#allocation2] sm:$0xff] %v724
    %789 = vst [vmem:[#allocation2 + $0x8] sm:$0xff] %v725
    %790 = vst [vmem:[#allocation2 + $0x10] sm:$0xff] %v726
    %791 = vst [vmem:[#allocation2 + $0x18] sm:$0xff] %v727
    %792 = vst [vmem:[#allocation2 + $0x20] sm:$0xff] %v728
    %793 = vst [vmem:[#allocation2 + $0x28] sm:$0xff] %v729
    %794 = vst [vmem:[#allocation2 + $0x30] sm:$0xff] %v730
    %795 = vst [vmem:[#allocation2 + $0x38] sm:$0xff] %v731
    %796 = vst [vmem:[#allocation2 + $0x40] sm:$0xff] %v732
    %797 = vst [vmem:[#allocation2 + $0x48] sm:$0xff] %v733
    %798 = vst [vmem:[#allocation2 + $0x50] sm:$0xff] %v734
    %799 = vst [vmem:[#allocation2 + $0x58] sm:$0xff] %v735
    %800 = vst [vmem:[#allocation2 + $0x60] sm:$0xff] %v736
    %801 = vst [vmem:[#allocation2 + $0x68] sm:$0xff] %v737
    %802 = vst [vmem:[#allocation2 + $0x70] sm:$0xff] %v738
    %803 = vst [vmem:[#allocation2 + $0x78] sm:$0xff] %v739
    %804 = vst [vmem:[#allocation2 + $0x80] sm:$0xff] %v740
    %805 = vst [vmem:[#allocation2 + $0x88] sm:$0xff] %v741
    %806 = vst [vmem:[#allocation2 + $0x90] sm:$0xff] %v742
    %807 = vst [vmem:[#allocation2 + $0x98] sm:$0xff] %v743
    %808 = vst [vmem:[#allocation2 + $0xa0] sm:$0xff] %v744
    %809 = vst [vmem:[#allocation2 + $0xa8] sm:$0xff] %v745
    %810 = vst [vmem:[#allocation2 + $0xb0] sm:$0xff] %v746
    %811 = vst [vmem:[#allocation2 + $0xb8] sm:$0xff] %v747
    %812 = vst [vmem:[#allocation2 + $0xc0] sm:$0xff] %v748
    %813 = vst [vmem:[#allocation2 + $0xc8] sm:$0xff] %v749
    %814 = vst [vmem:[#allocation2 + $0xd0] sm:$0xff] %v750
    %815 = vst [vmem:[#allocation2 + $0xd8] sm:$0xff] %v751
    %816 = vst [vmem:[#allocation2 + $0xe0] sm:$0xff] %v752
    %817 = vst [vmem:[#allocation2 + $0xe8] sm:$0xff] %v753
    %818 = vst [vmem:[#allocation2 + $0xf0] sm:$0xff] %v754
    %819 = vst [vmem:[#allocation2 + $0xf8] sm:$0xff] %v755
    %820 = vst [vmem:[#allocation2 + $0x100] sm:$0xff] %v756
    %821 = vst [vmem:[#allocation2 + $0x108] sm:$0xff] %v757
    %822 = vst [vmem:[#allocation2 + $0x110] sm:$0xff] %v758
    %823 = vst [vmem:[#allocation2 + $0x118] sm:$0xff] %v759
    %824 = vst [vmem:[#allocation2 + $0x120] sm:$0xff] %v760
    %825 = vst [vmem:[#allocation2 + $0x128] sm:$0xff] %v761
    %826 = vst [vmem:[#allocation2 + $0x130] sm:$0xff] %v762
    %827 = vst [vmem:[#allocation2 + $0x138] sm:$0xff] %v763
    %828 = vst [vmem:[#allocation2 + $0x140] sm:$0xff] %v764
    %829 = vst [vmem:[#allocation2 + $0x148] sm:$0xff] %v765
    %830 = vst [vmem:[#allocation2 + $0x150] sm:$0xff] %v766
    %831 = vst [vmem:[#allocation2 + $0x158] sm:$0xff] %v767
    %832 = vst [vmem:[#allocation2 + $0x160] sm:$0xff] %v768
    %833 = vst [vmem:[#allocation2 + $0x168] sm:$0xff] %v769
    %834 = vst [vmem:[#allocation2 + $0x170] sm:$0xff] %v770
    %835 = vst [vmem:[#allocation2 + $0x178] sm:$0xff] %v771
    %836 = vst [vmem:[#allocation2 + $0x180] sm:$0xff] %v772
    %837 = vst [vmem:[#allocation2 + $0x188] sm:$0xff] %v773
    %838 = vst [vmem:[#allocation2 + $0x190] sm:$0xff] %v774
    %839 = vst [vmem:[#allocation2 + $0x198] sm:$0xff] %v775
    %840 = vst [vmem:[#allocation2 + $0x1a0] sm:$0xff] %v776
    %841 = vst [vmem:[#allocation2 + $0x1a8] sm:$0xff] %v777
    %842 = vst [vmem:[#allocation2 + $0x1b0] sm:$0xff] %v778
    %843 = vst [vmem:[#allocation2 + $0x1b8] sm:$0xff] %v779
    %844 = vst [vmem:[#allocation2 + $0x1c0] sm:$0xff] %v780
    %845 = vst [vmem:[#allocation2 + $0x1c8] sm:$0xff] %v781
    %846 = vst [vmem:[#allocation2 + $0x1d0] sm:$0xff] %v782
    %847 = vst [vmem:[#allocation2 + $0x1d8] sm:$0xff] %v783
    %848 = vst [vmem:[#allocation2 + $0x1e0] sm:$0xff] %v784
    %849 = vst [vmem:[#allocation2 + $0x1e8] sm:$0xff] %v785
    %850 = vst [vmem:[#allocation2 + $0x1f0] sm:$0xff] %v786
    %851 = vst [vmem:[#allocation2 + $0x1f8] sm:$0xff] %v787
    %v852 = vld [vmem:[#allocation3] sm:$0xff]
    %v853 = vld [vmem:[#allocation3 + $0x8] sm:$0xff]
    %v854 = vld [vmem:[#allocation3 + $0x10] sm:$0xff]
    %v855 = vld [vmem:[#allocation3 + $0x18] sm:$0xff]
    %v856 = vld [vmem:[#allocation3 + $0x20] sm:$0xff]
    %v857 = vld [vmem:[#allocation3 + $0x28] sm:$0xff]
    %v858 = vld [vmem:[#allocation3 + $0x30] sm:$0xff]
    %v859 = vld [vmem:[#allocation3 + $0x38] sm:$0xff]
    %v860 = vld [vmem:[#allocation3 + $0x40] sm:$0xff]
    %v861 = vld [vmem:[#allocation3 + $0x48] sm:$0xff]
    %v862 = vld [vmem:[#allocation3 + $0x50] sm:$0xff]
    %v863 = vld [vmem:[#allocation3 + $0x58] sm:$0xff]
    %v864 = vld [vmem:[#allocation3 + $0x60] sm:$0xff]
    %v865 = vld [vmem:[#allocation3 + $0x68] sm:$0xff]
    %v866 = vld [vmem:[#allocation3 + $0x70] sm:$0xff]
    %v867 = vld [vmem:[#allocation3 + $0x78] sm:$0xff]
    %v868 = vld [vmem:[#allocation3 + $0x80] sm:$0xff]
    %v869 = vld [vmem:[#allocation3 + $0x88] sm:$0xff]
    %v870 = vld [vmem:[#allocation3 + $0x90] sm:$0xff]
    %v871 = vld [vmem:[#allocation3 + $0x98] sm:$0xff]
    %v872 = vld [vmem:[#allocation3 + $0xa0] sm:$0xff]
    %v873 = vld [vmem:[#allocation3 + $0xa8] sm:$0xff]
    %v874 = vld [vmem:[#allocation3 + $0xb0] sm:$0xff]
    %v875 = vld [vmem:[#allocation3 + $0xb8] sm:$0xff]
    %v876 = vld [vmem:[#allocation3 + $0xc0] sm:$0xff]
    %v877 = vld [vmem:[#allocation3 + $0xc8] sm:$0xff]
    %v878 = vld [vmem:[#allocation3 + $0xd0] sm:$0xff]
    %v879 = vld [vmem:[#allocation3 + $0xd8] sm:$0xff]
    %v880 = vld [vmem:[#allocation3 + $0xe0] sm:$0xff]
    %v881 = vld [vmem:[#allocation3 + $0xe8] sm:$0xff]
    %v882 = vld [vmem:[#allocation3 + $0xf0] sm:$0xff]
    %v883 = vld [vmem:[#allocation3 + $0xf8] sm:$0xff]
    %v884 = vld [vmem:[#allocation3 + $0x100] sm:$0xff]
    %v885 = vld [vmem:[#allocation3 + $0x108] sm:$0xff]
    %v886 = vld [vmem:[#allocation3 + $0x110] sm:$0xff]
    %v887 = vld [vmem:[#allocation3 + $0x118] sm:$0xff]
    %v888 = vld [vmem:[#allocation3 + $0x120] sm:$0xff]
    %v889 = vld [vmem:[#allocation3 + $0x128] sm:$0xff]
    %v890 = vld [vmem:[#allocation3 + $0x130] sm:$0xff]
    %v891 = vld [vmem:[#allocation3 + $0x138] sm:$0xff]
    %v892 = vld [vmem:[#allocation3 + $0x140] sm:$0xff]
    %v893 = vld [vmem:[#allocation3 + $0x148] sm:$0xff]
    %v894 = vld [vmem:[#allocation3 + $0x150] sm:$0xff]
    %v895 = vld [vmem:[#allocation3 + $0x158] sm:$0xff]
    %v896 = vld [vmem:[#allocation3 + $0x160] sm:$0xff]
    %v897 = vld [vmem:[#allocation3 + $0x168] sm:$0xff]
    %v898 = vld [vmem:[#allocation3 + $0x170] sm:$0xff]
    %v899 = vld [vmem:[#allocation3 + $0x178] sm:$0xff]
    %v900 = vld [vmem:[#allocation3 + $0x180] sm:$0xff]
    %v901 = vld [vmem:[#allocation3 + $0x188] sm:$0xff]
    %v902 = vld [vmem:[#allocation3 + $0x190] sm:$0xff]
    %v903 = vld [vmem:[#allocation3 + $0x198] sm:$0xff]
    %v904 = vld [vmem:[#allocation3 + $0x1a0] sm:$0xff]
    %v905 = vld [vmem:[#allocation3 + $0x1a8] sm:$0xff]
    %v906 = vld [vmem:[#allocation3 + $0x1b0] sm:$0xff]
    %v907 = vld [vmem:[#allocation3 + $0x1b8] sm:$0xff]
    %v908 = vld [vmem:[#allocation3 + $0x1c0] sm:$0xff]
    %v909 = vld [vmem:[#allocation3 + $0x1c8] sm:$0xff]
    %v910 = vld [vmem:[#allocation3 + $0x1d0] sm:$0xff]
    %v911 = vld [vmem:[#allocation3 + $0x1d8] sm:$0xff]
    %v912 = vld [vmem:[#allocation3 + $0x1e0] sm:$0xff]
    %v913 = vld [vmem:[#allocation3 + $0x1e8] sm:$0xff]
    %v914 = vld [vmem:[#allocation3 + $0x1f0] sm:$0xff]
    %v915 = vld [vmem:[#allocation3 + $0x1f8] sm:$0xff]
    %v916 = vld [vmem:[%s2] sm:$0xff]
    %v917 = vld [vmem:[%s2 + $0x8] sm:$0xff]
    %v918 = vld [vmem:[%s2 + $0x10] sm:$0xff]
    %v919 = vld [vmem:[%s2 + $0x18] sm:$0xff]
    %v920 = vld [vmem:[%s2 + $0x20] sm:$0xff]
    %v921 = vld [vmem:[%s2 + $0x28] sm:$0xff]
    %v922 = vld [vmem:[%s2 + $0x30] sm:$0xff]
    %v923 = vld [vmem:[%s2 + $0x38] sm:$0xff]
    %v924 = vld [vmem:[%s2 + $0x40] sm:$0xff]
    %v925 = vld [vmem:[%s2 + $0x48] sm:$0xff]
    %v926 = vld [vmem:[%s2 + $0x50] sm:$0xff]
    %v927 = vld [vmem:[%s2 + $0x58] sm:$0xff]
    %v928 = vld [vmem:[%s2 + $0x60] sm:$0xff]
    %v929 = vld [vmem:[%s2 + $0x68] sm:$0xff]
    %v930 = vld [vmem:[%s2 + $0x70] sm:$0xff]
    %v931 = vld [vmem:[%s2 + $0x78] sm:$0xff]
    %v932 = vld [vmem:[%s2 + $0x80] sm:$0xff]
    %v933 = vld [vmem:[%s2 + $0x88] sm:$0xff]
    %v934 = vld [vmem:[%s2 + $0x90] sm:$0xff]
    %v935 = vld [vmem:[%s2 + $0x98] sm:$0xff]
    %v936 = vld [vmem:[%s2 + $0xa0] sm:$0xff]
    %v937 = vld [vmem:[%s2 + $0xa8] sm:$0xff]
    %v938 = vld [vmem:[%s2 + $0xb0] sm:$0xff]
    %v939 = vld [vmem:[%s2 + $0xb8] sm:$0xff]
    %v940 = vld [vmem:[%s2 + $0xc0] sm:$0xff]
    %v941 = vld [vmem:[%s2 + $0xc8] sm:$0xff]
    %v942 = vld [vmem:[%s2 + $0xd0] sm:$0xff]
    %v943 = vld [vmem:[%s2 + $0xd8] sm:$0xff]
    %v944 = vld [vmem:[%s2 + $0xe0] sm:$0xff]
    %v945 = vld [vmem:[%s2 + $0xe8] sm:$0xff]
    %v946 = vld [vmem:[%s2 + $0xf0] sm:$0xff]
    %v947 = vld [vmem:[%s2 + $0xf8] sm:$0xff]
    %v980 = vunpack.c.l.b16 %v916
    %v981 = vunpack.c.h.b16 %v916
    %v982 = vunpack.c.l.b16 %v917
    %v983 = vunpack.c.h.b16 %v917
    %v984 = vunpack.c.l.b16 %v918
    %v985 = vunpack.c.h.b16 %v918
    %v986 = vunpack.c.l.b16 %v919
    %v987 = vunpack.c.h.b16 %v919
    %v988 = vunpack.c.l.b16 %v920
    %v989 = vunpack.c.h.b16 %v920
    %v990 = vunpack.c.l.b16 %v921
    %v991 = vunpack.c.h.b16 %v921
    %v992 = vunpack.c.l.b16 %v922
    %v993 = vunpack.c.h.b16 %v922
    %v994 = vunpack.c.l.b16 %v923
    %v995 = vunpack.c.h.b16 %v923
    %v996 = vunpack.c.l.b16 %v924
    %v997 = vunpack.c.h.b16 %v924
    %v998 = vunpack.c.l.b16 %v925
    %v999 = vunpack.c.h.b16 %v925
    %v1000 = vunpack.c.l.b16 %v926
    %v1001 = vunpack.c.h.b16 %v926
    %v1002 = vunpack.c.l.b16 %v927
    %v1003 = vunpack.c.h.b16 %v927
    %v1004 = vunpack.c.l.b16 %v928
    %v1005 = vunpack.c.h.b16 %v928
    %v1006 = vunpack.c.l.b16 %v929
    %v1007 = vunpack.c.h.b16 %v929
    %v1008 = vunpack.c.l.b16 %v930
    %v1009 = vunpack.c.h.b16 %v930
    %v1010 = vunpack.c.l.b16 %v931
    %v1011 = vunpack.c.h.b16 %v931
    %v1012 = vunpack.c.l.b16 %v932
    %v1013 = vunpack.c.h.b16 %v932
    %v1014 = vunpack.c.l.b16 %v933
    %v1015 = vunpack.c.h.b16 %v933
    %v1016 = vunpack.c.l.b16 %v934
    %v1017 = vunpack.c.h.b16 %v934
    %v1018 = vunpack.c.l.b16 %v935
    %v1019 = vunpack.c.h.b16 %v935
    %v1020 = vunpack.c.l.b16 %v936
    %v1021 = vunpack.c.h.b16 %v936
    %v1022 = vunpack.c.l.b16 %v937
    %v1023 = vunpack.c.h.b16 %v937
    %v1024 = vunpack.c.l.b16 %v938
    %v1025 = vunpack.c.h.b16 %v938
    %v1026 = vunpack.c.l.b16 %v939
    %v1027 = vunpack.c.h.b16 %v939
    %v1028 = vunpack.c.l.b16 %v940
    %v1029 = vunpack.c.h.b16 %v940
    %v1030 = vunpack.c.l.b16 %v941
    %v1031 = vunpack.c.h.b16 %v941
    %v1032 = vunpack.c.l.b16 %v942
    %v1033 = vunpack.c.h.b16 %v942
    %v1034 = vunpack.c.l.b16 %v943
    %v1035 = vunpack.c.h.b16 %v943
    %v1036 = vunpack.c.l.b16 %v944
    %v1037 = vunpack.c.h.b16 %v944
    %v1038 = vunpack.c.l.b16 %v945
    %v1039 = vunpack.c.h.b16 %v945
    %v1040 = vunpack.c.l.b16 %v946
    %v1041 = vunpack.c.h.b16 %v946
    %v1042 = vunpack.c.l.b16 %v947
    %v1043 = vunpack.c.h.b16 %v947
    %v1044 = vpack.c.b16 %v982, %v980
    %v1045 = vpack.c.b16 %v983, %v981
    %v1046 = vpack.c.b16 %v986, %v984
    %v1047 = vpack.c.b16 %v987, %v985
    %v1048 = vpack.c.b16 %v990, %v988
    %v1049 = vpack.c.b16 %v991, %v989
    %v1050 = vpack.c.b16 %v994, %v992
    %v1051 = vpack.c.b16 %v995, %v993
    %v1052 = vpack.c.b16 %v998, %v996
    %v1053 = vpack.c.b16 %v999, %v997
    %v1054 = vpack.c.b16 %v1002, %v1000
    %v1055 = vpack.c.b16 %v1003, %v1001
    %v1056 = vpack.c.b16 %v1006, %v1004
    %v1057 = vpack.c.b16 %v1007, %v1005
    %v1058 = vpack.c.b16 %v1010, %v1008
    %v1059 = vpack.c.b16 %v1011, %v1009
    %v1060 = vpack.c.b16 %v1014, %v1012
    %v1061 = vpack.c.b16 %v1015, %v1013
    %v1062 = vpack.c.b16 %v1018, %v1016
    %v1063 = vpack.c.b16 %v1019, %v1017
    %v1064 = vpack.c.b16 %v1022, %v1020
    %v1065 = vpack.c.b16 %v1023, %v1021
    %v1066 = vpack.c.b16 %v1026, %v1024
    %v1067 = vpack.c.b16 %v1027, %v1025
    %v1068 = vpack.c.b16 %v1030, %v1028
    %v1069 = vpack.c.b16 %v1031, %v1029
    %v1070 = vpack.c.b16 %v1034, %v1032
    %v1071 = vpack.c.b16 %v1035, %v1033
    %v1072 = vpack.c.b16 %v1038, %v1036
    %v1073 = vpack.c.b16 %v1039, %v1037
    %v1074 = vpack.c.b16 %v1042, %v1040
    %v1075 = vpack.c.b16 %v1043, %v1041
    %1108 = vmatprep.subr.bf16.mxu0 %v1045
    %1109 = vmatpush1.bf16.msra.mxu0 %v1044
    %1110 = vmatprep.subr.bf16.mxu0 %v1047
    %1111 = vmatpush1.bf16.msra.mxu0 %v1046
    %1112 = vmatprep.subr.bf16.mxu0 %v1049
    %1113 = vmatpush1.bf16.msra.mxu0 %v1048
    %1114 = vmatprep.subr.bf16.mxu0 %v1051
    %1115 = vmatpush1.bf16.msra.mxu0 %v1050
    %1116 = vmatprep.subr.bf16.mxu0 %v1053
    %1117 = vmatpush1.bf16.msra.mxu0 %v1052
    %1118 = vmatprep.subr.bf16.mxu0 %v1055
    %1119 = vmatpush1.bf16.msra.mxu0 %v1054
    %1120 = vmatprep.subr.bf16.mxu0 %v1057
    %1121 = vmatpush1.bf16.msra.mxu0 %v1056
    %1122 = vmatprep.subr.bf16.mxu0 %v1059
    %1123 = vmatpush1.bf16.msra.mxu0 %v1058
    %1124 = vmatprep.subr.bf16.mxu0 %v1061
    %1125 = vmatpush1.bf16.msra.mxu0 %v1060
    %1126 = vmatprep.subr.bf16.mxu0 %v1063
    %1127 = vmatpush1.bf16.msra.mxu0 %v1062
    %1128 = vmatprep.subr.bf16.mxu0 %v1065
    %1129 = vmatpush1.bf16.msra.mxu0 %v1064
    %1130 = vmatprep.subr.bf16.mxu0 %v1067
    %1131 = vmatpush1.bf16.msra.mxu0 %v1066
    %1132 = vmatprep.subr.bf16.mxu0 %v1069
    %1133 = vmatpush1.bf16.msra.mxu0 %v1068
    %1134 = vmatprep.subr.bf16.mxu0 %v1071
    %1135 = vmatpush1.bf16.msra.mxu0 %v1070
    %1136 = vmatprep.subr.bf16.mxu0 %v1073
    %1137 = vmatpush1.bf16.msra.mxu0 %v1072
    %1138 = vmatprep.subr.bf16.mxu0 %v1075
    %1139 = vmatpush1.bf16.msra.mxu0 %v1074
    %1140 = vmatprep.mubr.bf16.mxu0 %v244
    %1141 = vmatmul.mubr.bf16.gmra.mrb[0].mxu0 %v243
    %v1142 = vpop.f32.mrb[0].mxu0
    %v1143 = vadd.f32 0.0, %v1142
    %v1144 = vpop.f32.mrb[0].mxu0
    %v1145 = vadd.f32 0.0, %v1144
    %v1146 = vpop.f32.mrb[0].mxu0
    %v1147 = vadd.f32 0.0, %v1146
    %v1148 = vpop.f32.mrb[0].mxu0
    %v1149 = vadd.f32 0.0, %v1148
    %1150 = vmatprep.mubr.bf16.mxu0 %v246
    %1151 = vmatmul.mubr.bf16.gmra.mrb[0].mxu0 %v245
    %v1152 = vpop.f32.mrb[0].mxu0
    %v1153 = vadd.f32 0.0, %v1152
    %v1154 = vpop.f32.mrb[0].mxu0
    %v1155 = vadd.f32 0.0, %v1154
    %v1156 = vpop.f32.mrb[0].mxu0
    %v1157 = vadd.f32 0.0, %v1156
    %v1158 = vpop.f32.mrb[0].mxu0
    %v1159 = vadd.f32 0.0, %v1158
    %1160 = vmatprep.mubr.bf16.mxu0 %v248
    %1161 = vmatmul.mubr.bf16.gmra.mrb[0].mxu0 %v247
    %v1162 = vpop.f32.mrb[0].mxu0
    %v1163 = vadd.f32 0.0, %v1162
    %v1164 = vpop.f32.mrb[0].mxu0
    %v1165 = vadd.f32 0.0, %v1164
    %v1166 = vpop.f32.mrb[0].mxu0
    %v1167 = vadd.f32 0.0, %v1166
    %v1168 = vpop.f32.mrb[0].mxu0
    %v1169 = vadd.f32 0.0, %v1168
    %1170 = vmatprep.mubr.bf16.mxu0 %v250
    %1171 = vmatmul.mubr.bf16.gmra.mrb[0].mxu0 %v249
    %v1172 = vpop.f32.mrb[0].mxu0
    %v1173 = vadd.f32 0.0, %v1172
    %v1174 = vpop.f32.mrb[0].mxu0
    %v1175 = vadd.f32 0.0, %v1174
    %v1176 = vpop.f32.mrb[0].mxu0
    %v1177 = vadd.f32 0.0, %v1176
    %v1178 = vpop.f32.mrb[0].mxu0
    %v1179 = vadd.f32 0.0, %v1178
    %1180 = vmatprep.mubr.bf16.mxu0 %v252
    %1181 = vmatmul.mubr.bf16.gmra.mrb[0].mxu0 %v251
    %v1182 = vpop.f32.mrb[0].mxu0
    %v1183 = vadd.f32 0.0, %v1182
    %v1184 = vpop.f32.mrb[0].mxu0
    %v1185 = vadd.f32 0.0, %v1184
    %v1186 = vpop.f32.mrb[0].mxu0
    %v1187 = vadd.f32 0.0, %v1186
    %v1188 = vpop.f32.mrb[0].mxu0
    %v1189 = vadd.f32 0.0, %v1188
    %1190 = vmatprep.mubr.bf16.mxu0 %v254
    %1191 = vmatmul.mubr.bf16.gmra.mrb[0].mxu0 %v253
    %v1192 = vpop.f32.mrb[0].mxu0
    %v1193 = vadd.f32 0.0, %v1192
    %v1194 = vpop.f32.mrb[0].mxu0
    %v1195 = vadd.f32 0.0, %v1194
    %v1196 = vpop.f32.mrb[0].mxu0
    %v1197 = vadd.f32 0.0, %v1196
    %v1198 = vpop.f32.mrb[0].mxu0
    %v1199 = vadd.f32 0.0, %v1198
    %1200 = vmatprep.mubr.bf16.mxu0 %v256
    %1201 = vmatmul.mubr.bf16.gmra.mrb[0].mxu0 %v255
    %v1202 = vpop.f32.mrb[0].mxu0
    %v1203 = vadd.f32 0.0, %v1202
    %v1204 = vpop.f32.mrb[0].mxu0
    %v1205 = vadd.f32 0.0, %v1204
    %v1206 = vpop.f32.mrb[0].mxu0
    %v1207 = vadd.f32 0.0, %v1206
    %v1208 = vpop.f32.mrb[0].mxu0
    %v1209 = vadd.f32 0.0, %v1208
    %1210 = vmatprep.mubr.bf16.mxu0 %v258
    %1211 = vmatmul.mubr.bf16.gmra.mrb[0].mxu0 %v257
    %v1212 = vpop.f32.mrb[0].mxu0
    %v1213 = vadd.f32 0.0, %v1212
    %v1214 = vpop.f32.mrb[0].mxu0
    %v1215 = vadd.f32 0.0, %v1214
    %v1216 = vpop.f32.mrb[0].mxu0
    %v1217 = vadd.f32 0.0, %v1216
    %v1218 = vpop.f32.mrb[0].mxu0
    %v1219 = vadd.f32 0.0, %v1218
    %1220 = vmatprep.mubr.bf16.mxu0 %v260
    %1221 = vmatmul.mubr.bf16.gmra.mrb[0].mxu0 %v259
    %v1222 = vpop.f32.mrb[0].mxu0
    %v1223 = vadd.f32 0.0, %v1222
    %v1224 = vpop.f32.mrb[0].mxu0
    %v1225 = vadd.f32 0.0, %v1224
    %v1226 = vpop.f32.mrb[0].mxu0
    %v1227 = vadd.f32 0.0, %v1226
    %v1228 = vpop.f32.mrb[0].mxu0
    %v1229 = vadd.f32 0.0, %v1228
    %1230 = vmatprep.mubr.bf16.mxu0 %v262
    %1231 = vmatmul.mubr.bf16.gmra.mrb[0].mxu0 %v261
    %v1232 = vpop.f32.mrb[0].mxu0
    %v1233 = vadd.f32 0.0, %v1232
    %v1234 = vpop.f32.mrb[0].mxu0
    %v1235 = vadd.f32 0.0, %v1234
    %v1236 = vpop.f32.mrb[0].mxu0
    %v1237 = vadd.f32 0.0, %v1236
    %v1238 = vpop.f32.mrb[0].mxu0
    %v1239 = vadd.f32 0.0, %v1238
    %1240 = vmatprep.mubr.bf16.mxu0 %v264
    %1241 = vmatmul.mubr.bf16.gmra.mrb[0].mxu0 %v263
    %v1242 = vpop.f32.mrb[0].mxu0
    %v1243 = vadd.f32 0.0, %v1242
    %v1244 = vpop.f32.mrb[0].mxu0
    %v1245 = vadd.f32 0.0, %v1244
    %v1246 = vpop.f32.mrb[0].mxu0
    %v1247 = vadd.f32 0.0, %v1246
    %v1248 = vpop.f32.mrb[0].mxu0
    %v1249 = vadd.f32 0.0, %v1248
    %1250 = vmatprep.mubr.bf16.mxu0 %v266
    %1251 = vmatmul.mubr.bf16.gmra.mrb[0].mxu0 %v265
    %v1252 = vpop.f32.mrb[0].mxu0
    %v1253 = vadd.f32 0.0, %v1252
    %v1254 = vpop.f32.mrb[0].mxu0
    %v1255 = vadd.f32 0.0, %v1254
    %v1256 = vpop.f32.mrb[0].mxu0
    %v1257 = vadd.f32 0.0, %v1256
    %v1258 = vpop.f32.mrb[0].mxu0
    %v1259 = vadd.f32 0.0, %v1258
    %1260 = vmatprep.mubr.bf16.mxu0 %v268
    %1261 = vmatmul.mubr.bf16.gmra.mrb[0].mxu0 %v267
    %v1262 = vpop.f32.mrb[0].mxu0
    %v1263 = vadd.f32 0.0, %v1262
    %v1264 = vpop.f32.mrb[0].mxu0
    %v1265 = vadd.f32 0.0, %v1264
    %v1266 = vpop.f32.mrb[0].mxu0
    %v1267 = vadd.f32 0.0, %v1266
    %v1268 = vpop.f32.mrb[0].mxu0
    %v1269 = vadd.f32 0.0, %v1268
    %1270 = vmatprep.mubr.bf16.mxu0 %v270
    %1271 = vmatmul.mubr.bf16.gmra.mrb[0].mxu0 %v269
    %v1272 = vpop.f32.mrb[0].mxu0
    %v1273 = vadd.f32 0.0, %v1272
    %v1274 = vpop.f32.mrb[0].mxu0
    %v1275 = vadd.f32 0.0, %v1274
    %v1276 = vpop.f32.mrb[0].mxu0
    %v1277 = vadd.f32 0.0, %v1276
    %v1278 = vpop.f32.mrb[0].mxu0
    %v1279 = vadd.f32 0.0, %v1278
    %1280 = vmatprep.mubr.bf16.mxu0 %v272
    %1281 = vmatmul.mubr.bf16.gmra.mrb[0].mxu0 %v271
    %v1282 = vpop.f32.mrb[0].mxu0
    %v1283 = vadd.f32 0.0, %v1282
    %v1284 = vpop.f32.mrb[0].mxu0
    %v1285 = vadd.f32 0.0, %v1284
    %v1286 = vpop.f32.mrb[0].mxu0
    %v1287 = vadd.f32 0.0, %v1286
    %v1288 = vpop.f32.mrb[0].mxu0
    %v1289 = vadd.f32 0.0, %v1288
    %1290 = vmatprep.mubr.bf16.mxu0 %v274
    %1291 = vmatmul.mubr.bf16.gmra.mrb[0].mxu0 %v273
    %v1292 = vpop.f32.mrb[0].mxu0
    %v1293 = vadd.f32 0.0, %v1292
    %v1294 = vpop.f32.mrb[0].mxu0
    %v1295 = vadd.f32 0.0, %v1294
    %v1296 = vpop.f32.mrb[0].mxu0
    %v1297 = vadd.f32 0.0, %v1296
    %v1298 = vpop.f32.mrb[0].mxu0
    %v1299 = vadd.f32 0.0, %v1298
    %1300 = vdwg.mxu0
    %v1301 = vadd.f32 %v852, %v1143
    %v1302 = vadd.f32 %v853, %v1145
    %v1303 = vadd.f32 %v854, %v1147
    %v1304 = vadd.f32 %v855, %v1149
    %v1305 = vadd.f32 %v856, %v1153
    %v1306 = vadd.f32 %v857, %v1155
    %v1307 = vadd.f32 %v858, %v1157
    %v1308 = vadd.f32 %v859, %v1159
    %v1309 = vadd.f32 %v860, %v1163
    %v1310 = vadd.f32 %v861, %v1165
    %v1311 = vadd.f32 %v862, %v1167
    %v1312 = vadd.f32 %v863, %v1169
    %v1313 = vadd.f32 %v864, %v1173
    %v1314 = vadd.f32 %v865, %v1175
    %v1315 = vadd.f32 %v866, %v1177
    %v1316 = vadd.f32 %v867, %v1179
    %v1317 = vadd.f32 %v868, %v1183
    %v1318 = vadd.f32 %v869, %v1185
    %v1319 = vadd.f32 %v870, %v1187
    %v1320 = vadd.f32 %v871, %v1189
    %v1321 = vadd.f32 %v872, %v1193
    %v1322 = vadd.f32 %v873, %v1195
    %v1323 = vadd.f32 %v874, %v1197
    %v1324 = vadd.f32 %v875, %v1199
    %v1325 = vadd.f32 %v876, %v1203
    %v1326 = vadd.f32 %v877, %v1205
    %v1327 = vadd.f32 %v878, %v1207
    %v1328 = vadd.f32 %v879, %v1209
    %v1329 = vadd.f32 %v880, %v1213
    %v1330 = vadd.f32 %v881, %v1215
    %v1331 = vadd.f32 %v882, %v1217
    %v1332 = vadd.f32 %v883, %v1219
    %v1333 = vadd.f32 %v884, %v1223
    %v1334 = vadd.f32 %v885, %v1225
    %v1335 = vadd.f32 %v886, %v1227
    %v1336 = vadd.f32 %v887, %v1229
    %v1337 = vadd.f32 %v888, %v1233
    %v1338 = vadd.f32 %v889, %v1235
    %v1339 = vadd.f32 %v890, %v1237
    %v1340 = vadd.f32 %v891, %v1239
    %v1341 = vadd.f32 %v892, %v1243
    %v1342 = vadd.f32 %v893, %v1245
    %v1343 = vadd.f32 %v894, %v1247
    %v1344 = vadd.f32 %v895, %v1249
    %v1345 = vadd.f32 %v896, %v1253
    %v1346 = vadd.f32 %v897, %v1255
    %v1347 = vadd.f32 %v898, %v1257
    %v1348 = vadd.f32 %v899, %v1259
    %v1349 = vadd.f32 %v900, %v1263
    %v1350 = vadd.f32 %v901, %v1265
    %v1351 = vadd.f32 %v902, %v1267
    %v1352 = vadd.f32 %v903, %v1269
    %v1353 = vadd.f32 %v904, %v1273
    %v1354 = vadd.f32 %v905, %v1275
    %v1355 = vadd.f32 %v906, %v1277
    %v1356 = vadd.f32 %v907, %v1279
    %v1357 = vadd.f32 %v908, %v1283
    %v1358 = vadd.f32 %v909, %v1285
    %v1359 = vadd.f32 %v910, %v1287
    %v1360 = vadd.f32 %v911, %v1289
    %v1361 = vadd.f32 %v912, %v1293
    %v1362 = vadd.f32 %v913, %v1295
    %v1363 = vadd.f32 %v914, %v1297
    %v1364 = vadd.f32 %v915, %v1299
    %1365 = vst [vmem:[#allocation3] sm:$0xff] %v1301
    %1366 = vst [vmem:[#allocation3 + $0x8] sm:$0xff] %v1302
    %1367 = vst [vmem:[#allocation3 + $0x10] sm:$0xff] %v1303
    %1368 = vst [vmem:[#allocation3 + $0x18] sm:$0xff] %v1304
    %1369 = vst [vmem:[#allocation3 + $0x20] sm:$0xff] %v1305
    %1370 = vst [vmem:[#allocation3 + $0x28] sm:$0xff] %v1306
    %1371 = vst [vmem:[#allocation3 + $0x30] sm:$0xff] %v1307
    %1372 = vst [vmem:[#allocation3 + $0x38] sm:$0xff] %v1308
    %1373 = vst [vmem:[#allocation3 + $0x40] sm:$0xff] %v1309
    %1374 = vst [vmem:[#allocation3 + $0x48] sm:$0xff] %v1310
    %1375 = vst [vmem:[#allocation3 + $0x50] sm:$0xff] %v1311
    %1376 = vst [vmem:[#allocation3 + $0x58] sm:$0xff] %v1312
    %1377 = vst [vmem:[#allocation3 + $0x60] sm:$0xff] %v1313
    %1378 = vst [vmem:[#allocation3 + $0x68] sm:$0xff] %v1314
    %1379 = vst [vmem:[#allocation3 + $0x70] sm:$0xff] %v1315
    %1380 = vst [vmem:[#allocation3 + $0x78] sm:$0xff] %v1316
    %1381 = vst [vmem:[#allocation3 + $0x80] sm:$0xff] %v1317
    %1382 = vst [vmem:[#allocation3 + $0x88] sm:$0xff] %v1318
    %1383 = vst [vmem:[#allocation3 + $0x90] sm:$0xff] %v1319
    %1384 = vst [vmem:[#allocation3 + $0x98] sm:$0xff] %v1320
    %1385 = vst [vmem:[#allocation3 + $0xa0] sm:$0xff] %v1321
    %1386 = vst [vmem:[#allocation3 + $0xa8] sm:$0xff] %v1322
    %1387 = vst [vmem:[#allocation3 + $0xb0] sm:$0xff] %v1323
    %1388 = vst [vmem:[#allocation3 + $0xb8] sm:$0xff] %v1324
    %1389 = vst [vmem:[#allocation3 + $0xc0] sm:$0xff] %v1325
    %1390 = vst [vmem:[#allocation3 + $0xc8] sm:$0xff] %v1326
    %1391 = vst [vmem:[#allocation3 + $0xd0] sm:$0xff] %v1327
    %1392 = vst [vmem:[#allocation3 + $0xd8] sm:$0xff] %v1328
    %1393 = vst [vmem:[#allocation3 + $0xe0] sm:$0xff] %v1329
    %1394 = vst [vmem:[#allocation3 + $0xe8] sm:$0xff] %v1330
    %1395 = vst [vmem:[#allocation3 + $0xf0] sm:$0xff] %v1331
    %1396 = vst [vmem:[#allocation3 + $0xf8] sm:$0xff] %v1332
    %1397 = vst [vmem:[#allocation3 + $0x100] sm:$0xff] %v1333
    %1398 = vst [vmem:[#allocation3 + $0x108] sm:$0xff] %v1334
    %1399 = vst [vmem:[#allocation3 + $0x110] sm:$0xff] %v1335
    %1400 = vst [vmem:[#allocation3 + $0x118] sm:$0xff] %v1336
    %1401 = vst [vmem:[#allocation3 + $0x120] sm:$0xff] %v1337
    %1402 = vst [vmem:[#allocation3 + $0x128] sm:$0xff] %v1338
    %1403 = vst [vmem:[#allocation3 + $0x130] sm:$0xff] %v1339
    %1404 = vst [vmem:[#allocation3 + $0x138] sm:$0xff] %v1340
    %1405 = vst [vmem:[#allocation3 + $0x140] sm:$0xff] %v1341
    %1406 = vst [vmem:[#allocation3 + $0x148] sm:$0xff] %v1342
    %1407 = vst [vmem:[#allocation3 + $0x150] sm:$0xff] %v1343
    %1408 = vst [vmem:[#allocation3 + $0x158] sm:$0xff] %v1344
    %1409 = vst [vmem:[#allocation3 + $0x160] sm:$0xff] %v1345
    %1410 = vst [vmem:[#allocation3 + $0x168] sm:$0xff] %v1346
    %1411 = vst [vmem:[#allocation3 + $0x170] sm:$0xff] %v1347
    %1412 = vst [vmem:[#allocation3 + $0x178] sm:$0xff] %v1348
    %1413 = vst [vmem:[#allocation3 + $0x180] sm:$0xff] %v1349
    %1414 = vst [vmem:[#allocation3 + $0x188] sm:$0xff] %v1350
    %1415 = vst [vmem:[#allocation3 + $0x190] sm:$0xff] %v1351
    %1416 = vst [vmem:[#allocation3 + $0x198] sm:$0xff] %v1352
    %1417 = vst [vmem:[#allocation3 + $0x1a0] sm:$0xff] %v1353
    %1418 = vst [vmem:[#allocation3 + $0x1a8] sm:$0xff] %v1354
    %1419 = vst [vmem:[#allocation3 + $0x1b0] sm:$0xff] %v1355
    %1420 = vst [vmem:[#allocation3 + $0x1b8] sm:$0xff] %v1356
    %1421 = vst [vmem:[#allocation3 + $0x1c0] sm:$0xff] %v1357
    %1422 = vst [vmem:[#allocation3 + $0x1c8] sm:$0xff] %v1358
    %1423 = vst [vmem:[#allocation3 + $0x1d0] sm:$0xff] %v1359
    %1424 = vst [vmem:[#allocation3 + $0x1d8] sm:$0xff] %v1360
    %1425 = vst [vmem:[#allocation3 + $0x1e0] sm:$0xff] %v1361
    %1426 = vst [vmem:[#allocation3 + $0x1e8] sm:$0xff] %v1362
    %1427 = vst [vmem:[#allocation3 + $0x1f0] sm:$0xff] %v1363
    %1428 = vst [vmem:[#allocation3 + $0x1f8] sm:$0xff] %v1364
    // Predicated region
    $region26: #{forward.1} parent=1 // pred_check
      %p1429 = pneg %p23
    $region27: #{forward.1} parent=1 // pred_check_branch
      %1431 = sbr.rel (%p1429) target = $region29
    $region28: #{forward.1} parent=1 // pred_region
      %v1432 = vld [vmem:[#allocation2] sm:$0xff]
      %v1433 = vld [vmem:[#allocation2 + $0x8] sm:$0xff]
      %v1434 = vld [vmem:[#allocation2 + $0x10] sm:$0xff]
      %v1435 = vld [vmem:[#allocation2 + $0x18] sm:$0xff]
      %v1436 = vld [vmem:[#allocation2 + $0x20] sm:$0xff]
      %v1437 = vld [vmem:[#allocation2 + $0x28] sm:$0xff]
      %v1438 = vld [vmem:[#allocation2 + $0x30] sm:$0xff]
      %v1439 = vld [vmem:[#allocation2 + $0x38] sm:$0xff]
      %v1440 = vld [vmem:[#allocation2 + $0x40] sm:$0xff]
      %v1441 = vld [vmem:[#allocation2 + $0x48] sm:$0xff]
      %v1442 = vld [vmem:[#allocation2 + $0x50] sm:$0xff]
      %v1443 = vld [vmem:[#allocation2 + $0x58] sm:$0xff]
      %v1444 = vld [vmem:[#allocation2 + $0x60] sm:$0xff]
      %v1445 = vld [vmem:[#allocation2 + $0x68] sm:$0xff]
      %v1446 = vld [vmem:[#allocation2 + $0x70] sm:$0xff]
      %v1447 = vld [vmem:[#allocation2 + $0x78] sm:$0xff]
      %v1448 = vld [vmem:[#allocation2 + $0x80] sm:$0xff]
      %v1449 = vld [vmem:[#allocation2 + $0x88] sm:$0xff]
      %v1450 = vld [vmem:[#allocation2 + $0x90] sm:$0xff]
      %v1451 = vld [vmem:[#allocation2 + $0x98] sm:$0xff]
      %v1452 = vld [vmem:[#allocation2 + $0xa0] sm:$0xff]
      %v1453 = vld [vmem:[#allocation2 + $0xa8] sm:$0xff]
      %v1454 = vld [vmem:[#allocation2 + $0xb0] sm:$0xff]
      %v1455 = vld [vmem:[#allocation2 + $0xb8] sm:$0xff]
      %v1456 = vld [vmem:[#allocation2 + $0xc0] sm:$0xff]
      %v1457 = vld [vmem:[#allocation2 + $0xc8] sm:$0xff]
      %v1458 = vld [vmem:[#allocation2 + $0xd0] sm:$0xff]
      %v1459 = vld [vmem:[#allocation2 + $0xd8] sm:$0xff]
      %v1460 = vld [vmem:[#allocation2 + $0xe0] sm:$0xff]
      %v1461 = vld [vmem:[#allocation2 + $0xe8] sm:$0xff]
      %v1462 = vld [vmem:[#allocation2 + $0xf0] sm:$0xff]
      %v1463 = vld [vmem:[#allocation2 + $0xf8] sm:$0xff]
      %v1464 = vld [vmem:[#allocation2 + $0x100] sm:$0xff]
      %v1465 = vld [vmem:[#allocation2 + $0x108] sm:$0xff]
      %v1466 = vld [vmem:[#allocation2 + $0x110] sm:$0xff]
      %v1467 = vld [vmem:[#allocation2 + $0x118] sm:$0xff]
      %v1468 = vld [vmem:[#allocation2 + $0x120] sm:$0xff]
      %v1469 = vld [vmem:[#allocation2 + $0x128] sm:$0xff]
      %v1470 = vld [vmem:[#allocation2 + $0x130] sm:$0xff]
      %v1471 = vld [vmem:[#allocation2 + $0x138] sm:$0xff]
      %v1472 = vld [vmem:[#allocation2 + $0x140] sm:$0xff]
      %v1473 = vld [vmem:[#allocation2 + $0x148] sm:$0xff]
      %v1474 = vld [vmem:[#allocation2 + $0x150] sm:$0xff]
      %v1475 = vld [vmem:[#allocation2 + $0x158] sm:$0xff]
      %v1476 = vld [vmem:[#allocation2 + $0x160] sm:$0xff]
      %v1477 = vld [vmem:[#allocation2 + $0x168] sm:$0xff]
      %v1478 = vld [vmem:[#allocation2 + $0x170] sm:$0xff]
      %v1479 = vld [vmem:[#allocation2 + $0x178] sm:$0xff]
      %v1480 = vld [vmem:[#allocation2 + $0x180] sm:$0xff]
      %v1481 = vld [vmem:[#allocation2 + $0x188] sm:$0xff]
      %v1482 = vld [vmem:[#allocation2 + $0x190] sm:$0xff]
      %v1483 = vld [vmem:[#allocation2 + $0x198] sm:$0xff]
      %v1484 = vld [vmem:[#allocation2 + $0x1a0] sm:$0xff]
      %v1485 = vld [vmem:[#allocation2 + $0x1a8] sm:$0xff]
      %v1486 = vld [vmem:[#allocation2 + $0x1b0] sm:$0xff]
      %v1487 = vld [vmem:[#allocation2 + $0x1b8] sm:$0xff]
      %v1488 = vld [vmem:[#allocation2 + $0x1c0] sm:$0xff]
      %v1489 = vld [vmem:[#allocation2 + $0x1c8] sm:$0xff]
      %v1490 = vld [vmem:[#allocation2 + $0x1d0] sm:$0xff]
      %v1491 = vld [vmem:[#allocation2 + $0x1d8] sm:$0xff]
      %v1492 = vld [vmem:[#allocation2 + $0x1e0] sm:$0xff]
      %v1493 = vld [vmem:[#allocation2 + $0x1e8] sm:$0xff]
      %v1494 = vld [vmem:[#allocation2 + $0x1f0] sm:$0xff]
      %v1495 = vld [vmem:[#allocation2 + $0x1f8] sm:$0xff]
      %v1496 = vld [vmem:[#allocation3] sm:$0xff]
      %v1497 = vld [vmem:[#allocation3 + $0x8] sm:$0xff]
      %v1498 = vld [vmem:[#allocation3 + $0x10] sm:$0xff]
      %v1499 = vld [vmem:[#allocation3 + $0x18] sm:$0xff]
      %v1500 = vld [vmem:[#allocation3 + $0x20] sm:$0xff]
      %v1501 = vld [vmem:[#allocation3 + $0x28] sm:$0xff]
      %v1502 = vld [vmem:[#allocation3 + $0x30] sm:$0xff]
      %v1503 = vld [vmem:[#allocation3 + $0x38] sm:$0xff]
      %v1504 = vld [vmem:[#allocation3 + $0x40] sm:$0xff]
      %v1505 = vld [vmem:[#allocation3 + $0x48] sm:$0xff]
      %v1506 = vld [vmem:[#allocation3 + $0x50] sm:$0xff]
      %v1507 = vld [vmem:[#allocation3 + $0x58] sm:$0xff]
      %v1508 = vld [vmem:[#allocation3 + $0x60] sm:$0xff]
      %v1509 = vld [vmem:[#allocation3 + $0x68] sm:$0xff]
      %v1510 = vld [vmem:[#allocation3 + $0x70] sm:$0xff]
      %v1511 = vld [vmem:[#allocation3 + $0x78] sm:$0xff]
      %v1512 = vld [vmem:[#allocation3 + $0x80] sm:$0xff]
      %v1513 = vld [vmem:[#allocation3 + $0x88] sm:$0xff]
      %v1514 = vld [vmem:[#allocation3 + $0x90] sm:$0xff]
      %v1515 = vld [vmem:[#allocation3 + $0x98] sm:$0xff]
      %v1516 = vld [vmem:[#allocation3 + $0xa0] sm:$0xff]
      %v1517 = vld [vmem:[#allocation3 + $0xa8] sm:$0xff]
      %v1518 = vld [vmem:[#allocation3 + $0xb0] sm:$0xff]
      %v1519 = vld [vmem:[#allocation3 + $0xb8] sm:$0xff]
      %v1520 = vld [vmem:[#allocation3 + $0xc0] sm:$0xff]
      %v1521 = vld [vmem:[#allocation3 + $0xc8] sm:$0xff]
      %v1522 = vld [vmem:[#allocation3 + $0xd0] sm:$0xff]
      %v1523 = vld [vmem:[#allocation3 + $0xd8] sm:$0xff]
      %v1524 = vld [vmem:[#allocation3 + $0xe0] sm:$0xff]
      %v1525 = vld [vmem:[#allocation3 + $0xe8] sm:$0xff]
      %v1526 = vld [vmem:[#allocation3 + $0xf0] sm:$0xff]
      %v1527 = vld [vmem:[#allocation3 + $0xf8] sm:$0xff]
      %v1528 = vld [vmem:[#allocation3 + $0x100] sm:$0xff]
      %v1529 = vld [vmem:[#allocation3 + $0x108] sm:$0xff]
      %v1530 = vld [vmem:[#allocation3 + $0x110] sm:$0xff]
      %v1531 = vld [vmem:[#allocation3 + $0x118] sm:$0xff]
      %v1532 = vld [vmem:[#allocation3 + $0x120] sm:$0xff]
      %v1533 = vld [vmem:[#allocation3 + $0x128] sm:$0xff]
      %v1534 = vld [vmem:[#allocation3 + $0x130] sm:$0xff]
      %v1535 = vld [vmem:[#allocation3 + $0x138] sm:$0xff]
      %v1536 = vld [vmem:[#allocation3 + $0x140] sm:$0xff]
      %v1537 = vld [vmem:[#allocation3 + $0x148] sm:$0xff]
      %v1538 = vld [vmem:[#allocation3 + $0x150] sm:$0xff]
      %v1539 = vld [vmem:[#allocation3 + $0x158] sm:$0xff]
      %v1540 = vld [vmem:[#allocation3 + $0x160] sm:$0xff]
      %v1541 = vld [vmem:[#allocation3 + $0x168] sm:$0xff]
      %v1542 = vld [vmem:[#allocation3 + $0x170] sm:$0xff]
      %v1543 = vld [vmem:[#allocation3 + $0x178] sm:$0xff]
      %v1544 = vld [vmem:[#allocation3 + $0x180] sm:$0xff]
      %v1545 = vld [vmem:[#allocation3 + $0x188] sm:$0xff]
      %v1546 = vld [vmem:[#allocation3 + $0x190] sm:$0xff]
      %v1547 = vld [vmem:[#allocation3 + $0x198] sm:$0xff]
      %v1548 = vld [vmem:[#allocation3 + $0x1a0] sm:$0xff]
      %v1549 = vld [vmem:[#allocation3 + $0x1a8] sm:$0xff]
      %v1550 = vld [vmem:[#allocation3 + $0x1b0] sm:$0xff]
      %v1551 = vld [vmem:[#allocation3 + $0x1b8] sm:$0xff]
      %v1552 = vld [vmem:[#allocation3 + $0x1c0] sm:$0xff]
      %v1553 = vld [vmem:[#allocation3 + $0x1c8] sm:$0xff]
      %v1554 = vld [vmem:[#allocation3 + $0x1d0] sm:$0xff]
      %v1555 = vld [vmem:[#allocation3 + $0x1d8] sm:$0xff]
      %v1556 = vld [vmem:[#allocation3 + $0x1e0] sm:$0xff]
      %v1557 = vld [vmem:[#allocation3 + $0x1e8] sm:$0xff]
      %v1558 = vld [vmem:[#allocation3 + $0x1f0] sm:$0xff]
      %v1559 = vld [vmem:[#allocation3 + $0x1f8] sm:$0xff]
      %v1560 = vpack.c.bf16 %v1434, %v1432
      %v1561 = vpack.c.bf16 %v1435, %v1433
      %v1562 = vpack.c.bf16 %v1438, %v1436
      %v1563 = vpack.c.bf16 %v1439, %v1437
      %v1564 = vpack.c.bf16 %v1442, %v1440
      %v1565 = vpack.c.bf16 %v1443, %v1441
      %v1566 = vpack.c.bf16 %v1446, %v1444
      %v1567 = vpack.c.bf16 %v1447, %v1445
      %v1568 = vpack.c.bf16 %v1450, %v1448
      %v1569 = vpack.c.bf16 %v1451, %v1449
      %v1570 = vpack.c.bf16 %v1454, %v1452
      %v1571 = vpack.c.bf16 %v1455, %v1453
      %v1572 = vpack.c.bf16 %v1458, %v1456
      %v1573 = vpack.c.bf16 %v1459, %v1457
      %v1574 = vpack.c.bf16 %v1462, %v1460
      %v1575 = vpack.c.bf16 %v1463, %v1461
      %v1576 = vpack.c.bf16 %v1466, %v1464
      %v1577 = vpack.c.bf16 %v1467, %v1465
      %v1578 = vpack.c.bf16 %v1470, %v1468
      %v1579 = vpack.c.bf16 %v1471, %v1469
      %v1580 = vpack.c.bf16 %v1474, %v1472
      %v1581 = vpack.c.bf16 %v1475, %v1473
      %v1582 = vpack.c.bf16 %v1478, %v1476
      %v1583 = vpack.c.bf16 %v1479, %v1477
      %v1584 = vpack.c.bf16 %v1482, %v1480
      %v1585 = vpack.c.bf16 %v1483, %v1481
      %v1586 = vpack.c.bf16 %v1486, %v1484
      %v1587 = vpack.c.bf16 %v1487, %v1485
      %v1588 = vpack.c.bf16 %v1490, %v1488
      %v1589 = vpack.c.bf16 %v1491, %v1489
      %v1590 = vpack.c.bf16 %v1494, %v1492
      %v1591 = vpack.c.bf16 %v1495, %v1493
      %v1624 = vunpack.c.l.b16 %v1560
      %v1625 = vunpack.c.l.b16 %v1561
      %v1626 = vunpack.c.h.b16 %v1560
      %v1627 = vunpack.c.h.b16 %v1561
      %v1628 = vunpack.c.l.b16 %v1562
      %v1629 = vunpack.c.l.b16 %v1563
      %v1630 = vunpack.c.h.b16 %v1562
      %v1631 = vunpack.c.h.b16 %v1563
      %v1632 = vunpack.c.l.b16 %v1564
      %v1633 = vunpack.c.l.b16 %v1565
      %v1634 = vunpack.c.h.b16 %v1564
      %v1635 = vunpack.c.h.b16 %v1565
      %v1636 = vunpack.c.l.b16 %v1566
      %v1637 = vunpack.c.l.b16 %v1567
      %v1638 = vunpack.c.h.b16 %v1566
      %v1639 = vunpack.c.h.b16 %v1567
      %v1640 = vunpack.c.l.b16 %v1568
      %v1641 = vunpack.c.l.b16 %v1569
      %v1642 = vunpack.c.h.b16 %v1568
      %v1643 = vunpack.c.h.b16 %v1569
      %v1644 = vunpack.c.l.b16 %v1570
      %v1645 = vunpack.c.l.b16 %v1571
      %v1646 = vunpack.c.h.b16 %v1570
      %v1647 = vunpack.c.h.b16 %v1571
      %v1648 = vunpack.c.l.b16 %v1572
      %v1649 = vunpack.c.l.b16 %v1573
      %v1650 = vunpack.c.h.b16 %v1572
      %v1651 = vunpack.c.h.b16 %v1573
      %v1652 = vunpack.c.l.b16 %v1574
      %v1653 = vunpack.c.l.b16 %v1575
      %v1654 = vunpack.c.h.b16 %v1574
      %v1655 = vunpack.c.h.b16 %v1575
      %v1656 = vunpack.c.l.b16 %v1576
      %v1657 = vunpack.c.l.b16 %v1577
      %v1658 = vunpack.c.h.b16 %v1576
      %v1659 = vunpack.c.h.b16 %v1577
      %v1660 = vunpack.c.l.b16 %v1578
      %v1661 = vunpack.c.l.b16 %v1579
      %v1662 = vunpack.c.h.b16 %v1578
      %v1663 = vunpack.c.h.b16 %v1579
      %v1664 = vunpack.c.l.b16 %v1580
      %v1665 = vunpack.c.l.b16 %v1581
      %v1666 = vunpack.c.h.b16 %v1580
      %v1667 = vunpack.c.h.b16 %v1581
      %v1668 = vunpack.c.l.b16 %v1582
      %v1669 = vunpack.c.l.b16 %v1583
      %v1670 = vunpack.c.h.b16 %v1582
      %v1671 = vunpack.c.h.b16 %v1583
      %v1672 = vunpack.c.l.b16 %v1584
      %v1673 = vunpack.c.l.b16 %v1585
      %v1674 = vunpack.c.h.b16 %v1584
      %v1675 = vunpack.c.h.b16 %v1585
      %v1676 = vunpack.c.l.b16 %v1586
      %v1677 = vunpack.c.l.b16 %v1587
      %v1678 = vunpack.c.h.b16 %v1586
      %v1679 = vunpack.c.h.b16 %v1587
      %v1680 = vunpack.c.l.b16 %v1588
      %v1681 = vunpack.c.l.b16 %v1589
      %v1682 = vunpack.c.h.b16 %v1588
      %v1683 = vunpack.c.h.b16 %v1589
      %v1684 = vunpack.c.l.b16 %v1590
      %v1685 = vunpack.c.l.b16 %v1591
      %v1686 = vunpack.c.h.b16 %v1590
      %v1687 = vunpack.c.h.b16 %v1591
      %v1688 = vpack.c.b16 %v1625, %v1624
      %v1689 = vpack.c.b16 %v1627, %v1626
      %v1690 = vpack.c.b16 %v1629, %v1628
      %v1691 = vpack.c.b16 %v1631, %v1630
      %v1692 = vpack.c.b16 %v1633, %v1632
      %v1693 = vpack.c.b16 %v1635, %v1634
      %v1694 = vpack.c.b16 %v1637, %v1636
      %v1695 = vpack.c.b16 %v1639, %v1638
      %v1696 = vpack.c.b16 %v1641, %v1640
      %v1697 = vpack.c.b16 %v1643, %v1642
      %v1698 = vpack.c.b16 %v1645, %v1644
      %v1699 = vpack.c.b16 %v1647, %v1646
      %v1700 = vpack.c.b16 %v1649, %v1648
      %v1701 = vpack.c.b16 %v1651, %v1650
      %v1702 = vpack.c.b16 %v1653, %v1652
      %v1703 = vpack.c.b16 %v1655, %v1654
      %v1704 = vpack.c.b16 %v1657, %v1656
      %v1705 = vpack.c.b16 %v1659, %v1658
      %v1706 = vpack.c.b16 %v1661, %v1660
      %v1707 = vpack.c.b16 %v1663, %v1662
      %v1708 = vpack.c.b16 %v1665, %v1664
      %v1709 = vpack.c.b16 %v1667, %v1666
      %v1710 = vpack.c.b16 %v1669, %v1668
      %v1711 = vpack.c.b16 %v1671, %v1670
      %v1712 = vpack.c.b16 %v1673, %v1672
      %v1713 = vpack.c.b16 %v1675, %v1674
      %v1714 = vpack.c.b16 %v1677, %v1676
      %v1715 = vpack.c.b16 %v1679, %v1678
      %v1716 = vpack.c.b16 %v1681, %v1680
      %v1717 = vpack.c.b16 %v1683, %v1682
      %v1718 = vpack.c.b16 %v1685, %v1684
      %v1719 = vpack.c.b16 %v1687, %v1686
      %1752 = vst [vmem:[#allocation8] sm:$0xff] %v1688
      %1753 = vst [vmem:[#allocation8 + $0x8] sm:$0xff] %v1689
      %1754 = vst [vmem:[#allocation8 + $0x10] sm:$0xff] %v1690
      %1755 = vst [vmem:[#allocation8 + $0x18] sm:$0xff] %v1691
      %1756 = vst [vmem:[#allocation8 + $0x20] sm:$0xff] %v1692
      %1757 = vst [vmem:[#allocation8 + $0x28] sm:$0xff] %v1693
      %1758 = vst [vmem:[#allocation8 + $0x30] sm:$0xff] %v1694
      %1759 = vst [vmem:[#allocation8 + $0x38] sm:$0xff] %v1695
      %1760 = vst [vmem:[#allocation8 + $0x40] sm:$0xff] %v1696
      %1761 = vst [vmem:[#allocation8 + $0x48] sm:$0xff] %v1697
      %1762 = vst [vmem:[#allocation8 + $0x50] sm:$0xff] %v1698
      %1763 = vst [vmem:[#allocation8 + $0x58] sm:$0xff] %v1699
      %1764 = vst [vmem:[#allocation8 + $0x60] sm:$0xff] %v1700
      %1765 = vst [vmem:[#allocation8 + $0x68] sm:$0xff] %v1701
      %1766 = vst [vmem:[#allocation8 + $0x70] sm:$0xff] %v1702
      %1767 = vst [vmem:[#allocation8 + $0x78] sm:$0xff] %v1703
      %1768 = vst [vmem:[#allocation8 + $0x80] sm:$0xff] %v1704
      %1769 = vst [vmem:[#allocation8 + $0x88] sm:$0xff] %v1705
      %1770 = vst [vmem:[#allocation8 + $0x90] sm:$0xff] %v1706
      %1771 = vst [vmem:[#allocation8 + $0x98] sm:$0xff] %v1707
      %1772 = vst [vmem:[#allocation8 + $0xa0] sm:$0xff] %v1708
      %1773 = vst [vmem:[#allocation8 + $0xa8] sm:$0xff] %v1709
      %1774 = vst [vmem:[#allocation8 + $0xb0] sm:$0xff] %v1710
      %1775 = vst [vmem:[#allocation8 + $0xb8] sm:$0xff] %v1711
      %1776 = vst [vmem:[#allocation8 + $0xc0] sm:$0xff] %v1712
      %1777 = vst [vmem:[#allocation8 + $0xc8] sm:$0xff] %v1713
      %1778 = vst [vmem:[#allocation8 + $0xd0] sm:$0xff] %v1714
      %1779 = vst [vmem:[#allocation8 + $0xd8] sm:$0xff] %v1715
      %1780 = vst [vmem:[#allocation8 + $0xe0] sm:$0xff] %v1716
      %1781 = vst [vmem:[#allocation8 + $0xe8] sm:$0xff] %v1717
      %1782 = vst [vmem:[#allocation8 + $0xf0] sm:$0xff] %v1718
      %1783 = vst [vmem:[#allocation8 + $0xf8] sm:$0xff] %v1719
      %p1784 = scmp.eq.s32.totalorder 0, 0
      // Predicated region
      $region30: #{forward.1} parent=28 // pred_check
        %p1785 = pneg %p1784
      $region31: #{forward.1} parent=28 // pred_check_branch
        %1787 = sbr.rel (%p1785) target = $region33
      $region32: #{forward.1} parent=28 // pred_region
        %vm1788 = vcmask 7168
        %1789 = vst.msk [vmem:[#allocation4] sm:$0xff] %vm1788, 0.0
        %1790 = vst.msk [vmem:[#allocation4 + $0x8] sm:$0xff] %vm1788, 0.0
        %1791 = vst.msk [vmem:[#allocation4 + $0x10] sm:$0xff] %vm1788, 0.0
        %1792 = vst.msk [vmem:[#allocation4 + $0x18] sm:$0xff] %vm1788, 0.0
        %1793 = vst.msk [vmem:[#allocation4 + $0x20] sm:$0xff] %vm1788, 0.0
        %1794 = vst.msk [vmem:[#allocation4 + $0x28] sm:$0xff] %vm1788, 0.0
        %1795 = vst.msk [vmem:[#allocation4 + $0x30] sm:$0xff] %vm1788, 0.0
        %1796 = vst.msk [vmem:[#allocation4 + $0x38] sm:$0xff] %vm1788, 0.0
        %1797 = vst.msk [vmem:[#allocation4 + $0x40] sm:$0xff] %vm1788, 0.0
        %1798 = vst.msk [vmem:[#allocation4 + $0x48] sm:$0xff] %vm1788, 0.0
        %1799 = vst.msk [vmem:[#allocation4 + $0x50] sm:$0xff] %vm1788, 0.0
        %1800 = vst.msk [vmem:[#allocation4 + $0x58] sm:$0xff] %vm1788, 0.0
        %1801 = vst.msk [vmem:[#allocation4 + $0x60] sm:$0xff] %vm1788, 0.0
        %1802 = vst.msk [vmem:[#allocation4 + $0x68] sm:$0xff] %vm1788, 0.0
        %1803 = vst.msk [vmem:[#allocation4 + $0x70] sm:$0xff] %vm1788, 0.0
        %1804 = vst.msk [vmem:[#allocation4 + $0x78] sm:$0xff] %vm1788, 0.0
        %1805 = vst.msk [vmem:[#allocation4 + $0x80] sm:$0xff] %vm1788, 0.0
        %1806 = vst.msk [vmem:[#allocation4 + $0x88] sm:$0xff] %vm1788, 0.0
        %1807 = vst.msk [vmem:[#allocation4 + $0x90] sm:$0xff] %vm1788, 0.0
        %1808 = vst.msk [vmem:[#allocation4 + $0x98] sm:$0xff] %vm1788, 0.0
        %1809 = vst.msk [vmem:[#allocation4 + $0xa0] sm:$0xff] %vm1788, 0.0
        %1810 = vst.msk [vmem:[#allocation4 + $0xa8] sm:$0xff] %vm1788, 0.0
        %1811 = vst.msk [vmem:[#allocation4 + $0xb0] sm:$0xff] %vm1788, 0.0
        %1812 = vst.msk [vmem:[#allocation4 + $0xb8] sm:$0xff] %vm1788, 0.0
        %1813 = vst.msk [vmem:[#allocation4 + $0xc0] sm:$0xff] %vm1788, 0.0
        %1814 = vst.msk [vmem:[#allocation4 + $0xc8] sm:$0xff] %vm1788, 0.0
        %1815 = vst.msk [vmem:[#allocation4 + $0xd0] sm:$0xff] %vm1788, 0.0
        %1816 = vst.msk [vmem:[#allocation4 + $0xd8] sm:$0xff] %vm1788, 0.0
        %1817 = vst.msk [vmem:[#allocation4 + $0xe0] sm:$0xff] %vm1788, 0.0
        %1818 = vst.msk [vmem:[#allocation4 + $0xe8] sm:$0xff] %vm1788, 0.0
        %1819 = vst.msk [vmem:[#allocation4 + $0xf0] sm:$0xff] %vm1788, 0.0
        %1820 = vst.msk [vmem:[#allocation4 + $0xf8] sm:$0xff] %vm1788, 0.0
        %1821 = vst.msk [vmem:[#allocation5] sm:$0xff] %vm1788, 0.0
        %1822 = vst.msk [vmem:[#allocation5 + $0x8] sm:$0xff] %vm1788, 0.0
        %1823 = vst.msk [vmem:[#allocation5 + $0x10] sm:$0xff] %vm1788, 0.0
        %1824 = vst.msk [vmem:[#allocation5 + $0x18] sm:$0xff] %vm1788, 0.0
        %1825 = vst.msk [vmem:[#allocation5 + $0x20] sm:$0xff] %vm1788, 0.0
        %1826 = vst.msk [vmem:[#allocation5 + $0x28] sm:$0xff] %vm1788, 0.0
        %1827 = vst.msk [vmem:[#allocation5 + $0x30] sm:$0xff] %vm1788, 0.0
        %1828 = vst.msk [vmem:[#allocation5 + $0x38] sm:$0xff] %vm1788, 0.0
        %1829 = vst.msk [vmem:[#allocation5 + $0x40] sm:$0xff] %vm1788, 0.0
        %1830 = vst.msk [vmem:[#allocation5 + $0x48] sm:$0xff] %vm1788, 0.0
        %1831 = vst.msk [vmem:[#allocation5 + $0x50] sm:$0xff] %vm1788, 0.0
        %1832 = vst.msk [vmem:[#allocation5 + $0x58] sm:$0xff] %vm1788, 0.0
        %1833 = vst.msk [vmem:[#allocation5 + $0x60] sm:$0xff] %vm1788, 0.0
        %1834 = vst.msk [vmem:[#allocation5 + $0x68] sm:$0xff] %vm1788, 0.0
        %1835 = vst.msk [vmem:[#allocation5 + $0x70] sm:$0xff] %vm1788, 0.0
        %1836 = vst.msk [vmem:[#allocation5 + $0x78] sm:$0xff] %vm1788, 0.0
        %1837 = vst.msk [vmem:[#allocation5 + $0x80] sm:$0xff] %vm1788, 0.0
        %1838 = vst.msk [vmem:[#allocation5 + $0x88] sm:$0xff] %vm1788, 0.0
        %1839 = vst.msk [vmem:[#allocation5 + $0x90] sm:$0xff] %vm1788, 0.0
        %1840 = vst.msk [vmem:[#allocation5 + $0x98] sm:$0xff] %vm1788, 0.0
        %1841 = vst.msk [vmem:[#allocation5 + $0xa0] sm:$0xff] %vm1788, 0.0
        %1842 = vst.msk [vmem:[#allocation5 + $0xa8] sm:$0xff] %vm1788, 0.0
        %1843 = vst.msk [vmem:[#allocation5 + $0xb0] sm:$0xff] %vm1788, 0.0
        %1844 = vst.msk [vmem:[#allocation5 + $0xb8] sm:$0xff] %vm1788, 0.0
        %1845 = vst.msk [vmem:[#allocation5 + $0xc0] sm:$0xff] %vm1788, 0.0
        %1846 = vst.msk [vmem:[#allocation5 + $0xc8] sm:$0xff] %vm1788, 0.0
        %1847 = vst.msk [vmem:[#allocation5 + $0xd0] sm:$0xff] %vm1788, 0.0
        %1848 = vst.msk [vmem:[#allocation5 + $0xd8] sm:$0xff] %vm1788, 0.0
        %1849 = vst.msk [vmem:[#allocation5 + $0xe0] sm:$0xff] %vm1788, 0.0
        %1850 = vst.msk [vmem:[#allocation5 + $0xe8] sm:$0xff] %vm1788, 0.0
        %1851 = vst.msk [vmem:[#allocation5 + $0xf0] sm:$0xff] %vm1788, 0.0
        %1852 = vst.msk [vmem:[#allocation5 + $0xf8] sm:$0xff] %vm1788, 0.0
        %1853 = vst.msk [vmem:[#allocation6] sm:$0xff] %vm1788, 0.0
        %1854 = vst.msk [vmem:[#allocation6 + $0x8] sm:$0xff] %vm1788, 0.0
        %1855 = vst.msk [vmem:[#allocation6 + $0x10] sm:$0xff] %vm1788, 0.0
        %1856 = vst.msk [vmem:[#allocation6 + $0x18] sm:$0xff] %vm1788, 0.0
        %1857 = vst.msk [vmem:[#allocation6 + $0x20] sm:$0xff] %vm1788, 0.0
        %1858 = vst.msk [vmem:[#allocation6 + $0x28] sm:$0xff] %vm1788, 0.0
        %1859 = vst.msk [vmem:[#allocation6 + $0x30] sm:$0xff] %vm1788, 0.0
        %1860 = vst.msk [vmem:[#allocation6 + $0x38] sm:$0xff] %vm1788, 0.0
        %1861 = vst.msk [vmem:[#allocation6 + $0x40] sm:$0xff] %vm1788, 0.0
        %1862 = vst.msk [vmem:[#allocation6 + $0x48] sm:$0xff] %vm1788, 0.0
        %1863 = vst.msk [vmem:[#allocation6 + $0x50] sm:$0xff] %vm1788, 0.0
        %1864 = vst.msk [vmem:[#allocation6 + $0x58] sm:$0xff] %vm1788, 0.0
        %1865 = vst.msk [vmem:[#allocation6 + $0x60] sm:$0xff] %vm1788, 0.0
        %1866 = vst.msk [vmem:[#allocation6 + $0x68] sm:$0xff] %vm1788, 0.0
        %1867 = vst.msk [vmem:[#allocation6 + $0x70] sm:$0xff] %vm1788, 0.0
        %1868 = vst.msk [vmem:[#allocation6 + $0x78] sm:$0xff] %vm1788, 0.0
        %1869 = vst.msk [vmem:[#allocation6 + $0x80] sm:$0xff] %vm1788, 0.0
        %1870 = vst.msk [vmem:[#allocation6 + $0x88] sm:$0xff] %vm1788, 0.0
        %1871 = vst.msk [vmem:[#allocation6 + $0x90] sm:$0xff] %vm1788, 0.0
        %1872 = vst.msk [vmem:[#allocation6 + $0x98] sm:$0xff] %vm1788, 0.0
        %1873 = vst.msk [vmem:[#allocation6 + $0xa0] sm:$0xff] %vm1788, 0.0
        %1874 = vst.msk [vmem:[#allocation6 + $0xa8] sm:$0xff] %vm1788, 0.0
        %1875 = vst.msk [vmem:[#allocation6 + $0xb0] sm:$0xff] %vm1788, 0.0
        %1876 = vst.msk [vmem:[#allocation6 + $0xb8] sm:$0xff] %vm1788, 0.0
        %1877 = vst.msk [vmem:[#allocation6 + $0xc0] sm:$0xff] %vm1788, 0.0
        %1878 = vst.msk [vmem:[#allocation6 + $0xc8] sm:$0xff] %vm1788, 0.0
        %1879 = vst.msk [vmem:[#allocation6 + $0xd0] sm:$0xff] %vm1788, 0.0
        %1880 = vst.msk [vmem:[#allocation6 + $0xd8] sm:$0xff] %vm1788, 0.0
        %1881 = vst.msk [vmem:[#allocation6 + $0xe0] sm:$0xff] %vm1788, 0.0
        %1882 = vst.msk [vmem:[#allocation6 + $0xe8] sm:$0xff] %vm1788, 0.0
        %1883 = vst.msk [vmem:[#allocation6 + $0xf0] sm:$0xff] %vm1788, 0.0
        %1884 = vst.msk [vmem:[#allocation6 + $0xf8] sm:$0xff] %vm1788, 0.0
        %1885 = vst.msk [vmem:[#allocation7] sm:$0xff] %vm1788, 0.0
        %1886 = vst.msk [vmem:[#allocation7 + $0x8] sm:$0xff] %vm1788, 0.0
        %1887 = vst.msk [vmem:[#allocation7 + $0x10] sm:$0xff] %vm1788, 0.0
        %1888 = vst.msk [vmem:[#allocation7 + $0x18] sm:$0xff] %vm1788, 0.0
        %1889 = vst.msk [vmem:[#allocation7 + $0x20] sm:$0xff] %vm1788, 0.0
        %1890 = vst.msk [vmem:[#allocation7 + $0x28] sm:$0xff] %vm1788, 0.0
        %1891 = vst.msk [vmem:[#allocation7 + $0x30] sm:$0xff] %vm1788, 0.0
        %1892 = vst.msk [vmem:[#allocation7 + $0x38] sm:$0xff] %vm1788, 0.0
        %1893 = vst.msk [vmem:[#allocation7 + $0x40] sm:$0xff] %vm1788, 0.0
        %1894 = vst.msk [vmem:[#allocation7 + $0x48] sm:$0xff] %vm1788, 0.0
        %1895 = vst.msk [vmem:[#allocation7 + $0x50] sm:$0xff] %vm1788, 0.0
        %1896 = vst.msk [vmem:[#allocation7 + $0x58] sm:$0xff] %vm1788, 0.0
        %1897 = vst.msk [vmem:[#allocation7 + $0x60] sm:$0xff] %vm1788, 0.0
        %1898 = vst.msk [vmem:[#allocation7 + $0x68] sm:$0xff] %vm1788, 0.0
        %1899 = vst.msk [vmem:[#allocation7 + $0x70] sm:$0xff] %vm1788, 0.0
        %1900 = vst.msk [vmem:[#allocation7 + $0x78] sm:$0xff] %vm1788, 0.0
        %1901 = vst.msk [vmem:[#allocation7 + $0x80] sm:$0xff] %vm1788, 0.0
        %1902 = vst.msk [vmem:[#allocation7 + $0x88] sm:$0xff] %vm1788, 0.0
        %1903 = vst.msk [vmem:[#allocation7 + $0x90] sm:$0xff] %vm1788, 0.0
        %1904 = vst.msk [vmem:[#allocation7 + $0x98] sm:$0xff] %vm1788, 0.0
        %1905 = vst.msk [vmem:[#allocation7 + $0xa0] sm:$0xff] %vm1788, 0.0
        %1906 = vst.msk [vmem:[#allocation7 + $0xa8] sm:$0xff] %vm1788, 0.0
        %1907 = vst.msk [vmem:[#allocation7 + $0xb0] sm:$0xff] %vm1788, 0.0
        %1908 = vst.msk [vmem:[#allocation7 + $0xb8] sm:$0xff] %vm1788, 0.0
        %1909 = vst.msk [vmem:[#allocation7 + $0xc0] sm:$0xff] %vm1788, 0.0
        %1910 = vst.msk [vmem:[#allocation7 + $0xc8] sm:$0xff] %vm1788, 0.0
        %1911 = vst.msk [vmem:[#allocation7 + $0xd0] sm:$0xff] %vm1788, 0.0
        %1912 = vst.msk [vmem:[#allocation7 + $0xd8] sm:$0xff] %vm1788, 0.0
        %1913 = vst.msk [vmem:[#allocation7 + $0xe0] sm:$0xff] %vm1788, 0.0
        %1914 = vst.msk [vmem:[#allocation7 + $0xe8] sm:$0xff] %vm1788, 0.0
        %1915 = vst.msk [vmem:[#allocation7 + $0xf0] sm:$0xff] %vm1788, 0.0
        %1916 = vst.msk [vmem:[#allocation7 + $0xf8] sm:$0xff] %vm1788, 0.0
      $region33: #{forward.1} parent=28 // pred_fallthru
        _
      %v1917 = vsub.f32 %v1496, %v1432
      %v1918 = vsub.f32 %v1497, %v1433
      %v1919 = vsub.f32 %v1498, %v1434
      %v1920 = vsub.f32 %v1499, %v1435
      %v1921 = vsub.f32 %v1500, %v1436
      %v1922 = vsub.f32 %v1501, %v1437
      %v1923 = vsub.f32 %v1502, %v1438
      %v1924 = vsub.f32 %v1503, %v1439
      %v1925 = vsub.f32 %v1504, %v1440
      %v1926 = vsub.f32 %v1505, %v1441
      %v1927 = vsub.f32 %v1506, %v1442
      %v1928 = vsub.f32 %v1507, %v1443
      %v1929 = vsub.f32 %v1508, %v1444
      %v1930 = vsub.f32 %v1509, %v1445
      %v1931 = vsub.f32 %v1510, %v1446
      %v1932 = vsub.f32 %v1511, %v1447
      %v1933 = vsub.f32 %v1512, %v1448
      %v1934 = vsub.f32 %v1513, %v1449
      %v1935 = vsub.f32 %v1514, %v1450
      %v1936 = vsub.f32 %v1515, %v1451
      %v1937 = vsub.f32 %v1516, %v1452
      %v1938 = vsub.f32 %v1517, %v1453
      %v1939 = vsub.f32 %v1518, %v1454
      %v1940 = vsub.f32 %v1519, %v1455
      %v1941 = vsub.f32 %v1520, %v1456
      %v1942 = vsub.f32 %v1521, %v1457
      %v1943 = vsub.f32 %v1522, %v1458
      %v1944 = vsub.f32 %v1523, %v1459
      %v1945 = vsub.f32 %v1524, %v1460
      %v1946 = vsub.f32 %v1525, %v1461
      %v1947 = vsub.f32 %v1526, %v1462
      %v1948 = vsub.f32 %v1527, %v1463
      %v1949 = vsub.f32 %v1528, %v1464
      %v1950 = vsub.f32 %v1529, %v1465
      %v1951 = vsub.f32 %v1530, %v1466
      %v1952 = vsub.f32 %v1531, %v1467
      %v1953 = vsub.f32 %v1532, %v1468
      %v1954 = vsub.f32 %v1533, %v1469
      %v1955 = vsub.f32 %v1534, %v1470
      %v1956 = vsub.f32 %v1535, %v1471
      %v1957 = vsub.f32 %v1536, %v1472
      %v1958 = vsub.f32 %v1537, %v1473
      %v1959 = vsub.f32 %v1538, %v1474
      %v1960 = vsub.f32 %v1539, %v1475
      %v1961 = vsub.f32 %v1540, %v1476
      %v1962 = vsub.f32 %v1541, %v1477
      %v1963 = vsub.f32 %v1542, %v1478
      %v1964 = vsub.f32 %v1543, %v1479
      %v1965 = vsub.f32 %v1544, %v1480
      %v1966 = vsub.f32 %v1545, %v1481
      %v1967 = vsub.f32 %v1546, %v1482
      %v1968 = vsub.f32 %v1547, %v1483
      %v1969 = vsub.f32 %v1548, %v1484
      %v1970 = vsub.f32 %v1549, %v1485
      %v1971 = vsub.f32 %v1550, %v1486
      %v1972 = vsub.f32 %v1551, %v1487
      %v1973 = vsub.f32 %v1552, %v1488
      %v1974 = vsub.f32 %v1553, %v1489
      %v1975 = vsub.f32 %v1554, %v1490
      %v1976 = vsub.f32 %v1555, %v1491
      %v1977 = vsub.f32 %v1556, %v1492
      %v1978 = vsub.f32 %v1557, %v1493
      %v1979 = vsub.f32 %v1558, %v1494
      %v1980 = vsub.f32 %v1559, %v1495
      %v1981 = vld [vmem:[#allocation4] sm:$0xff]
      %v1982 = vld [vmem:[#allocation4 + $0x8] sm:$0xff]
      %v1983 = vld [vmem:[#allocation4 + $0x10] sm:$0xff]
      %v1984 = vld [vmem:[#allocation4 + $0x18] sm:$0xff]
      %v1985 = vld [vmem:[#allocation4 + $0x20] sm:$0xff]
      %v1986 = vld [vmem:[#allocation4 + $0x28] sm:$0xff]
      %v1987 = vld [vmem:[#allocation4 + $0x30] sm:$0xff]
      %v1988 = vld [vmem:[#allocation4 + $0x38] sm:$0xff]
      %v1989 = vld [vmem:[#allocation4 + $0x40] sm:$0xff]
      %v1990 = vld [vmem:[#allocation4 + $0x48] sm:$0xff]
      %v1991 = vld [vmem:[#allocation4 + $0x50] sm:$0xff]
      %v1992 = vld [vmem:[#allocation4 + $0x58] sm:$0xff]
      %v1993 = vld [vmem:[#allocation4 + $0x60] sm:$0xff]
      %v1994 = vld [vmem:[#allocation4 + $0x68] sm:$0xff]
      %v1995 = vld [vmem:[#allocation4 + $0x70] sm:$0xff]
      %v1996 = vld [vmem:[#allocation4 + $0x78] sm:$0xff]
      %v1997 = vld [vmem:[#allocation4 + $0x80] sm:$0xff]
      %v1998 = vld [vmem:[#allocation4 + $0x88] sm:$0xff]
      %v1999 = vld [vmem:[#allocation4 + $0x90] sm:$0xff]
      %v2000 = vld [vmem:[#allocation4 + $0x98] sm:$0xff]
      %v2001 = vld [vmem:[#allocation4 + $0xa0] sm:$0xff]
      %v2002 = vld [vmem:[#allocation4 + $0xa8] sm:$0xff]
      %v2003 = vld [vmem:[#allocation4 + $0xb0] sm:$0xff]
      %v2004 = vld [vmem:[#allocation4 + $0xb8] sm:$0xff]
      %v2005 = vld [vmem:[#allocation4 + $0xc0] sm:$0xff]
      %v2006 = vld [vmem:[#allocation4 + $0xc8] sm:$0xff]
      %v2007 = vld [vmem:[#allocation4 + $0xd0] sm:$0xff]
      %v2008 = vld [vmem:[#allocation4 + $0xd8] sm:$0xff]
      %v2009 = vld [vmem:[#allocation4 + $0xe0] sm:$0xff]
      %v2010 = vld [vmem:[#allocation4 + $0xe8] sm:$0xff]
      %v2011 = vld [vmem:[#allocation4 + $0xf0] sm:$0xff]
      %v2012 = vld [vmem:[#allocation4 + $0xf8] sm:$0xff]
      %v2013 = vand.u32 2147483647, %v1917
      %v2014 = vand.u32 2147483647, %v1918
      %v2015 = vand.u32 2147483647, %v1919
      %v2016 = vand.u32 2147483647, %v1920
      %v2017 = vand.u32 2147483647, %v1921
      %v2018 = vand.u32 2147483647, %v1922
      %v2019 = vand.u32 2147483647, %v1923
      %v2020 = vand.u32 2147483647, %v1924
      %v2021 = vand.u32 2147483647, %v1925
      %v2022 = vand.u32 2147483647, %v1926
      %v2023 = vand.u32 2147483647, %v1927
      %v2024 = vand.u32 2147483647, %v1928
      %v2025 = vand.u32 2147483647, %v1929
      %v2026 = vand.u32 2147483647, %v1930
      %v2027 = vand.u32 2147483647, %v1931
      %v2028 = vand.u32 2147483647, %v1932
      %v2029 = vand.u32 2147483647, %v1933
      %v2030 = vand.u32 2147483647, %v1934
      %v2031 = vand.u32 2147483647, %v1935
      %v2032 = vand.u32 2147483647, %v1936
      %v2033 = vand.u32 2147483647, %v1937
      %v2034 = vand.u32 2147483647, %v1938
      %v2035 = vand.u32 2147483647, %v1939
      %v2036 = vand.u32 2147483647, %v1940
      %v2037 = vand.u32 2147483647, %v1941
      %v2038 = vand.u32 2147483647, %v1942
      %v2039 = vand.u32 2147483647, %v1943
      %v2040 = vand.u32 2147483647, %v1944
      %v2041 = vand.u32 2147483647, %v1945
      %v2042 = vand.u32 2147483647, %v1946
      %v2043 = vand.u32 2147483647, %v1947
      %v2044 = vand.u32 2147483647, %v1948
      %v2045 = vand.u32 2147483647, %v1949
      %v2046 = vand.u32 2147483647, %v1950
      %v2047 = vand.u32 2147483647, %v1951
      %v2048 = vand.u32 2147483647, %v1952
      %v2049 = vand.u32 2147483647, %v1953
      %v2050 = vand.u32 2147483647, %v1954
      %v2051 = vand.u32 2147483647, %v1955
      %v2052 = vand.u32 2147483647, %v1956
      %v2053 = vand.u32 2147483647, %v1957
      %v2054 = vand.u32 2147483647, %v1958
      %v2055 = vand.u32 2147483647, %v1959
      %v2056 = vand.u32 2147483647, %v1960
      %v2057 = vand.u32 2147483647, %v1961
      %v2058 = vand.u32 2147483647, %v1962
      %v2059 = vand.u32 2147483647, %v1963
      %v2060 = vand.u32 2147483647, %v1964
      %v2061 = vand.u32 2147483647, %v1965
      %v2062 = vand.u32 2147483647, %v1966
      %v2063 = vand.u32 2147483647, %v1967
      %v2064 = vand.u32 2147483647, %v1968
      %v2065 = vand.u32 2147483647, %v1969
      %v2066 = vand.u32 2147483647, %v1970
      %v2067 = vand.u32 2147483647, %v1971
      %v2068 = vand.u32 2147483647, %v1972
      %v2069 = vand.u32 2147483647, %v1973
      %v2070 = vand.u32 2147483647, %v1974
      %v2071 = vand.u32 2147483647, %v1975
      %v2072 = vand.u32 2147483647, %v1976
      %v2073 = vand.u32 2147483647, %v1977
      %v2074 = vand.u32 2147483647, %v1978
      %v2075 = vand.u32 2147483647, %v1979
      %v2076 = vand.u32 2147483647, %v1980
      %v2077 = vadd.f32 %v2013, %v2014
      %2078 = vadd.xlane.f32.xlu0 %v2077
      %v2079 = vpop.xlane.xlu0 %2078
      %v2080 = vadd.f32 %v2015, %v2016
      %2081 = vadd.xlane.f32.xlu0 %v2080
      %v2082 = vpop.xlane.xlu0 %2081
      %v2083 = vadd.f32 %v2017, %v2018
      %2084 = vadd.xlane.f32.xlu0 %v2083
      %v2085 = vpop.xlane.xlu0 %2084
      %v2086 = vadd.f32 %v2019, %v2020
      %2087 = vadd.xlane.f32.xlu0 %v2086
      %v2088 = vpop.xlane.xlu0 %2087
      %v2089 = vadd.f32 %v2021, %v2022
      %2090 = vadd.xlane.f32.xlu0 %v2089
      %v2091 = vpop.xlane.xlu0 %2090
      %v2092 = vadd.f32 %v2023, %v2024
      %2093 = vadd.xlane.f32.xlu0 %v2092
      %v2094 = vpop.xlane.xlu0 %2093
      %v2095 = vadd.f32 %v2025, %v2026
      %2096 = vadd.xlane.f32.xlu0 %v2095
      %v2097 = vpop.xlane.xlu0 %2096
      %v2098 = vadd.f32 %v2027, %v2028
      %2099 = vadd.xlane.f32.xlu0 %v2098
      %v2100 = vpop.xlane.xlu0 %2099
      %v2101 = vadd.f32 %v2029, %v2030
      %2102 = vadd.xlane.f32.xlu0 %v2101
      %v2103 = vpop.xlane.xlu0 %2102
      %v2104 = vadd.f32 %v2031, %v2032
      %2105 = vadd.xlane.f32.xlu0 %v2104
      %v2106 = vpop.xlane.xlu0 %2105
      %v2107 = vadd.f32 %v2033, %v2034
      %2108 = vadd.xlane.f32.xlu0 %v2107
      %v2109 = vpop.xlane.xlu0 %2108
      %v2110 = vadd.f32 %v2035, %v2036
      %2111 = vadd.xlane.f32.xlu0 %v2110
      %v2112 = vpop.xlane.xlu0 %2111
      %v2113 = vadd.f32 %v2037, %v2038
      %2114 = vadd.xlane.f32.xlu0 %v2113
      %v2115 = vpop.xlane.xlu0 %2114
      %v2116 = vadd.f32 %v2039, %v2040
      %2117 = vadd.xlane.f32.xlu0 %v2116
      %v2118 = vpop.xlane.xlu0 %2117
      %v2119 = vadd.f32 %v2041, %v2042
      %2120 = vadd.xlane.f32.xlu0 %v2119
      %v2121 = vpop.xlane.xlu0 %2120
      %v2122 = vadd.f32 %v2043, %v2044
      %2123 = vadd.xlane.f32.xlu0 %v2122
      %v2124 = vpop.xlane.xlu0 %2123
      %v2125 = vadd.f32 %v2045, %v2046
      %2126 = vadd.xlane.f32.xlu0 %v2125
      %v2127 = vpop.xlane.xlu0 %2126
      %v2128 = vadd.f32 %v2047, %v2048
      %2129 = vadd.xlane.f32.xlu0 %v2128
      %v2130 = vpop.xlane.xlu0 %2129
      %v2131 = vadd.f32 %v2049, %v2050
      %2132 = vadd.xlane.f32.xlu0 %v2131
      %v2133 = vpop.xlane.xlu0 %2132
      %v2134 = vadd.f32 %v2051, %v2052
      %2135 = vadd.xlane.f32.xlu0 %v2134
      %v2136 = vpop.xlane.xlu0 %2135
      %v2137 = vadd.f32 %v2053, %v2054
      %2138 = vadd.xlane.f32.xlu0 %v2137
      %v2139 = vpop.xlane.xlu0 %2138
      %v2140 = vadd.f32 %v2055, %v2056
      %2141 = vadd.xlane.f32.xlu0 %v2140
      %v2142 = vpop.xlane.xlu0 %2141
      %v2143 = vadd.f32 %v2057, %v2058
      %2144 = vadd.xlane.f32.xlu0 %v2143
      %v2145 = vpop.xlane.xlu0 %2144
      %v2146 = vadd.f32 %v2059, %v2060
      %2147 = vadd.xlane.f32.xlu0 %v2146
      %v2148 = vpop.xlane.xlu0 %2147
      %v2149 = vadd.f32 %v2061, %v2062
      %2150 = vadd.xlane.f32.xlu0 %v2149
      %v2151 = vpop.xlane.xlu0 %2150
      %v2152 = vadd.f32 %v2063, %v2064
      %2153 = vadd.xlane.f32.xlu0 %v2152
      %v2154 = vpop.xlane.xlu0 %2153
      %v2155 = vadd.f32 %v2065, %v2066
      %2156 = vadd.xlane.f32.xlu0 %v2155
      %v2157 = vpop.xlane.xlu0 %2156
      %v2158 = vadd.f32 %v2067, %v2068
      %2159 = vadd.xlane.f32.xlu0 %v2158
      %v2160 = vpop.xlane.xlu0 %2159
      %v2161 = vadd.f32 %v2069, %v2070
      %2162 = vadd.xlane.f32.xlu0 %v2161
      %v2163 = vpop.xlane.xlu0 %2162
      %v2164 = vadd.f32 %v2071, %v2072
      %2165 = vadd.xlane.f32.xlu0 %v2164
      %v2166 = vpop.xlane.xlu0 %2165
      %v2167 = vadd.f32 %v2073, %v2074
      %2168 = vadd.xlane.f32.xlu0 %v2167
      %v2169 = vpop.xlane.xlu0 %2168
      %v2170 = vadd.f32 %v2075, %v2076
      %2171 = vadd.xlane.f32.xlu0 %v2170
      %v2172 = vpop.xlane.xlu0 %2171
      %v2173 = vadd.f32 %v1981, %v2079
      %v2174 = vadd.f32 %v1982, %v2082
      %v2175 = vadd.f32 %v1983, %v2085
      %v2176 = vadd.f32 %v1984, %v2088
      %v2177 = vadd.f32 %v1985, %v2091
      %v2178 = vadd.f32 %v1986, %v2094
      %v2179 = vadd.f32 %v1987, %v2097
      %v2180 = vadd.f32 %v1988, %v2100
      %v2181 = vadd.f32 %v1989, %v2103
      %v2182 = vadd.f32 %v1990, %v2106
      %v2183 = vadd.f32 %v1991, %v2109
      %v2184 = vadd.f32 %v1992, %v2112
      %v2185 = vadd.f32 %v1993, %v2115
      %v2186 = vadd.f32 %v1994, %v2118
      %v2187 = vadd.f32 %v1995, %v2121
      %v2188 = vadd.f32 %v1996, %v2124
      %v2189 = vadd.f32 %v1997, %v2127
      %v2190 = vadd.f32 %v1998, %v2130
      %v2191 = vadd.f32 %v1999, %v2133
      %v2192 = vadd.f32 %v2000, %v2136
      %v2193 = vadd.f32 %v2001, %v2139
      %v2194 = vadd.f32 %v2002, %v2142
      %v2195 = vadd.f32 %v2003, %v2145
      %v2196 = vadd.f32 %v2004, %v2148
      %v2197 = vadd.f32 %v2005, %v2151
      %v2198 = vadd.f32 %v2006, %v2154
      %v2199 = vadd.f32 %v2007, %v2157
      %v2200 = vadd.f32 %v2008, %v2160
      %v2201 = vadd.f32 %v2009, %v2163
      %v2202 = vadd.f32 %v2010, %v2166
      %v2203 = vadd.f32 %v2011, %v2169
      %v2204 = vadd.f32 %v2012, %v2172
      %vm2205 = vcmask 7168
      %2206 = vst.msk [vmem:[#allocation4] sm:$0xff] %vm2205, %v2173
      %2207 = vst.msk [vmem:[#allocation4 + $0x8] sm:$0xff] %vm2205, %v2174
      %2208 = vst.msk [vmem:[#allocation4 + $0x10] sm:$0xff] %vm2205, %v2175
      %2209 = vst.msk [vmem:[#allocation4 + $0x18] sm:$0xff] %vm2205, %v2176
      %2210 = vst.msk [vmem:[#allocation4 + $0x20] sm:$0xff] %vm2205, %v2177
      %2211 = vst.msk [vmem:[#allocation4 + $0x28] sm:$0xff] %vm2205, %v2178
      %2212 = vst.msk [vmem:[#allocation4 + $0x30] sm:$0xff] %vm2205, %v2179
      %2213 = vst.msk [vmem:[#allocation4 + $0x38] sm:$0xff] %vm2205, %v2180
      %2214 = vst.msk [vmem:[#allocation4 + $0x40] sm:$0xff] %vm2205, %v2181
      %2215 = vst.msk [vmem:[#allocation4 + $0x48] sm:$0xff] %vm2205, %v2182
      %2216 = vst.msk [vmem:[#allocation4 + $0x50] sm:$0xff] %vm2205, %v2183
      %2217 = vst.msk [vmem:[#allocation4 + $0x58] sm:$0xff] %vm2205, %v2184
      %2218 = vst.msk [vmem:[#allocation4 + $0x60] sm:$0xff] %vm2205, %v2185
      %2219 = vst.msk [vmem:[#allocation4 + $0x68] sm:$0xff] %vm2205, %v2186
      %2220 = vst.msk [vmem:[#allocation4 + $0x70] sm:$0xff] %vm2205, %v2187
      %2221 = vst.msk [vmem:[#allocation4 + $0x78] sm:$0xff] %vm2205, %v2188
      %2222 = vst.msk [vmem:[#allocation4 + $0x80] sm:$0xff] %vm2205, %v2189
      %2223 = vst.msk [vmem:[#allocation4 + $0x88] sm:$0xff] %vm2205, %v2190
      %2224 = vst.msk [vmem:[#allocation4 + $0x90] sm:$0xff] %vm2205, %v2191
      %2225 = vst.msk [vmem:[#allocation4 + $0x98] sm:$0xff] %vm2205, %v2192
      %2226 = vst.msk [vmem:[#allocation4 + $0xa0] sm:$0xff] %vm2205, %v2193
      %2227 = vst.msk [vmem:[#allocation4 + $0xa8] sm:$0xff] %vm2205, %v2194
      %2228 = vst.msk [vmem:[#allocation4 + $0xb0] sm:$0xff] %vm2205, %v2195
      %2229 = vst.msk [vmem:[#allocation4 + $0xb8] sm:$0xff] %vm2205, %v2196
      %2230 = vst.msk [vmem:[#allocation4 + $0xc0] sm:$0xff] %vm2205, %v2197
      %2231 = vst.msk [vmem:[#allocation4 + $0xc8] sm:$0xff] %vm2205, %v2198
      %2232 = vst.msk [vmem:[#allocation4 + $0xd0] sm:$0xff] %vm2205, %v2199
      %2233 = vst.msk [vmem:[#allocation4 + $0xd8] sm:$0xff] %vm2205, %v2200
      %2234 = vst.msk [vmem:[#allocation4 + $0xe0] sm:$0xff] %vm2205, %v2201
      %2235 = vst.msk [vmem:[#allocation4 + $0xe8] sm:$0xff] %vm2205, %v2202
      %2236 = vst.msk [vmem:[#allocation4 + $0xf0] sm:$0xff] %vm2205, %v2203
      %2237 = vst.msk [vmem:[#allocation4 + $0xf8] sm:$0xff] %vm2205, %v2204
      %v2238 = vld [vmem:[#allocation5] sm:$0xff]
      %v2239 = vld [vmem:[#allocation5 + $0x8] sm:$0xff]
      %v2240 = vld [vmem:[#allocation5 + $0x10] sm:$0xff]
      %v2241 = vld [vmem:[#allocation5 + $0x18] sm:$0xff]
      %v2242 = vld [vmem:[#allocation5 + $0x20] sm:$0xff]
      %v2243 = vld [vmem:[#allocation5 + $0x28] sm:$0xff]
      %v2244 = vld [vmem:[#allocation5 + $0x30] sm:$0xff]
      %v2245 = vld [vmem:[#allocation5 + $0x38] sm:$0xff]
      %v2246 = vld [vmem:[#allocation5 + $0x40] sm:$0xff]
      %v2247 = vld [vmem:[#allocation5 + $0x48] sm:$0xff]
      %v2248 = vld [vmem:[#allocation5 + $0x50] sm:$0xff]
      %v2249 = vld [vmem:[#allocation5 + $0x58] sm:$0xff]
      %v2250 = vld [vmem:[#allocation5 + $0x60] sm:$0xff]
      %v2251 = vld [vmem:[#allocation5 + $0x68] sm:$0xff]
      %v2252 = vld [vmem:[#allocation5 + $0x70] sm:$0xff]
      %v2253 = vld [vmem:[#allocation5 + $0x78] sm:$0xff]
      %v2254 = vld [vmem:[#allocation5 + $0x80] sm:$0xff]
      %v2255 = vld [vmem:[#allocation5 + $0x88] sm:$0xff]
      %v2256 = vld [vmem:[#allocation5 + $0x90] sm:$0xff]
      %v2257 = vld [vmem:[#allocation5 + $0x98] sm:$0xff]
      %v2258 = vld [vmem:[#allocation5 + $0xa0] sm:$0xff]
      %v2259 = vld [vmem:[#allocation5 + $0xa8] sm:$0xff]
      %v2260 = vld [vmem:[#allocation5 + $0xb0] sm:$0xff]
      %v2261 = vld [vmem:[#allocation5 + $0xb8] sm:$0xff]
      %v2262 = vld [vmem:[#allocation5 + $0xc0] sm:$0xff]
      %v2263 = vld [vmem:[#allocation5 + $0xc8] sm:$0xff]
      %v2264 = vld [vmem:[#allocation5 + $0xd0] sm:$0xff]
      %v2265 = vld [vmem:[#allocation5 + $0xd8] sm:$0xff]
      %v2266 = vld [vmem:[#allocation5 + $0xe0] sm:$0xff]
      %v2267 = vld [vmem:[#allocation5 + $0xe8] sm:$0xff]
      %v2268 = vld [vmem:[#allocation5 + $0xf0] sm:$0xff]
      %v2269 = vld [vmem:[#allocation5 + $0xf8] sm:$0xff]
      %v2270 = vmul.f32 %v1496, %v1432
      %v2271 = vmul.f32 %v1497, %v1433
      %v2272 = vmul.f32 %v1498, %v1434
      %v2273 = vmul.f32 %v1499, %v1435
      %v2274 = vmul.f32 %v1500, %v1436
      %v2275 = vmul.f32 %v1501, %v1437
      %v2276 = vmul.f32 %v1502, %v1438
      %v2277 = vmul.f32 %v1503, %v1439
      %v2278 = vmul.f32 %v1504, %v1440
      %v2279 = vmul.f32 %v1505, %v1441
      %v2280 = vmul.f32 %v1506, %v1442
      %v2281 = vmul.f32 %v1507, %v1443
      %v2282 = vmul.f32 %v1508, %v1444
      %v2283 = vmul.f32 %v1509, %v1445
      %v2284 = vmul.f32 %v1510, %v1446
      %v2285 = vmul.f32 %v1511, %v1447
      %v2286 = vmul.f32 %v1512, %v1448
      %v2287 = vmul.f32 %v1513, %v1449
      %v2288 = vmul.f32 %v1514, %v1450
      %v2289 = vmul.f32 %v1515, %v1451
      %v2290 = vmul.f32 %v1516, %v1452
      %v2291 = vmul.f32 %v1517, %v1453
      %v2292 = vmul.f32 %v1518, %v1454
      %v2293 = vmul.f32 %v1519, %v1455
      %v2294 = vmul.f32 %v1520, %v1456
      %v2295 = vmul.f32 %v1521, %v1457
      %v2296 = vmul.f32 %v1522, %v1458
      %v2297 = vmul.f32 %v1523, %v1459
      %v2298 = vmul.f32 %v1524, %v1460
      %v2299 = vmul.f32 %v1525, %v1461
      %v2300 = vmul.f32 %v1526, %v1462
      %v2301 = vmul.f32 %v1527, %v1463
      %v2302 = vmul.f32 %v1528, %v1464
      %v2303 = vmul.f32 %v1529, %v1465
      %v2304 = vmul.f32 %v1530, %v1466
      %v2305 = vmul.f32 %v1531, %v1467
      %v2306 = vmul.f32 %v1532, %v1468
      %v2307 = vmul.f32 %v1533, %v1469
      %v2308 = vmul.f32 %v1534, %v1470
      %v2309 = vmul.f32 %v1535, %v1471
      %v2310 = vmul.f32 %v1536, %v1472
      %v2311 = vmul.f32 %v1537, %v1473
      %v2312 = vmul.f32 %v1538, %v1474
      %v2313 = vmul.f32 %v1539, %v1475
      %v2314 = vmul.f32 %v1540, %v1476
      %v2315 = vmul.f32 %v1541, %v1477
      %v2316 = vmul.f32 %v1542, %v1478
      %v2317 = vmul.f32 %v1543, %v1479
      %v2318 = vmul.f32 %v1544, %v1480
      %v2319 = vmul.f32 %v1545, %v1481
      %v2320 = vmul.f32 %v1546, %v1482
      %v2321 = vmul.f32 %v1547, %v1483
      %v2322 = vmul.f32 %v1548, %v1484
      %v2323 = vmul.f32 %v1549, %v1485
      %v2324 = vmul.f32 %v1550, %v1486
      %v2325 = vmul.f32 %v1551, %v1487
      %v2326 = vmul.f32 %v1552, %v1488
      %v2327 = vmul.f32 %v1553, %v1489
      %v2328 = vmul.f32 %v1554, %v1490
      %v2329 = vmul.f32 %v1555, %v1491
      %v2330 = vmul.f32 %v1556, %v1492
      %v2331 = vmul.f32 %v1557, %v1493
      %v2332 = vmul.f32 %v1558, %v1494
      %v2333 = vmul.f32 %v1559, %v1495
      %v2334 = vadd.f32 %v2270, %v2271
      %2335 = vadd.xlane.f32.xlu0 %v2334
      %v2336 = vpop.xlane.xlu0 %2335
      %v2337 = vadd.f32 %v2272, %v2273
      %2338 = vadd.xlane.f32.xlu0 %v2337
      %v2339 = vpop.xlane.xlu0 %2338
      %v2340 = vadd.f32 %v2274, %v2275
      %2341 = vadd.xlane.f32.xlu0 %v2340
      %v2342 = vpop.xlane.xlu0 %2341
      %v2343 = vadd.f32 %v2276, %v2277
      %2344 = vadd.xlane.f32.xlu0 %v2343
      %v2345 = vpop.xlane.xlu0 %2344
      %v2346 = vadd.f32 %v2278, %v2279
      %2347 = vadd.xlane.f32.xlu0 %v2346
      %v2348 = vpop.xlane.xlu0 %2347
      %v2349 = vadd.f32 %v2280, %v2281
      %2350 = vadd.xlane.f32.xlu0 %v2349
      %v2351 = vpop.xlane.xlu0 %2350
      %v2352 = vadd.f32 %v2282, %v2283
      %2353 = vadd.xlane.f32.xlu0 %v2352
      %v2354 = vpop.xlane.xlu0 %2353
      %v2355 = vadd.f32 %v2284, %v2285
      %2356 = vadd.xlane.f32.xlu0 %v2355
      %v2357 = vpop.xlane.xlu0 %2356
      %v2358 = vadd.f32 %v2286, %v2287
      %2359 = vadd.xlane.f32.xlu0 %v2358
      %v2360 = vpop.xlane.xlu0 %2359
      %v2361 = vadd.f32 %v2288, %v2289
      %2362 = vadd.xlane.f32.xlu0 %v2361
      %v2363 = vpop.xlane.xlu0 %2362
      %v2364 = vadd.f32 %v2290, %v2291
      %2365 = vadd.xlane.f32.xlu0 %v2364
      %v2366 = vpop.xlane.xlu0 %2365
      %v2367 = vadd.f32 %v2292, %v2293
      %2368 = vadd.xlane.f32.xlu0 %v2367
      %v2369 = vpop.xlane.xlu0 %2368
      %v2370 = vadd.f32 %v2294, %v2295
      %2371 = vadd.xlane.f32.xlu0 %v2370
      %v2372 = vpop.xlane.xlu0 %2371
      %v2373 = vadd.f32 %v2296, %v2297
      %2374 = vadd.xlane.f32.xlu0 %v2373
      %v2375 = vpop.xlane.xlu0 %2374
      %v2376 = vadd.f32 %v2298, %v2299
      %2377 = vadd.xlane.f32.xlu0 %v2376
      %v2378 = vpop.xlane.xlu0 %2377
      %v2379 = vadd.f32 %v2300, %v2301
      %2380 = vadd.xlane.f32.xlu0 %v2379
      %v2381 = vpop.xlane.xlu0 %2380
      %v2382 = vadd.f32 %v2302, %v2303
      %2383 = vadd.xlane.f32.xlu0 %v2382
      %v2384 = vpop.xlane.xlu0 %2383
      %v2385 = vadd.f32 %v2304, %v2305
      %2386 = vadd.xlane.f32.xlu0 %v2385
      %v2387 = vpop.xlane.xlu0 %2386
      %v2388 = vadd.f32 %v2306, %v2307
      %2389 = vadd.xlane.f32.xlu0 %v2388
      %v2390 = vpop.xlane.xlu0 %2389
      %v2391 = vadd.f32 %v2308, %v2309
      %2392 = vadd.xlane.f32.xlu0 %v2391
      %v2393 = vpop.xlane.xlu0 %2392
      %v2394 = vadd.f32 %v2310, %v2311
      %2395 = vadd.xlane.f32.xlu0 %v2394
      %v2396 = vpop.xlane.xlu0 %2395
      %v2397 = vadd.f32 %v2312, %v2313
      %2398 = vadd.xlane.f32.xlu0 %v2397
      %v2399 = vpop.xlane.xlu0 %2398
      %v2400 = vadd.f32 %v2314, %v2315
      %2401 = vadd.xlane.f32.xlu0 %v2400
      %v2402 = vpop.xlane.xlu0 %2401
      %v2403 = vadd.f32 %v2316, %v2317
      %2404 = vadd.xlane.f32.xlu0 %v2403
      %v2405 = vpop.xlane.xlu0 %2404
      %v2406 = vadd.f32 %v2318, %v2319
      %2407 = vadd.xlane.f32.xlu0 %v2406
      %v2408 = vpop.xlane.xlu0 %2407
      %v2409 = vadd.f32 %v2320, %v2321
      %2410 = vadd.xlane.f32.xlu0 %v2409
      %v2411 = vpop.xlane.xlu0 %2410
      %v2412 = vadd.f32 %v2322, %v2323
      %2413 = vadd.xlane.f32.xlu0 %v2412
      %v2414 = vpop.xlane.xlu0 %2413
      %v2415 = vadd.f32 %v2324, %v2325
      %2416 = vadd.xlane.f32.xlu0 %v2415
      %v2417 = vpop.xlane.xlu0 %2416
      %v2418 = vadd.f32 %v2326, %v2327
      %2419 = vadd.xlane.f32.xlu0 %v2418
      %v2420 = vpop.xlane.xlu0 %2419
      %v2421 = vadd.f32 %v2328, %v2329
      %2422 = vadd.xlane.f32.xlu0 %v2421
      %v2423 = vpop.xlane.xlu0 %2422
      %v2424 = vadd.f32 %v2330, %v2331
      %2425 = vadd.xlane.f32.xlu0 %v2424
      %v2426 = vpop.xlane.xlu0 %2425
      %v2427 = vadd.f32 %v2332, %v2333
      %2428 = vadd.xlane.f32.xlu0 %v2427
      %v2429 = vpop.xlane.xlu0 %2428
      %v2430 = vadd.f32 %v2238, %v2336
      %v2431 = vadd.f32 %v2239, %v2339
      %v2432 = vadd.f32 %v2240, %v2342
      %v2433 = vadd.f32 %v2241, %v2345
      %v2434 = vadd.f32 %v2242, %v2348
      %v2435 = vadd.f32 %v2243, %v2351
      %v2436 = vadd.f32 %v2244, %v2354
      %v2437 = vadd.f32 %v2245, %v2357
      %v2438 = vadd.f32 %v2246, %v2360
      %v2439 = vadd.f32 %v2247, %v2363
      %v2440 = vadd.f32 %v2248, %v2366
      %v2441 = vadd.f32 %v2249, %v2369
      %v2442 = vadd.f32 %v2250, %v2372
      %v2443 = vadd.f32 %v2251, %v2375
      %v2444 = vadd.f32 %v2252, %v2378
      %v2445 = vadd.f32 %v2253, %v2381
      %v2446 = vadd.f32 %v2254, %v2384
      %v2447 = vadd.f32 %v2255, %v2387
      %v2448 = vadd.f32 %v2256, %v2390
      %v2449 = vadd.f32 %v2257, %v2393
      %v2450 = vadd.f32 %v2258, %v2396
      %v2451 = vadd.f32 %v2259, %v2399
      %v2452 = vadd.f32 %v2260, %v2402
      %v2453 = vadd.f32 %v2261, %v2405
      %v2454 = vadd.f32 %v2262, %v2408
      %v2455 = vadd.f32 %v2263, %v2411
      %v2456 = vadd.f32 %v2264, %v2414
      %v2457 = vadd.f32 %v2265, %v2417
      %v2458 = vadd.f32 %v2266, %v2420
      %v2459 = vadd.f32 %v2267, %v2423
      %v2460 = vadd.f32 %v2268, %v2426
      %v2461 = vadd.f32 %v2269, %v2429
      %2462 = vst.msk [vmem:[#allocation5] sm:$0xff] %vm2205, %v2430
      %2463 = vst.msk [vmem:[#allocation5 + $0x8] sm:$0xff] %vm2205, %v2431
      %2464 = vst.msk [vmem:[#allocation5 + $0x10] sm:$0xff] %vm2205, %v2432
      %2465 = vst.msk [vmem:[#allocation5 + $0x18] sm:$0xff] %vm2205, %v2433
      %2466 = vst.msk [vmem:[#allocation5 + $0x20] sm:$0xff] %vm2205, %v2434
      %2467 = vst.msk [vmem:[#allocation5 + $0x28] sm:$0xff] %vm2205, %v2435
      %2468 = vst.msk [vmem:[#allocation5 + $0x30] sm:$0xff] %vm2205, %v2436
      %2469 = vst.msk [vmem:[#allocation5 + $0x38] sm:$0xff] %vm2205, %v2437
      %2470 = vst.msk [vmem:[#allocation5 + $0x40] sm:$0xff] %vm2205, %v2438
      %2471 = vst.msk [vmem:[#allocation5 + $0x48] sm:$0xff] %vm2205, %v2439
      %2472 = vst.msk [vmem:[#allocation5 + $0x50] sm:$0xff] %vm2205, %v2440
      %2473 = vst.msk [vmem:[#allocation5 + $0x58] sm:$0xff] %vm2205, %v2441
      %2474 = vst.msk [vmem:[#allocation5 + $0x60] sm:$0xff] %vm2205, %v2442
      %2475 = vst.msk [vmem:[#allocation5 + $0x68] sm:$0xff] %vm2205, %v2443
      %2476 = vst.msk [vmem:[#allocation5 + $0x70] sm:$0xff] %vm2205, %v2444
      %2477 = vst.msk [vmem:[#allocation5 + $0x78] sm:$0xff] %vm2205, %v2445
      %2478 = vst.msk [vmem:[#allocation5 + $0x80] sm:$0xff] %vm2205, %v2446
      %2479 = vst.msk [vmem:[#allocation5 + $0x88] sm:$0xff] %vm2205, %v2447
      %2480 = vst.msk [vmem:[#allocation5 + $0x90] sm:$0xff] %vm2205, %v2448
      %2481 = vst.msk [vmem:[#allocation5 + $0x98] sm:$0xff] %vm2205, %v2449
      %2482 = vst.msk [vmem:[#allocation5 + $0xa0] sm:$0xff] %vm2205, %v2450
      %2483 = vst.msk [vmem:[#allocation5 + $0xa8] sm:$0xff] %vm2205, %v2451
      %2484 = vst.msk [vmem:[#allocation5 + $0xb0] sm:$0xff] %vm2205, %v2452
      %2485 = vst.msk [vmem:[#allocation5 + $0xb8] sm:$0xff] %vm2205, %v2453
      %2486 = vst.msk [vmem:[#allocation5 + $0xc0] sm:$0xff] %vm2205, %v2454
      %2487 = vst.msk [vmem:[#allocation5 + $0xc8] sm:$0xff] %vm2205, %v2455
      %2488 = vst.msk [vmem:[#allocation5 + $0xd0] sm:$0xff] %vm2205, %v2456
      %2489 = vst.msk [vmem:[#allocation5 + $0xd8] sm:$0xff] %vm2205, %v2457
      %2490 = vst.msk [vmem:[#allocation5 + $0xe0] sm:$0xff] %vm2205, %v2458
      %2491 = vst.msk [vmem:[#allocation5 + $0xe8] sm:$0xff] %vm2205, %v2459
      %2492 = vst.msk [vmem:[#allocation5 + $0xf0] sm:$0xff] %vm2205, %v2460
      %2493 = vst.msk [vmem:[#allocation5 + $0xf8] sm:$0xff] %vm2205, %v2461
      %v2494 = vld [vmem:[#allocation6] sm:$0xff]
      %v2495 = vld [vmem:[#allocation6 + $0x8] sm:$0xff]
      %v2496 = vld [vmem:[#allocation6 + $0x10] sm:$0xff]
      %v2497 = vld [vmem:[#allocation6 + $0x18] sm:$0xff]
      %v2498 = vld [vmem:[#allocation6 + $0x20] sm:$0xff]
      %v2499 = vld [vmem:[#allocation6 + $0x28] sm:$0xff]
      %v2500 = vld [vmem:[#allocation6 + $0x30] sm:$0xff]
      %v2501 = vld [vmem:[#allocation6 + $0x38] sm:$0xff]
      %v2502 = vld [vmem:[#allocation6 + $0x40] sm:$0xff]
      %v2503 = vld [vmem:[#allocation6 + $0x48] sm:$0xff]
      %v2504 = vld [vmem:[#allocation6 + $0x50] sm:$0xff]
      %v2505 = vld [vmem:[#allocation6 + $0x58] sm:$0xff]
      %v2506 = vld [vmem:[#allocation6 + $0x60] sm:$0xff]
      %v2507 = vld [vmem:[#allocation6 + $0x68] sm:$0xff]
      %v2508 = vld [vmem:[#allocation6 + $0x70] sm:$0xff]
      %v2509 = vld [vmem:[#allocation6 + $0x78] sm:$0xff]
      %v2510 = vld [vmem:[#allocation6 + $0x80] sm:$0xff]
      %v2511 = vld [vmem:[#allocation6 + $0x88] sm:$0xff]
      %v2512 = vld [vmem:[#allocation6 + $0x90] sm:$0xff]
      %v2513 = vld [vmem:[#allocation6 + $0x98] sm:$0xff]
      %v2514 = vld [vmem:[#allocation6 + $0xa0] sm:$0xff]
      %v2515 = vld [vmem:[#allocation6 + $0xa8] sm:$0xff]
      %v2516 = vld [vmem:[#allocation6 + $0xb0] sm:$0xff]
      %v2517 = vld [vmem:[#allocation6 + $0xb8] sm:$0xff]
      %v2518 = vld [vmem:[#allocation6 + $0xc0] sm:$0xff]
      %v2519 = vld [vmem:[#allocation6 + $0xc8] sm:$0xff]
      %v2520 = vld [vmem:[#allocation6 + $0xd0] sm:$0xff]
      %v2521 = vld [vmem:[#allocation6 + $0xd8] sm:$0xff]
      %v2522 = vld [vmem:[#allocation6 + $0xe0] sm:$0xff]
      %v2523 = vld [vmem:[#allocation6 + $0xe8] sm:$0xff]
      %v2524 = vld [vmem:[#allocation6 + $0xf0] sm:$0xff]
      %v2525 = vld [vmem:[#allocation6 + $0xf8] sm:$0xff]
      %v2526 = vmul.f32 %v1496, %v1496
      %v2527 = vmul.f32 %v1497, %v1497
      %v2528 = vmul.f32 %v1498, %v1498
      %v2529 = vmul.f32 %v1499, %v1499
      %v2530 = vmul.f32 %v1500, %v1500
      %v2531 = vmul.f32 %v1501, %v1501
      %v2532 = vmul.f32 %v1502, %v1502
      %v2533 = vmul.f32 %v1503, %v1503
      %v2534 = vmul.f32 %v1504, %v1504
      %v2535 = vmul.f32 %v1505, %v1505
      %v2536 = vmul.f32 %v1506, %v1506
      %v2537 = vmul.f32 %v1507, %v1507
      %v2538 = vmul.f32 %v1508, %v1508
      %v2539 = vmul.f32 %v1509, %v1509
      %v2540 = vmul.f32 %v1510, %v1510
      %v2541 = vmul.f32 %v1511, %v1511
      %v2542 = vmul.f32 %v1512, %v1512
      %v2543 = vmul.f32 %v1513, %v1513
      %v2544 = vmul.f32 %v1514, %v1514
      %v2545 = vmul.f32 %v1515, %v1515
      %v2546 = vmul.f32 %v1516, %v1516
      %v2547 = vmul.f32 %v1517, %v1517
      %v2548 = vmul.f32 %v1518, %v1518
      %v2549 = vmul.f32 %v1519, %v1519
      %v2550 = vmul.f32 %v1520, %v1520
      %v2551 = vmul.f32 %v1521, %v1521
      %v2552 = vmul.f32 %v1522, %v1522
      %v2553 = vmul.f32 %v1523, %v1523
      %v2554 = vmul.f32 %v1524, %v1524
      %v2555 = vmul.f32 %v1525, %v1525
      %v2556 = vmul.f32 %v1526, %v1526
      %v2557 = vmul.f32 %v1527, %v1527
      %v2558 = vmul.f32 %v1528, %v1528
      %v2559 = vmul.f32 %v1529, %v1529
      %v2560 = vmul.f32 %v1530, %v1530
      %v2561 = vmul.f32 %v1531, %v1531
      %v2562 = vmul.f32 %v1532, %v1532
      %v2563 = vmul.f32 %v1533, %v1533
      %v2564 = vmul.f32 %v1534, %v1534
      %v2565 = vmul.f32 %v1535, %v1535
      %v2566 = vmul.f32 %v1536, %v1536
      %v2567 = vmul.f32 %v1537, %v1537
      %v2568 = vmul.f32 %v1538, %v1538
      %v2569 = vmul.f32 %v1539, %v1539
      %v2570 = vmul.f32 %v1540, %v1540
      %v2571 = vmul.f32 %v1541, %v1541
      %v2572 = vmul.f32 %v1542, %v1542
      %v2573 = vmul.f32 %v1543, %v1543
      %v2574 = vmul.f32 %v1544, %v1544
      %v2575 = vmul.f32 %v1545, %v1545
      %v2576 = vmul.f32 %v1546, %v1546
      %v2577 = vmul.f32 %v1547, %v1547
      %v2578 = vmul.f32 %v1548, %v1548
      %v2579 = vmul.f32 %v1549, %v1549
      %v2580 = vmul.f32 %v1550, %v1550
      %v2581 = vmul.f32 %v1551, %v1551
      %v2582 = vmul.f32 %v1552, %v1552
      %v2583 = vmul.f32 %v1553, %v1553
      %v2584 = vmul.f32 %v1554, %v1554
      %v2585 = vmul.f32 %v1555, %v1555
      %v2586 = vmul.f32 %v1556, %v1556
      %v2587 = vmul.f32 %v1557, %v1557
      %v2588 = vmul.f32 %v1558, %v1558
      %v2589 = vmul.f32 %v1559, %v1559
      %v2590 = vadd.f32 %v2526, %v2527
      %2591 = vadd.xlane.f32.xlu0 %v2590
      %v2592 = vpop.xlane.xlu0 %2591
      %v2593 = vadd.f32 %v2528, %v2529
      %2594 = vadd.xlane.f32.xlu0 %v2593
      %v2595 = vpop.xlane.xlu0 %2594
      %v2596 = vadd.f32 %v2530, %v2531
      %2597 = vadd.xlane.f32.xlu0 %v2596
      %v2598 = vpop.xlane.xlu0 %2597
      %v2599 = vadd.f32 %v2532, %v2533
      %2600 = vadd.xlane.f32.xlu0 %v2599
      %v2601 = vpop.xlane.xlu0 %2600
      %v2602 = vadd.f32 %v2534, %v2535
      %2603 = vadd.xlane.f32.xlu0 %v2602
      %v2604 = vpop.xlane.xlu0 %2603
      %v2605 = vadd.f32 %v2536, %v2537
      %2606 = vadd.xlane.f32.xlu0 %v2605
      %v2607 = vpop.xlane.xlu0 %2606
      %v2608 = vadd.f32 %v2538, %v2539
      %2609 = vadd.xlane.f32.xlu0 %v2608
      %v2610 = vpop.xlane.xlu0 %2609
      %v2611 = vadd.f32 %v2540, %v2541
      %2612 = vadd.xlane.f32.xlu0 %v2611
      %v2613 = vpop.xlane.xlu0 %2612
      %v2614 = vadd.f32 %v2542, %v2543
      %2615 = vadd.xlane.f32.xlu0 %v2614
      %v2616 = vpop.xlane.xlu0 %2615
      %v2617 = vadd.f32 %v2544, %v2545
      %2618 = vadd.xlane.f32.xlu0 %v2617
      %v2619 = vpop.xlane.xlu0 %2618
      %v2620 = vadd.f32 %v2546, %v2547
      %2621 = vadd.xlane.f32.xlu0 %v2620
      %v2622 = vpop.xlane.xlu0 %2621
      %v2623 = vadd.f32 %v2548, %v2549
      %2624 = vadd.xlane.f32.xlu0 %v2623
      %v2625 = vpop.xlane.xlu0 %2624
      %v2626 = vadd.f32 %v2550, %v2551
      %2627 = vadd.xlane.f32.xlu0 %v2626
      %v2628 = vpop.xlane.xlu0 %2627
      %v2629 = vadd.f32 %v2552, %v2553
      %2630 = vadd.xlane.f32.xlu0 %v2629
      %v2631 = vpop.xlane.xlu0 %2630
      %v2632 = vadd.f32 %v2554, %v2555
      %2633 = vadd.xlane.f32.xlu0 %v2632
      %v2634 = vpop.xlane.xlu0 %2633
      %v2635 = vadd.f32 %v2556, %v2557
      %2636 = vadd.xlane.f32.xlu0 %v2635
      %v2637 = vpop.xlane.xlu0 %2636
      %v2638 = vadd.f32 %v2558, %v2559
      %2639 = vadd.xlane.f32.xlu0 %v2638
      %v2640 = vpop.xlane.xlu0 %2639
      %v2641 = vadd.f32 %v2560, %v2561
      %2642 = vadd.xlane.f32.xlu0 %v2641
      %v2643 = vpop.xlane.xlu0 %2642
      %v2644 = vadd.f32 %v2562, %v2563
      %2645 = vadd.xlane.f32.xlu0 %v2644
      %v2646 = vpop.xlane.xlu0 %2645
      %v2647 = vadd.f32 %v2564, %v2565
      %2648 = vadd.xlane.f32.xlu0 %v2647
      %v2649 = vpop.xlane.xlu0 %2648
      %v2650 = vadd.f32 %v2566, %v2567
      %2651 = vadd.xlane.f32.xlu0 %v2650
      %v2652 = vpop.xlane.xlu0 %2651
      %v2653 = vadd.f32 %v2568, %v2569
      %2654 = vadd.xlane.f32.xlu0 %v2653
      %v2655 = vpop.xlane.xlu0 %2654
      %v2656 = vadd.f32 %v2570, %v2571
      %2657 = vadd.xlane.f32.xlu0 %v2656
      %v2658 = vpop.xlane.xlu0 %2657
      %v2659 = vadd.f32 %v2572, %v2573
      %2660 = vadd.xlane.f32.xlu0 %v2659
      %v2661 = vpop.xlane.xlu0 %2660
      %v2662 = vadd.f32 %v2574, %v2575
      %2663 = vadd.xlane.f32.xlu0 %v2662
      %v2664 = vpop.xlane.xlu0 %2663
      %v2665 = vadd.f32 %v2576, %v2577
      %2666 = vadd.xlane.f32.xlu0 %v2665
      %v2667 = vpop.xlane.xlu0 %2666
      %v2668 = vadd.f32 %v2578, %v2579
      %2669 = vadd.xlane.f32.xlu0 %v2668
      %v2670 = vpop.xlane.xlu0 %2669
      %v2671 = vadd.f32 %v2580, %v2581
      %2672 = vadd.xlane.f32.xlu0 %v2671
      %v2673 = vpop.xlane.xlu0 %2672
      %v2674 = vadd.f32 %v2582, %v2583
      %2675 = vadd.xlane.f32.xlu0 %v2674
      %v2676 = vpop.xlane.xlu0 %2675
      %v2677 = vadd.f32 %v2584, %v2585
      %2678 = vadd.xlane.f32.xlu0 %v2677
      %v2679 = vpop.xlane.xlu0 %2678
      %v2680 = vadd.f32 %v2586, %v2587
      %2681 = vadd.xlane.f32.xlu0 %v2680
      %v2682 = vpop.xlane.xlu0 %2681
      %v2683 = vadd.f32 %v2588, %v2589
      %2684 = vadd.xlane.f32.xlu0 %v2683
      %v2685 = vpop.xlane.xlu0 %2684
      %v2686 = vadd.f32 %v2494, %v2592
      %v2687 = vadd.f32 %v2495, %v2595
      %v2688 = vadd.f32 %v2496, %v2598
      %v2689 = vadd.f32 %v2497, %v2601
      %v2690 = vadd.f32 %v2498, %v2604
      %v2691 = vadd.f32 %v2499, %v2607
      %v2692 = vadd.f32 %v2500, %v2610
      %v2693 = vadd.f32 %v2501, %v2613
      %v2694 = vadd.f32 %v2502, %v2616
      %v2695 = vadd.f32 %v2503, %v2619
      %v2696 = vadd.f32 %v2504, %v2622
      %v2697 = vadd.f32 %v2505, %v2625
      %v2698 = vadd.f32 %v2506, %v2628
      %v2699 = vadd.f32 %v2507, %v2631
      %v2700 = vadd.f32 %v2508, %v2634
      %v2701 = vadd.f32 %v2509, %v2637
      %v2702 = vadd.f32 %v2510, %v2640
      %v2703 = vadd.f32 %v2511, %v2643
      %v2704 = vadd.f32 %v2512, %v2646
      %v2705 = vadd.f32 %v2513, %v2649
      %v2706 = vadd.f32 %v2514, %v2652
      %v2707 = vadd.f32 %v2515, %v2655
      %v2708 = vadd.f32 %v2516, %v2658
      %v2709 = vadd.f32 %v2517, %v2661
      %v2710 = vadd.f32 %v2518, %v2664
      %v2711 = vadd.f32 %v2519, %v2667
      %v2712 = vadd.f32 %v2520, %v2670
      %v2713 = vadd.f32 %v2521, %v2673
      %v2714 = vadd.f32 %v2522, %v2676
      %v2715 = vadd.f32 %v2523, %v2679
      %v2716 = vadd.f32 %v2524, %v2682
      %v2717 = vadd.f32 %v2525, %v2685
      %2718 = vst.msk [vmem:[#allocation6] sm:$0xff] %vm2205, %v2686
      %2719 = vst.msk [vmem:[#allocation6 + $0x8] sm:$0xff] %vm2205, %v2687
      %2720 = vst.msk [vmem:[#allocation6 + $0x10] sm:$0xff] %vm2205, %v2688
      %2721 = vst.msk [vmem:[#allocation6 + $0x18] sm:$0xff] %vm2205, %v2689
      %2722 = vst.msk [vmem:[#allocation6 + $0x20] sm:$0xff] %vm2205, %v2690
      %2723 = vst.msk [vmem:[#allocation6 + $0x28] sm:$0xff] %vm2205, %v2691
      %2724 = vst.msk [vmem:[#allocation6 + $0x30] sm:$0xff] %vm2205, %v2692
      %2725 = vst.msk [vmem:[#allocation6 + $0x38] sm:$0xff] %vm2205, %v2693
      %2726 = vst.msk [vmem:[#allocation6 + $0x40] sm:$0xff] %vm2205, %v2694
      %2727 = vst.msk [vmem:[#allocation6 + $0x48] sm:$0xff] %vm2205, %v2695
      %2728 = vst.msk [vmem:[#allocation6 + $0x50] sm:$0xff] %vm2205, %v2696
      %2729 = vst.msk [vmem:[#allocation6 + $0x58] sm:$0xff] %vm2205, %v2697
      %2730 = vst.msk [vmem:[#allocation6 + $0x60] sm:$0xff] %vm2205, %v2698
      %2731 = vst.msk [vmem:[#allocation6 + $0x68] sm:$0xff] %vm2205, %v2699
      %2732 = vst.msk [vmem:[#allocation6 + $0x70] sm:$0xff] %vm2205, %v2700
      %2733 = vst.msk [vmem:[#allocation6 + $0x78] sm:$0xff] %vm2205, %v2701
      %2734 = vst.msk [vmem:[#allocation6 + $0x80] sm:$0xff] %vm2205, %v2702
      %2735 = vst.msk [vmem:[#allocation6 + $0x88] sm:$0xff] %vm2205, %v2703
      %2736 = vst.msk [vmem:[#allocation6 + $0x90] sm:$0xff] %vm2205, %v2704
      %2737 = vst.msk [vmem:[#allocation6 + $0x98] sm:$0xff] %vm2205, %v2705
      %2738 = vst.msk [vmem:[#allocation6 + $0xa0] sm:$0xff] %vm2205, %v2706
      %2739 = vst.msk [vmem:[#allocation6 + $0xa8] sm:$0xff] %vm2205, %v2707
      %2740 = vst.msk [vmem:[#allocation6 + $0xb0] sm:$0xff] %vm2205, %v2708
      %2741 = vst.msk [vmem:[#allocation6 + $0xb8] sm:$0xff] %vm2205, %v2709
      %2742 = vst.msk [vmem:[#allocation6 + $0xc0] sm:$0xff] %vm2205, %v2710
      %2743 = vst.msk [vmem:[#allocation6 + $0xc8] sm:$0xff] %vm2205, %v2711
      %2744 = vst.msk [vmem:[#allocation6 + $0xd0] sm:$0xff] %vm2205, %v2712
      %2745 = vst.msk [vmem:[#allocation6 + $0xd8] sm:$0xff] %vm2205, %v2713
      %2746 = vst.msk [vmem:[#allocation6 + $0xe0] sm:$0xff] %vm2205, %v2714
      %2747 = vst.msk [vmem:[#allocation6 + $0xe8] sm:$0xff] %vm2205, %v2715
      %2748 = vst.msk [vmem:[#allocation6 + $0xf0] sm:$0xff] %vm2205, %v2716
      %2749 = vst.msk [vmem:[#allocation6 + $0xf8] sm:$0xff] %vm2205, %v2717
      %v2750 = vld [vmem:[#allocation7] sm:$0xff]
      %v2751 = vld [vmem:[#allocation7 + $0x8] sm:$0xff]
      %v2752 = vld [vmem:[#allocation7 + $0x10] sm:$0xff]
      %v2753 = vld [vmem:[#allocation7 + $0x18] sm:$0xff]
      %v2754 = vld [vmem:[#allocation7 + $0x20] sm:$0xff]
      %v2755 = vld [vmem:[#allocation7 + $0x28] sm:$0xff]
      %v2756 = vld [vmem:[#allocation7 + $0x30] sm:$0xff]
      %v2757 = vld [vmem:[#allocation7 + $0x38] sm:$0xff]
      %v2758 = vld [vmem:[#allocation7 + $0x40] sm:$0xff]
      %v2759 = vld [vmem:[#allocation7 + $0x48] sm:$0xff]
      %v2760 = vld [vmem:[#allocation7 + $0x50] sm:$0xff]
      %v2761 = vld [vmem:[#allocation7 + $0x58] sm:$0xff]
      %v2762 = vld [vmem:[#allocation7 + $0x60] sm:$0xff]
      %v2763 = vld [vmem:[#allocation7 + $0x68] sm:$0xff]
      %v2764 = vld [vmem:[#allocation7 + $0x70] sm:$0xff]
      %v2765 = vld [vmem:[#allocation7 + $0x78] sm:$0xff]
      %v2766 = vld [vmem:[#allocation7 + $0x80] sm:$0xff]
      %v2767 = vld [vmem:[#allocation7 + $0x88] sm:$0xff]
      %v2768 = vld [vmem:[#allocation7 + $0x90] sm:$0xff]
      %v2769 = vld [vmem:[#allocation7 + $0x98] sm:$0xff]
      %v2770 = vld [vmem:[#allocation7 + $0xa0] sm:$0xff]
      %v2771 = vld [vmem:[#allocation7 + $0xa8] sm:$0xff]
      %v2772 = vld [vmem:[#allocation7 + $0xb0] sm:$0xff]
      %v2773 = vld [vmem:[#allocation7 + $0xb8] sm:$0xff]
      %v2774 = vld [vmem:[#allocation7 + $0xc0] sm:$0xff]
      %v2775 = vld [vmem:[#allocation7 + $0xc8] sm:$0xff]
      %v2776 = vld [vmem:[#allocation7 + $0xd0] sm:$0xff]
      %v2777 = vld [vmem:[#allocation7 + $0xd8] sm:$0xff]
      %v2778 = vld [vmem:[#allocation7 + $0xe0] sm:$0xff]
      %v2779 = vld [vmem:[#allocation7 + $0xe8] sm:$0xff]
      %v2780 = vld [vmem:[#allocation7 + $0xf0] sm:$0xff]
      %v2781 = vld [vmem:[#allocation7 + $0xf8] sm:$0xff]
      %v2782 = vmul.f32 %v1432, %v1432
      %v2783 = vmul.f32 %v1433, %v1433
      %v2784 = vmul.f32 %v1434, %v1434
      %v2785 = vmul.f32 %v1435, %v1435
      %v2786 = vmul.f32 %v1436, %v1436
      %v2787 = vmul.f32 %v1437, %v1437
      %v2788 = vmul.f32 %v1438, %v1438
      %v2789 = vmul.f32 %v1439, %v1439
      %v2790 = vmul.f32 %v1440, %v1440
      %v2791 = vmul.f32 %v1441, %v1441
      %v2792 = vmul.f32 %v1442, %v1442
      %v2793 = vmul.f32 %v1443, %v1443
      %v2794 = vmul.f32 %v1444, %v1444
      %v2795 = vmul.f32 %v1445, %v1445
      %v2796 = vmul.f32 %v1446, %v1446
      %v2797 = vmul.f32 %v1447, %v1447
      %v2798 = vmul.f32 %v1448, %v1448
      %v2799 = vmul.f32 %v1449, %v1449
      %v2800 = vmul.f32 %v1450, %v1450
      %v2801 = vmul.f32 %v1451, %v1451
      %v2802 = vmul.f32 %v1452, %v1452
      %v2803 = vmul.f32 %v1453, %v1453
      %v2804 = vmul.f32 %v1454, %v1454
      %v2805 = vmul.f32 %v1455, %v1455
      %v2806 = vmul.f32 %v1456, %v1456
      %v2807 = vmul.f32 %v1457, %v1457
      %v2808 = vmul.f32 %v1458, %v1458
      %v2809 = vmul.f32 %v1459, %v1459
      %v2810 = vmul.f32 %v1460, %v1460
      %v2811 = vmul.f32 %v1461, %v1461
      %v2812 = vmul.f32 %v1462, %v1462
      %v2813 = vmul.f32 %v1463, %v1463
      %v2814 = vmul.f32 %v1464, %v1464
      %v2815 = vmul.f32 %v1465, %v1465
      %v2816 = vmul.f32 %v1466, %v1466
      %v2817 = vmul.f32 %v1467, %v1467
      %v2818 = vmul.f32 %v1468, %v1468
      %v2819 = vmul.f32 %v1469, %v1469
      %v2820 = vmul.f32 %v1470, %v1470
      %v2821 = vmul.f32 %v1471, %v1471
      %v2822 = vmul.f32 %v1472, %v1472
      %v2823 = vmul.f32 %v1473, %v1473
      %v2824 = vmul.f32 %v1474, %v1474
      %v2825 = vmul.f32 %v1475, %v1475
      %v2826 = vmul.f32 %v1476, %v1476
      %v2827 = vmul.f32 %v1477, %v1477
      %v2828 = vmul.f32 %v1478, %v1478
      %v2829 = vmul.f32 %v1479, %v1479
      %v2830 = vmul.f32 %v1480, %v1480
      %v2831 = vmul.f32 %v1481, %v1481
      %v2832 = vmul.f32 %v1482, %v1482
      %v2833 = vmul.f32 %v1483, %v1483
      %v2834 = vmul.f32 %v1484, %v1484
      %v2835 = vmul.f32 %v1485, %v1485
      %v2836 = vmul.f32 %v1486, %v1486
      %v2837 = vmul.f32 %v1487, %v1487
      %v2838 = vmul.f32 %v1488, %v1488
      %v2839 = vmul.f32 %v1489, %v1489
      %v2840 = vmul.f32 %v1490, %v1490
      %v2841 = vmul.f32 %v1491, %v1491
      %v2842 = vmul.f32 %v1492, %v1492
      %v2843 = vmul.f32 %v1493, %v1493
      %v2844 = vmul.f32 %v1494, %v1494
      %v2845 = vmul.f32 %v1495, %v1495
      %v2846 = vadd.f32 %v2782, %v2783
      %2847 = vadd.xlane.f32.xlu0 %v2846
      %v2848 = vpop.xlane.xlu0 %2847
      %v2849 = vadd.f32 %v2784, %v2785
      %2850 = vadd.xlane.f32.xlu0 %v2849
      %v2851 = vpop.xlane.xlu0 %2850
      %v2852 = vadd.f32 %v2786, %v2787
      %2853 = vadd.xlane.f32.xlu0 %v2852
      %v2854 = vpop.xlane.xlu0 %2853
      %v2855 = vadd.f32 %v2788, %v2789
      %2856 = vadd.xlane.f32.xlu0 %v2855
      %v2857 = vpop.xlane.xlu0 %2856
      %v2858 = vadd.f32 %v2790, %v2791
      %2859 = vadd.xlane.f32.xlu0 %v2858
      %v2860 = vpop.xlane.xlu0 %2859
      %v2861 = vadd.f32 %v2792, %v2793
      %2862 = vadd.xlane.f32.xlu0 %v2861
      %v2863 = vpop.xlane.xlu0 %2862
      %v2864 = vadd.f32 %v2794, %v2795
      %2865 = vadd.xlane.f32.xlu0 %v2864
      %v2866 = vpop.xlane.xlu0 %2865
      %v2867 = vadd.f32 %v2796, %v2797
      %2868 = vadd.xlane.f32.xlu0 %v2867
      %v2869 = vpop.xlane.xlu0 %2868
      %v2870 = vadd.f32 %v2798, %v2799
      %2871 = vadd.xlane.f32.xlu0 %v2870
      %v2872 = vpop.xlane.xlu0 %2871
      %v2873 = vadd.f32 %v2800, %v2801
      %2874 = vadd.xlane.f32.xlu0 %v2873
      %v2875 = vpop.xlane.xlu0 %2874
      %v2876 = vadd.f32 %v2802, %v2803
      %2877 = vadd.xlane.f32.xlu0 %v2876
      %v2878 = vpop.xlane.xlu0 %2877
      %v2879 = vadd.f32 %v2804, %v2805
      %2880 = vadd.xlane.f32.xlu0 %v2879
      %v2881 = vpop.xlane.xlu0 %2880
      %v2882 = vadd.f32 %v2806, %v2807
      %2883 = vadd.xlane.f32.xlu0 %v2882
      %v2884 = vpop.xlane.xlu0 %2883
      %v2885 = vadd.f32 %v2808, %v2809
      %2886 = vadd.xlane.f32.xlu0 %v2885
      %v2887 = vpop.xlane.xlu0 %2886
      %v2888 = vadd.f32 %v2810, %v2811
      %2889 = vadd.xlane.f32.xlu0 %v2888
      %v2890 = vpop.xlane.xlu0 %2889
      %v2891 = vadd.f32 %v2812, %v2813
      %2892 = vadd.xlane.f32.xlu0 %v2891
      %v2893 = vpop.xlane.xlu0 %2892
      %v2894 = vadd.f32 %v2814, %v2815
      %2895 = vadd.xlane.f32.xlu0 %v2894
      %v2896 = vpop.xlane.xlu0 %2895
      %v2897 = vadd.f32 %v2816, %v2817
      %2898 = vadd.xlane.f32.xlu0 %v2897
      %v2899 = vpop.xlane.xlu0 %2898
      %v2900 = vadd.f32 %v2818, %v2819
      %2901 = vadd.xlane.f32.xlu0 %v2900
      %v2902 = vpop.xlane.xlu0 %2901
      %v2903 = vadd.f32 %v2820, %v2821
      %2904 = vadd.xlane.f32.xlu0 %v2903
      %v2905 = vpop.xlane.xlu0 %2904
      %v2906 = vadd.f32 %v2822, %v2823
      %2907 = vadd.xlane.f32.xlu0 %v2906
      %v2908 = vpop.xlane.xlu0 %2907
      %v2909 = vadd.f32 %v2824, %v2825
      %2910 = vadd.xlane.f32.xlu0 %v2909
      %v2911 = vpop.xlane.xlu0 %2910
      %v2912 = vadd.f32 %v2826, %v2827
      %2913 = vadd.xlane.f32.xlu0 %v2912
      %v2914 = vpop.xlane.xlu0 %2913
      %v2915 = vadd.f32 %v2828, %v2829
      %2916 = vadd.xlane.f32.xlu0 %v2915
      %v2917 = vpop.xlane.xlu0 %2916
      %v2918 = vadd.f32 %v2830, %v2831
      %2919 = vadd.xlane.f32.xlu0 %v2918
      %v2920 = vpop.xlane.xlu0 %2919
      %v2921 = vadd.f32 %v2832, %v2833
      %2922 = vadd.xlane.f32.xlu0 %v2921
      %v2923 = vpop.xlane.xlu0 %2922
      %v2924 = vadd.f32 %v2834, %v2835
      %2925 = vadd.xlane.f32.xlu0 %v2924
      %v2926 = vpop.xlane.xlu0 %2925
      %v2927 = vadd.f32 %v2836, %v2837
      %2928 = vadd.xlane.f32.xlu0 %v2927
      %v2929 = vpop.xlane.xlu0 %2928
      %v2930 = vadd.f32 %v2838, %v2839
      %2931 = vadd.xlane.f32.xlu0 %v2930
      %v2932 = vpop.xlane.xlu0 %2931
      %v2933 = vadd.f32 %v2840, %v2841
      %2934 = vadd.xlane.f32.xlu0 %v2933
      %v2935 = vpop.xlane.xlu0 %2934
      %v2936 = vadd.f32 %v2842, %v2843
      %2937 = vadd.xlane.f32.xlu0 %v2936
      %v2938 = vpop.xlane.xlu0 %2937
      %v2939 = vadd.f32 %v2844, %v2845
      %2940 = vadd.xlane.f32.xlu0 %v2939
      %v2941 = vpop.xlane.xlu0 %2940
      %v2942 = vadd.f32 %v2750, %v2848
      %v2943 = vadd.f32 %v2751, %v2851
      %v2944 = vadd.f32 %v2752, %v2854
      %v2945 = vadd.f32 %v2753, %v2857
      %v2946 = vadd.f32 %v2754, %v2860
      %v2947 = vadd.f32 %v2755, %v2863
      %v2948 = vadd.f32 %v2756, %v2866
      %v2949 = vadd.f32 %v2757, %v2869
      %v2950 = vadd.f32 %v2758, %v2872
      %v2951 = vadd.f32 %v2759, %v2875
      %v2952 = vadd.f32 %v2760, %v2878
      %v2953 = vadd.f32 %v2761, %v2881
      %v2954 = vadd.f32 %v2762, %v2884
      %v2955 = vadd.f32 %v2763, %v2887
      %v2956 = vadd.f32 %v2764, %v2890
      %v2957 = vadd.f32 %v2765, %v2893
      %v2958 = vadd.f32 %v2766, %v2896
      %v2959 = vadd.f32 %v2767, %v2899
      %v2960 = vadd.f32 %v2768, %v2902
      %v2961 = vadd.f32 %v2769, %v2905
      %v2962 = vadd.f32 %v2770, %v2908
      %v2963 = vadd.f32 %v2771, %v2911
      %v2964 = vadd.f32 %v2772, %v2914
      %v2965 = vadd.f32 %v2773, %v2917
      %v2966 = vadd.f32 %v2774, %v2920
      %v2967 = vadd.f32 %v2775, %v2923
      %v2968 = vadd.f32 %v2776, %v2926
      %v2969 = vadd.f32 %v2777, %v2929
      %v2970 = vadd.f32 %v2778, %v2932
      %v2971 = vadd.f32 %v2779, %v2935
      %v2972 = vadd.f32 %v2780, %v2938
      %v2973 = vadd.f32 %v2781, %v2941
      %2974 = vst.msk [vmem:[#allocation7] sm:$0xff] %vm2205, %v2942
      %2975 = vst.msk [vmem:[#allocation7 + $0x8] sm:$0xff] %vm2205, %v2943
      %2976 = vst.msk [vmem:[#allocation7 + $0x10] sm:$0xff] %vm2205, %v2944
      %2977 = vst.msk [vmem:[#allocation7 + $0x18] sm:$0xff] %vm2205, %v2945
      %2978 = vst.msk [vmem:[#allocation7 + $0x20] sm:$0xff] %vm2205, %v2946
      %2979 = vst.msk [vmem:[#allocation7 + $0x28] sm:$0xff] %vm2205, %v2947
      %2980 = vst.msk [vmem:[#allocation7 + $0x30] sm:$0xff] %vm2205, %v2948
      %2981 = vst.msk [vmem:[#allocation7 + $0x38] sm:$0xff] %vm2205, %v2949
      %2982 = vst.msk [vmem:[#allocation7 + $0x40] sm:$0xff] %vm2205, %v2950
      %2983 = vst.msk [vmem:[#allocation7 + $0x48] sm:$0xff] %vm2205, %v2951
      %2984 = vst.msk [vmem:[#allocation7 + $0x50] sm:$0xff] %vm2205, %v2952
      %2985 = vst.msk [vmem:[#allocation7 + $0x58] sm:$0xff] %vm2205, %v2953
      %2986 = vst.msk [vmem:[#allocation7 + $0x60] sm:$0xff] %vm2205, %v2954
      %2987 = vst.msk [vmem:[#allocation7 + $0x68] sm:$0xff] %vm2205, %v2955
      %2988 = vst.msk [vmem:[#allocation7 + $0x70] sm:$0xff] %vm2205, %v2956
      %2989 = vst.msk [vmem:[#allocation7 + $0x78] sm:$0xff] %vm2205, %v2957
      %2990 = vst.msk [vmem:[#allocation7 + $0x80] sm:$0xff] %vm2205, %v2958
      %2991 = vst.msk [vmem:[#allocation7 + $0x88] sm:$0xff] %vm2205, %v2959
      %2992 = vst.msk [vmem:[#allocation7 + $0x90] sm:$0xff] %vm2205, %v2960
      %2993 = vst.msk [vmem:[#allocation7 + $0x98] sm:$0xff] %vm2205, %v2961
      %2994 = vst.msk [vmem:[#allocation7 + $0xa0] sm:$0xff] %vm2205, %v2962
      %2995 = vst.msk [vmem:[#allocation7 + $0xa8] sm:$0xff] %vm2205, %v2963
      %2996 = vst.msk [vmem:[#allocation7 + $0xb0] sm:$0xff] %vm2205, %v2964
      %2997 = vst.msk [vmem:[#allocation7 + $0xb8] sm:$0xff] %vm2205, %v2965
      %2998 = vst.msk [vmem:[#allocation7 + $0xc0] sm:$0xff] %vm2205, %v2966
      %2999 = vst.msk [vmem:[#allocation7 + $0xc8] sm:$0xff] %vm2205, %v2967
      %3000 = vst.msk [vmem:[#allocation7 + $0xd0] sm:$0xff] %vm2205, %v2968
      %3001 = vst.msk [vmem:[#allocation7 + $0xd8] sm:$0xff] %vm2205, %v2969
      %3002 = vst.msk [vmem:[#allocation7 + $0xe0] sm:$0xff] %vm2205, %v2970
      %3003 = vst.msk [vmem:[#allocation7 + $0xe8] sm:$0xff] %vm2205, %v2971
      %3004 = vst.msk [vmem:[#allocation7 + $0xf0] sm:$0xff] %vm2205, %v2972
      %3005 = vst.msk [vmem:[#allocation7 + $0xf8] sm:$0xff] %vm2205, %v2973
      // Predicated region
      $region34: #{forward.1} parent=28 // pred_check
        %p3006 = pneg %p1784
      $region35: #{forward.1} parent=28 // pred_check_branch
        %3008 = sbr.rel (%p3006) target = $region37
      $region36: #{forward.1} parent=28 // pred_region
        %v3009 = vld [vmem:[#allocation4] sm:$0xff]
        %v3010 = vld [vmem:[#allocation4 + $0x8] sm:$0xff]
        %v3011 = vld [vmem:[#allocation4 + $0x10] sm:$0xff]
        %v3012 = vld [vmem:[#allocation4 + $0x18] sm:$0xff]
        %v3013 = vld [vmem:[#allocation4 + $0x20] sm:$0xff]
        %v3014 = vld [vmem:[#allocation4 + $0x28] sm:$0xff]
        %v3015 = vld [vmem:[#allocation4 + $0x30] sm:$0xff]
        %v3016 = vld [vmem:[#allocation4 + $0x38] sm:$0xff]
        %v3017 = vld [vmem:[#allocation4 + $0x40] sm:$0xff]
        %v3018 = vld [vmem:[#allocation4 + $0x48] sm:$0xff]
        %v3019 = vld [vmem:[#allocation4 + $0x50] sm:$0xff]
        %v3020 = vld [vmem:[#allocation4 + $0x58] sm:$0xff]
        %v3021 = vld [vmem:[#allocation4 + $0x60] sm:$0xff]
        %v3022 = vld [vmem:[#allocation4 + $0x68] sm:$0xff]
        %v3023 = vld [vmem:[#allocation4 + $0x70] sm:$0xff]
        %v3024 = vld [vmem:[#allocation4 + $0x78] sm:$0xff]
        %v3025 = vld [vmem:[#allocation4 + $0x80] sm:$0xff]
        %v3026 = vld [vmem:[#allocation4 + $0x88] sm:$0xff]
        %v3027 = vld [vmem:[#allocation4 + $0x90] sm:$0xff]
        %v3028 = vld [vmem:[#allocation4 + $0x98] sm:$0xff]
        %v3029 = vld [vmem:[#allocation4 + $0xa0] sm:$0xff]
        %v3030 = vld [vmem:[#allocation4 + $0xa8] sm:$0xff]
        %v3031 = vld [vmem:[#allocation4 + $0xb0] sm:$0xff]
        %v3032 = vld [vmem:[#allocation4 + $0xb8] sm:$0xff]
        %v3033 = vld [vmem:[#allocation4 + $0xc0] sm:$0xff]
        %v3034 = vld [vmem:[#allocation4 + $0xc8] sm:$0xff]
        %v3035 = vld [vmem:[#allocation4 + $0xd0] sm:$0xff]
        %v3036 = vld [vmem:[#allocation4 + $0xd8] sm:$0xff]
        %v3037 = vld [vmem:[#allocation4 + $0xe0] sm:$0xff]
        %v3038 = vld [vmem:[#allocation4 + $0xe8] sm:$0xff]
        %v3039 = vld [vmem:[#allocation4 + $0xf0] sm:$0xff]
        %v3040 = vld [vmem:[#allocation4 + $0xf8] sm:$0xff]
        %v3041 = vmul.f32 %v3009, 0.00390625
        %v3042 = vmul.f32 %v3010, 0.00390625
        %v3043 = vmul.f32 %v3011, 0.00390625
        %v3044 = vmul.f32 %v3012, 0.00390625
        %v3045 = vmul.f32 %v3013, 0.00390625
        %v3046 = vmul.f32 %v3014, 0.00390625
        %v3047 = vmul.f32 %v3015, 0.00390625
        %v3048 = vmul.f32 %v3016, 0.00390625
        %v3049 = vmul.f32 %v3017, 0.00390625
        %v3050 = vmul.f32 %v3018, 0.00390625
        %v3051 = vmul.f32 %v3019, 0.00390625
        %v3052 = vmul.f32 %v3020, 0.00390625
        %v3053 = vmul.f32 %v3021, 0.00390625
        %v3054 = vmul.f32 %v3022, 0.00390625
        %v3055 = vmul.f32 %v3023, 0.00390625
        %v3056 = vmul.f32 %v3024, 0.00390625
        %v3057 = vmul.f32 %v3025, 0.00390625
        %v3058 = vmul.f32 %v3026, 0.00390625
        %v3059 = vmul.f32 %v3027, 0.00390625
        %v3060 = vmul.f32 %v3028, 0.00390625
        %v3061 = vmul.f32 %v3029, 0.00390625
        %v3062 = vmul.f32 %v3030, 0.00390625
        %v3063 = vmul.f32 %v3031, 0.00390625
        %v3064 = vmul.f32 %v3032, 0.00390625
        %v3065 = vmul.f32 %v3033, 0.00390625
        %v3066 = vmul.f32 %v3034, 0.00390625
        %v3067 = vmul.f32 %v3035, 0.00390625
        %v3068 = vmul.f32 %v3036, 0.00390625
        %v3069 = vmul.f32 %v3037, 0.00390625
        %v3070 = vmul.f32 %v3038, 0.00390625
        %v3071 = vmul.f32 %v3039, 0.00390625
        %v3072 = vmul.f32 %v3040, 0.00390625
        %v3073 = vld [vmem:[#allocation6] sm:$0xff]
        %v3074 = vld [vmem:[#allocation6 + $0x8] sm:$0xff]
        %v3075 = vld [vmem:[#allocation6 + $0x10] sm:$0xff]
        %v3076 = vld [vmem:[#allocation6 + $0x18] sm:$0xff]
        %v3077 = vld [vmem:[#allocation6 + $0x20] sm:$0xff]
        %v3078 = vld [vmem:[#allocation6 + $0x28] sm:$0xff]
        %v3079 = vld [vmem:[#allocation6 + $0x30] sm:$0xff]
        %v3080 = vld [vmem:[#allocation6 + $0x38] sm:$0xff]
        %v3081 = vld [vmem:[#allocation6 + $0x40] sm:$0xff]
        %v3082 = vld [vmem:[#allocation6 + $0x48] sm:$0xff]
        %v3083 = vld [vmem:[#allocation6 + $0x50] sm:$0xff]
        %v3084 = vld [vmem:[#allocation6 + $0x58] sm:$0xff]
        %v3085 = vld [vmem:[#allocation6 + $0x60] sm:$0xff]
        %v3086 = vld [vmem:[#allocation6 + $0x68] sm:$0xff]
        %v3087 = vld [vmem:[#allocation6 + $0x70] sm:$0xff]
        %v3088 = vld [vmem:[#allocation6 + $0x78] sm:$0xff]
        %v3089 = vld [vmem:[#allocation6 + $0x80] sm:$0xff]
        %v3090 = vld [vmem:[#allocation6 + $0x88] sm:$0xff]
        %v3091 = vld [vmem:[#allocation6 + $0x90] sm:$0xff]
        %v3092 = vld [vmem:[#allocation6 + $0x98] sm:$0xff]
        %v3093 = vld [vmem:[#allocation6 + $0xa0] sm:$0xff]
        %v3094 = vld [vmem:[#allocation6 + $0xa8] sm:$0xff]
        %v3095 = vld [vmem:[#allocation6 + $0xb0] sm:$0xff]
        %v3096 = vld [vmem:[#allocation6 + $0xb8] sm:$0xff]
        %v3097 = vld [vmem:[#allocation6 + $0xc0] sm:$0xff]
        %v3098 = vld [vmem:[#allocation6 + $0xc8] sm:$0xff]
        %v3099 = vld [vmem:[#allocation6 + $0xd0] sm:$0xff]
        %v3100 = vld [vmem:[#allocation6 + $0xd8] sm:$0xff]
        %v3101 = vld [vmem:[#allocation6 + $0xe0] sm:$0xff]
        %v3102 = vld [vmem:[#allocation6 + $0xe8] sm:$0xff]
        %v3103 = vld [vmem:[#allocation6 + $0xf0] sm:$0xff]
        %v3104 = vld [vmem:[#allocation6 + $0xf8] sm:$0xff]
        %v3105 = vmax.f32 %v3073, 1e-16
        %v3106 = vmax.f32 %v3074, 1e-16
        %v3107 = vmax.f32 %v3075, 1e-16
        %v3108 = vmax.f32 %v3076, 1e-16
        %v3109 = vmax.f32 %v3077, 1e-16
        %v3110 = vmax.f32 %v3078, 1e-16
        %v3111 = vmax.f32 %v3079, 1e-16
        %v3112 = vmax.f32 %v3080, 1e-16
        %v3113 = vmax.f32 %v3081, 1e-16
        %v3114 = vmax.f32 %v3082, 1e-16
        %v3115 = vmax.f32 %v3083, 1e-16
        %v3116 = vmax.f32 %v3084, 1e-16
        %v3117 = vmax.f32 %v3085, 1e-16
        %v3118 = vmax.f32 %v3086, 1e-16
        %v3119 = vmax.f32 %v3087, 1e-16
        %v3120 = vmax.f32 %v3088, 1e-16
        %v3121 = vmax.f32 %v3089, 1e-16
        %v3122 = vmax.f32 %v3090, 1e-16
        %v3123 = vmax.f32 %v3091, 1e-16
        %v3124 = vmax.f32 %v3092, 1e-16
        %v3125 = vmax.f32 %v3093, 1e-16
        %v3126 = vmax.f32 %v3094, 1e-16
        %v3127 = vmax.f32 %v3095, 1e-16
        %v3128 = vmax.f32 %v3096, 1e-16
        %v3129 = vmax.f32 %v3097, 1e-16
        %v3130 = vmax.f32 %v3098, 1e-16
        %v3131 = vmax.f32 %v3099, 1e-16
        %v3132 = vmax.f32 %v3100, 1e-16
        %v3133 = vmax.f32 %v3101, 1e-16
        %v3134 = vmax.f32 %v3102, 1e-16
        %v3135 = vmax.f32 %v3103, 1e-16
        %v3136 = vmax.f32 %v3104, 1e-16
        %v3137 = vld [vmem:[#allocation7] sm:$0xff]
        %v3138 = vld [vmem:[#allocation7 + $0x8] sm:$0xff]
        %v3139 = vld [vmem:[#allocation7 + $0x10] sm:$0xff]
        %v3140 = vld [vmem:[#allocation7 + $0x18] sm:$0xff]
        %v3141 = vld [vmem:[#allocation7 + $0x20] sm:$0xff]
        %v3142 = vld [vmem:[#allocation7 + $0x28] sm:$0xff]
        %v3143 = vld [vmem:[#allocation7 + $0x30] sm:$0xff]
        %v3144 = vld [vmem:[#allocation7 + $0x38] sm:$0xff]
        %v3145 = vld [vmem:[#allocation7 + $0x40] sm:$0xff]
        %v3146 = vld [vmem:[#allocation7 + $0x48] sm:$0xff]
        %v3147 = vld [vmem:[#allocation7 + $0x50] sm:$0xff]
        %v3148 = vld [vmem:[#allocation7 + $0x58] sm:$0xff]
        %v3149 = vld [vmem:[#allocation7 + $0x60] sm:$0xff]
        %v3150 = vld [vmem:[#allocation7 + $0x68] sm:$0xff]
        %v3151 = vld [vmem:[#allocation7 + $0x70] sm:$0xff]
        %v3152 = vld [vmem:[#allocation7 + $0x78] sm:$0xff]
        %v3153 = vld [vmem:[#allocation7 + $0x80] sm:$0xff]
        %v3154 = vld [vmem:[#allocation7 + $0x88] sm:$0xff]
        %v3155 = vld [vmem:[#allocation7 + $0x90] sm:$0xff]
        %v3156 = vld [vmem:[#allocation7 + $0x98] sm:$0xff]
        %v3157 = vld [vmem:[#allocation7 + $0xa0] sm:$0xff]
        %v3158 = vld [vmem:[#allocation7 + $0xa8] sm:$0xff]
        %v3159 = vld [vmem:[#allocation7 + $0xb0] sm:$0xff]
        %v3160 = vld [vmem:[#allocation7 + $0xb8] sm:$0xff]
        %v3161 = vld [vmem:[#allocation7 + $0xc0] sm:$0xff]
        %v3162 = vld [vmem:[#allocation7 + $0xc8] sm:$0xff]
        %v3163 = vld [vmem:[#allocation7 + $0xd0] sm:$0xff]
        %v3164 = vld [vmem:[#allocation7 + $0xd8] sm:$0xff]
        %v3165 = vld [vmem:[#allocation7 + $0xe0] sm:$0xff]
        %v3166 = vld [vmem:[#allocation7 + $0xe8] sm:$0xff]
        %v3167 = vld [vmem:[#allocation7 + $0xf0] sm:$0xff]
        %v3168 = vld [vmem:[#allocation7 + $0xf8] sm:$0xff]
        %v3169 = vmax.f32 %v3137, 1e-16
        %v3170 = vmax.f32 %v3138, 1e-16
        %v3171 = vmax.f32 %v3139, 1e-16
        %v3172 = vmax.f32 %v3140, 1e-16
        %v3173 = vmax.f32 %v3141, 1e-16
        %v3174 = vmax.f32 %v3142, 1e-16
        %v3175 = vmax.f32 %v3143, 1e-16
        %v3176 = vmax.f32 %v3144, 1e-16
        %v3177 = vmax.f32 %v3145, 1e-16
        %v3178 = vmax.f32 %v3146, 1e-16
        %v3179 = vmax.f32 %v3147, 1e-16
        %v3180 = vmax.f32 %v3148, 1e-16
        %v3181 = vmax.f32 %v3149, 1e-16
        %v3182 = vmax.f32 %v3150, 1e-16
        %v3183 = vmax.f32 %v3151, 1e-16
        %v3184 = vmax.f32 %v3152, 1e-16
        %v3185 = vmax.f32 %v3153, 1e-16
        %v3186 = vmax.f32 %v3154, 1e-16
        %v3187 = vmax.f32 %v3155, 1e-16
        %v3188 = vmax.f32 %v3156, 1e-16
        %v3189 = vmax.f32 %v3157, 1e-16
        %v3190 = vmax.f32 %v3158, 1e-16
        %v3191 = vmax.f32 %v3159, 1e-16
        %v3192 = vmax.f32 %v3160, 1e-16
        %v3193 = vmax.f32 %v3161, 1e-16
        %v3194 = vmax.f32 %v3162, 1e-16
        %v3195 = vmax.f32 %v3163, 1e-16
        %v3196 = vmax.f32 %v3164, 1e-16
        %v3197 = vmax.f32 %v3165, 1e-16
        %v3198 = vmax.f32 %v3166, 1e-16
        %v3199 = vmax.f32 %v3167, 1e-16
        %v3200 = vmax.f32 %v3168, 1e-16
        %v3201 = vmul.f32 %v3105, %v3169
        %v3202 = vmul.f32 %v3106, %v3170
        %v3203 = vmul.f32 %v3107, %v3171
        %v3204 = vmul.f32 %v3108, %v3172
        %v3205 = vmul.f32 %v3109, %v3173
        %v3206 = vmul.f32 %v3110, %v3174
        %v3207 = vmul.f32 %v3111, %v3175
        %v3208 = vmul.f32 %v3112, %v3176
        %v3209 = vmul.f32 %v3113, %v3177
        %v3210 = vmul.f32 %v3114, %v3178
        %v3211 = vmul.f32 %v3115, %v3179
        %v3212 = vmul.f32 %v3116, %v3180
        %v3213 = vmul.f32 %v3117, %v3181
        %v3214 = vmul.f32 %v3118, %v3182
        %v3215 = vmul.f32 %v3119, %v3183
        %v3216 = vmul.f32 %v3120, %v3184
        %v3217 = vmul.f32 %v3121, %v3185
        %v3218 = vmul.f32 %v3122, %v3186
        %v3219 = vmul.f32 %v3123, %v3187
        %v3220 = vmul.f32 %v3124, %v3188
        %v3221 = vmul.f32 %v3125, %v3189
        %v3222 = vmul.f32 %v3126, %v3190
        %v3223 = vmul.f32 %v3127, %v3191
        %v3224 = vmul.f32 %v3128, %v3192
        %v3225 = vmul.f32 %v3129, %v3193
        %v3226 = vmul.f32 %v3130, %v3194
        %v3227 = vmul.f32 %v3131, %v3195
        %v3228 = vmul.f32 %v3132, %v3196
        %v3229 = vmul.f32 %v3133, %v3197
        %v3230 = vmul.f32 %v3134, %v3198
        %v3231 = vmul.f32 %v3135, %v3199
        %v3232 = vmul.f32 %v3136, %v3200
        %v3233 = vld [vmem:[#allocation5] sm:$0xff]
        %v3234 = vld [vmem:[#allocation5 + $0x8] sm:$0xff]
        %v3235 = vld [vmem:[#allocation5 + $0x10] sm:$0xff]
        %v3236 = vld [vmem:[#allocation5 + $0x18] sm:$0xff]
        %v3237 = vld [vmem:[#allocation5 + $0x20] sm:$0xff]
        %v3238 = vld [vmem:[#allocation5 + $0x28] sm:$0xff]
        %v3239 = vld [vmem:[#allocation5 + $0x30] sm:$0xff]
        %v3240 = vld [vmem:[#allocation5 + $0x38] sm:$0xff]
        %v3241 = vld [vmem:[#allocation5 + $0x40] sm:$0xff]
        %v3242 = vld [vmem:[#allocation5 + $0x48] sm:$0xff]
        %v3243 = vld [vmem:[#allocation5 + $0x50] sm:$0xff]
        %v3244 = vld [vmem:[#allocation5 + $0x58] sm:$0xff]
        %v3245 = vld [vmem:[#allocation5 + $0x60] sm:$0xff]
        %v3246 = vld [vmem:[#allocation5 + $0x68] sm:$0xff]
        %v3247 = vld [vmem:[#allocation5 + $0x70] sm:$0xff]
        %v3248 = vld [vmem:[#allocation5 + $0x78] sm:$0xff]
        %v3249 = vld [vmem:[#allocation5 + $0x80] sm:$0xff]
        %v3250 = vld [vmem:[#allocation5 + $0x88] sm:$0xff]
        %v3251 = vld [vmem:[#allocation5 + $0x90] sm:$0xff]
        %v3252 = vld [vmem:[#allocation5 + $0x98] sm:$0xff]
        %v3253 = vld [vmem:[#allocation5 + $0xa0] sm:$0xff]
        %v3254 = vld [vmem:[#allocation5 + $0xa8] sm:$0xff]
        %v3255 = vld [vmem:[#allocation5 + $0xb0] sm:$0xff]
        %v3256 = vld [vmem:[#allocation5 + $0xb8] sm:$0xff]
        %v3257 = vld [vmem:[#allocation5 + $0xc0] sm:$0xff]
        %v3258 = vld [vmem:[#allocation5 + $0xc8] sm:$0xff]
        %v3259 = vld [vmem:[#allocation5 + $0xd0] sm:$0xff]
        %v3260 = vld [vmem:[#allocation5 + $0xd8] sm:$0xff]
        %v3261 = vld [vmem:[#allocation5 + $0xe0] sm:$0xff]
        %v3262 = vld [vmem:[#allocation5 + $0xe8] sm:$0xff]
        %v3263 = vld [vmem:[#allocation5 + $0xf0] sm:$0xff]
        %v3264 = vld [vmem:[#allocation5 + $0xf8] sm:$0xff]
        %v3265 = vrsqrt.pop %v3201
        %v3266 = vrsqrt.pop %v3202
        %v3267 = vrsqrt.pop %v3203
        %v3268 = vrsqrt.pop %v3204
        %v3269 = vrsqrt.pop %v3205
        %v3270 = vrsqrt.pop %v3206
        %v3271 = vrsqrt.pop %v3207
        %v3272 = vrsqrt.pop %v3208
        %v3273 = vrsqrt.pop %v3209
        %v3274 = vrsqrt.pop %v3210
        %v3275 = vrsqrt.pop %v3211
        %v3276 = vrsqrt.pop %v3212
        %v3277 = vrsqrt.pop %v3213
        %v3278 = vrsqrt.pop %v3214
        %v3279 = vrsqrt.pop %v3215
        %v3280 = vrsqrt.pop %v3216
        %v3281 = vrsqrt.pop %v3217
        %v3282 = vrsqrt.pop %v3218
        %v3283 = vrsqrt.pop %v3219
        %v3284 = vrsqrt.pop %v3220
        %v3285 = vrsqrt.pop %v3221
        %v3286 = vrsqrt.pop %v3222
        %v3287 = vrsqrt.pop %v3223
        %v3288 = vrsqrt.pop %v3224
        %v3289 = vrsqrt.pop %v3225
        %v3290 = vrsqrt.pop %v3226
        %v3291 = vrsqrt.pop %v3227
        %v3292 = vrsqrt.pop %v3228
        %v3293 = vrsqrt.pop %v3229
        %v3294 = vrsqrt.pop %v3230
        %v3295 = vrsqrt.pop %v3231
        %v3296 = vrsqrt.pop %v3232
        %v3297 = vmul.f32 %v3233, %v3265
        %v3298 = vmul.f32 %v3234, %v3266
        %v3299 = vmul.f32 %v3235, %v3267
        %v3300 = vmul.f32 %v3236, %v3268
        %v3301 = vmul.f32 %v3237, %v3269
        %v3302 = vmul.f32 %v3238, %v3270
        %v3303 = vmul.f32 %v3239, %v3271
        %v3304 = vmul.f32 %v3240, %v3272
        %v3305 = vmul.f32 %v3241, %v3273
        %v3306 = vmul.f32 %v3242, %v3274
        %v3307 = vmul.f32 %v3243, %v3275
        %v3308 = vmul.f32 %v3244, %v3276
        %v3309 = vmul.f32 %v3245, %v3277
        %v3310 = vmul.f32 %v3246, %v3278
        %v3311 = vmul.f32 %v3247, %v3279
        %v3312 = vmul.f32 %v3248, %v3280
        %v3313 = vmul.f32 %v3249, %v3281
        %v3314 = vmul.f32 %v3250, %v3282
        %v3315 = vmul.f32 %v3251, %v3283
        %v3316 = vmul.f32 %v3252, %v3284
        %v3317 = vmul.f32 %v3253, %v3285
        %v3318 = vmul.f32 %v3254, %v3286
        %v3319 = vmul.f32 %v3255, %v3287
        %v3320 = vmul.f32 %v3256, %v3288
        %v3321 = vmul.f32 %v3257, %v3289
        %v3322 = vmul.f32 %v3258, %v3290
        %v3323 = vmul.f32 %v3259, %v3291
        %v3324 = vmul.f32 %v3260, %v3292
        %v3325 = vmul.f32 %v3261, %v3293
        %v3326 = vmul.f32 %v3262, %v3294
        %v3327 = vmul.f32 %v3263, %v3295
        %v3328 = vmul.f32 %v3264, %v3296
        %v3329 = vsub.f32 0.0, %v3297
        %v3330 = vsub.f32 0.0, %v3298
        %v3331 = vsub.f32 0.0, %v3299
        %v3332 = vsub.f32 0.0, %v3300
        %v3333 = vsub.f32 0.0, %v3301
        %v3334 = vsub.f32 0.0, %v3302
        %v3335 = vsub.f32 0.0, %v3303
        %v3336 = vsub.f32 0.0, %v3304
        %v3337 = vsub.f32 0.0, %v3305
        %v3338 = vsub.f32 0.0, %v3306
        %v3339 = vsub.f32 0.0, %v3307
        %v3340 = vsub.f32 0.0, %v3308
        %v3341 = vsub.f32 0.0, %v3309
        %v3342 = vsub.f32 0.0, %v3310
        %v3343 = vsub.f32 0.0, %v3311
        %v3344 = vsub.f32 0.0, %v3312
        %v3345 = vsub.f32 0.0, %v3313
        %v3346 = vsub.f32 0.0, %v3314
        %v3347 = vsub.f32 0.0, %v3315
        %v3348 = vsub.f32 0.0, %v3316
        %v3349 = vsub.f32 0.0, %v3317
        %v3350 = vsub.f32 0.0, %v3318
        %v3351 = vsub.f32 0.0, %v3319
        %v3352 = vsub.f32 0.0, %v3320
        %v3353 = vsub.f32 0.0, %v3321
        %v3354 = vsub.f32 0.0, %v3322
        %v3355 = vsub.f32 0.0, %v3323
        %v3356 = vsub.f32 0.0, %v3324
        %v3357 = vsub.f32 0.0, %v3325
        %v3358 = vsub.f32 0.0, %v3326
        %v3359 = vsub.f32 0.0, %v3327
        %v3360 = vsub.f32 0.0, %v3328
        %v3361 = vmax.f32 %v3329, 0.0
        %v3362 = vmax.f32 %v3330, 0.0
        %v3363 = vmax.f32 %v3331, 0.0
        %v3364 = vmax.f32 %v3332, 0.0
        %v3365 = vmax.f32 %v3333, 0.0
        %v3366 = vmax.f32 %v3334, 0.0
        %v3367 = vmax.f32 %v3335, 0.0
        %v3368 = vmax.f32 %v3336, 0.0
        %v3369 = vmax.f32 %v3337, 0.0
        %v3370 = vmax.f32 %v3338, 0.0
        %v3371 = vmax.f32 %v3339, 0.0
        %v3372 = vmax.f32 %v3340, 0.0
        %v3373 = vmax.f32 %v3341, 0.0
        %v3374 = vmax.f32 %v3342, 0.0
        %v3375 = vmax.f32 %v3343, 0.0
        %v3376 = vmax.f32 %v3344, 0.0
        %v3377 = vmax.f32 %v3345, 0.0
        %v3378 = vmax.f32 %v3346, 0.0
        %v3379 = vmax.f32 %v3347, 0.0
        %v3380 = vmax.f32 %v3348, 0.0
        %v3381 = vmax.f32 %v3349, 0.0
        %v3382 = vmax.f32 %v3350, 0.0
        %v3383 = vmax.f32 %v3351, 0.0
        %v3384 = vmax.f32 %v3352, 0.0
        %v3385 = vmax.f32 %v3353, 0.0
        %v3386 = vmax.f32 %v3354, 0.0
        %v3387 = vmax.f32 %v3355, 0.0
        %v3388 = vmax.f32 %v3356, 0.0
        %v3389 = vmax.f32 %v3357, 0.0
        %v3390 = vmax.f32 %v3358, 0.0
        %v3391 = vmax.f32 %v3359, 0.0
        %v3392 = vmax.f32 %v3360, 0.0
        %v3393 = vsub.f32 0.0, %v3329
        %v3394 = vsub.f32 0.0, %v3330
        %v3395 = vsub.f32 0.0, %v3331
        %v3396 = vsub.f32 0.0, %v3332
        %v3397 = vsub.f32 0.0, %v3333
        %v3398 = vsub.f32 0.0, %v3334
        %v3399 = vsub.f32 0.0, %v3335
        %v3400 = vsub.f32 0.0, %v3336
        %v3401 = vsub.f32 0.0, %v3337
        %v3402 = vsub.f32 0.0, %v3338
        %v3403 = vsub.f32 0.0, %v3339
        %v3404 = vsub.f32 0.0, %v3340
        %v3405 = vsub.f32 0.0, %v3341
        %v3406 = vsub.f32 0.0, %v3342
        %v3407 = vsub.f32 0.0, %v3343
        %v3408 = vsub.f32 0.0, %v3344
        %v3409 = vsub.f32 0.0, %v3345
        %v3410 = vsub.f32 0.0, %v3346
        %v3411 = vsub.f32 0.0, %v3347
        %v3412 = vsub.f32 0.0, %v3348
        %v3413 = vsub.f32 0.0, %v3349
        %v3414 = vsub.f32 0.0, %v3350
        %v3415 = vsub.f32 0.0, %v3351
        %v3416 = vsub.f32 0.0, %v3352
        %v3417 = vsub.f32 0.0, %v3353
        %v3418 = vsub.f32 0.0, %v3354
        %v3419 = vsub.f32 0.0, %v3355
        %v3420 = vsub.f32 0.0, %v3356
        %v3421 = vsub.f32 0.0, %v3357
        %v3422 = vsub.f32 0.0, %v3358
        %v3423 = vsub.f32 0.0, %v3359
        %v3424 = vsub.f32 0.0, %v3360
        %vm3425 = vcmp.ne.f32.partialorder %v3393, %v3393
        %vm3426 = vcmp.ne.f32.partialorder %v3394, %v3394
        %vm3427 = vcmp.ne.f32.partialorder %v3395, %v3395
        %vm3428 = vcmp.ne.f32.partialorder %v3396, %v3396
        %vm3429 = vcmp.ne.f32.partialorder %v3397, %v3397
        %vm3430 = vcmp.ne.f32.partialorder %v3398, %v3398
        %vm3431 = vcmp.ne.f32.partialorder %v3399, %v3399
        %vm3432 = vcmp.ne.f32.partialorder %v3400, %v3400
        %vm3433 = vcmp.ne.f32.partialorder %v3401, %v3401
        %vm3434 = vcmp.ne.f32.partialorder %v3402, %v3402
        %vm3435 = vcmp.ne.f32.partialorder %v3403, %v3403
        %vm3436 = vcmp.ne.f32.partialorder %v3404, %v3404
        %vm3437 = vcmp.ne.f32.partialorder %v3405, %v3405
        %vm3438 = vcmp.ne.f32.partialorder %v3406, %v3406
        %vm3439 = vcmp.ne.f32.partialorder %v3407, %v3407
        %vm3440 = vcmp.ne.f32.partialorder %v3408, %v3408
        %vm3441 = vcmp.ne.f32.partialorder %v3409, %v3409
        %vm3442 = vcmp.ne.f32.partialorder %v3410, %v3410
        %vm3443 = vcmp.ne.f32.partialorder %v3411, %v3411
        %vm3444 = vcmp.ne.f32.partialorder %v3412, %v3412
        %vm3445 = vcmp.ne.f32.partialorder %v3413, %v3413
        %vm3446 = vcmp.ne.f32.partialorder %v3414, %v3414
        %vm3447 = vcmp.ne.f32.partialorder %v3415, %v3415
        %vm3448 = vcmp.ne.f32.partialorder %v3416, %v3416
        %vm3449 = vcmp.ne.f32.partialorder %v3417, %v3417
        %vm3450 = vcmp.ne.f32.partialorder %v3418, %v3418
        %vm3451 = vcmp.ne.f32.partialorder %v3419, %v3419
        %vm3452 = vcmp.ne.f32.partialorder %v3420, %v3420
        %vm3453 = vcmp.ne.f32.partialorder %v3421, %v3421
        %vm3454 = vcmp.ne.f32.partialorder %v3422, %v3422
        %vm3455 = vcmp.ne.f32.partialorder %v3423, %v3423
        %vm3456 = vcmp.ne.f32.partialorder %v3424, %v3424
        %v3457 = vadd.f32 %v3329, 0.0
        %v3458 = vadd.f32 %v3330, 0.0
        %v3459 = vadd.f32 %v3331, 0.0
        %v3460 = vadd.f32 %v3332, 0.0
        %v3461 = vadd.f32 %v3333, 0.0
        %v3462 = vadd.f32 %v3334, 0.0
        %v3463 = vadd.f32 %v3335, 0.0
        %v3464 = vadd.f32 %v3336, 0.0
        %v3465 = vadd.f32 %v3337, 0.0
        %v3466 = vadd.f32 %v3338, 0.0
        %v3467 = vadd.f32 %v3339, 0.0
        %v3468 = vadd.f32 %v3340, 0.0
        %v3469 = vadd.f32 %v3341, 0.0
        %v3470 = vadd.f32 %v3342, 0.0
        %v3471 = vadd.f32 %v3343, 0.0
        %v3472 = vadd.f32 %v3344, 0.0
        %v3473 = vadd.f32 %v3345, 0.0
        %v3474 = vadd.f32 %v3346, 0.0
        %v3475 = vadd.f32 %v3347, 0.0
        %v3476 = vadd.f32 %v3348, 0.0
        %v3477 = vadd.f32 %v3349, 0.0
        %v3478 = vadd.f32 %v3350, 0.0
        %v3479 = vadd.f32 %v3351, 0.0
        %v3480 = vadd.f32 %v3352, 0.0
        %v3481 = vadd.f32 %v3353, 0.0
        %v3482 = vadd.f32 %v3354, 0.0
        %v3483 = vadd.f32 %v3355, 0.0
        %v3484 = vadd.f32 %v3356, 0.0
        %v3485 = vadd.f32 %v3357, 0.0
        %v3486 = vadd.f32 %v3358, 0.0
        %v3487 = vadd.f32 %v3359, 0.0
        %v3488 = vadd.f32 %v3360, 0.0
        %v3489 = vand.u32 2147483647, %v3393
        %v3490 = vand.u32 2147483647, %v3394
        %v3491 = vand.u32 2147483647, %v3395
        %v3492 = vand.u32 2147483647, %v3396
        %v3493 = vand.u32 2147483647, %v3397
        %v3494 = vand.u32 2147483647, %v3398
        %v3495 = vand.u32 2147483647, %v3399
        %v3496 = vand.u32 2147483647, %v3400
        %v3497 = vand.u32 2147483647, %v3401
        %v3498 = vand.u32 2147483647, %v3402
        %v3499 = vand.u32 2147483647, %v3403
        %v3500 = vand.u32 2147483647, %v3404
        %v3501 = vand.u32 2147483647, %v3405
        %v3502 = vand.u32 2147483647, %v3406
        %v3503 = vand.u32 2147483647, %v3407
        %v3504 = vand.u32 2147483647, %v3408
        %v3505 = vand.u32 2147483647, %v3409
        %v3506 = vand.u32 2147483647, %v3410
        %v3507 = vand.u32 2147483647, %v3411
        %v3508 = vand.u32 2147483647, %v3412
        %v3509 = vand.u32 2147483647, %v3413
        %v3510 = vand.u32 2147483647, %v3414
        %v3511 = vand.u32 2147483647, %v3415
        %v3512 = vand.u32 2147483647, %v3416
        %v3513 = vand.u32 2147483647, %v3417
        %v3514 = vand.u32 2147483647, %v3418
        %v3515 = vand.u32 2147483647, %v3419
        %v3516 = vand.u32 2147483647, %v3420
        %v3517 = vand.u32 2147483647, %v3421
        %v3518 = vand.u32 2147483647, %v3422
        %v3519 = vand.u32 2147483647, %v3423
        %v3520 = vand.u32 2147483647, %v3424
        %v3521 = vsub.f32 0.0, %v3489
        %v3522 = vsub.f32 0.0, %v3490
        %v3523 = vsub.f32 0.0, %v3491
        %v3524 = vsub.f32 0.0, %v3492
        %v3525 = vsub.f32 0.0, %v3493
        %v3526 = vsub.f32 0.0, %v3494
        %v3527 = vsub.f32 0.0, %v3495
        %v3528 = vsub.f32 0.0, %v3496
        %v3529 = vsub.f32 0.0, %v3497
        %v3530 = vsub.f32 0.0, %v3498
        %v3531 = vsub.f32 0.0, %v3499
        %v3532 = vsub.f32 0.0, %v3500
        %v3533 = vsub.f32 0.0, %v3501
        %v3534 = vsub.f32 0.0, %v3502
        %v3535 = vsub.f32 0.0, %v3503
        %v3536 = vsub.f32 0.0, %v3504
        %v3537 = vsub.f32 0.0, %v3505
        %v3538 = vsub.f32 0.0, %v3506
        %v3539 = vsub.f32 0.0, %v3507
        %v3540 = vsub.f32 0.0, %v3508
        %v3541 = vsub.f32 0.0, %v3509
        %v3542 = vsub.f32 0.0, %v3510
        %v3543 = vsub.f32 0.0, %v3511
        %v3544 = vsub.f32 0.0, %v3512
        %v3545 = vsub.f32 0.0, %v3513
        %v3546 = vsub.f32 0.0, %v3514
        %v3547 = vsub.f32 0.0, %v3515
        %v3548 = vsub.f32 0.0, %v3516
        %v3549 = vsub.f32 0.0, %v3517
        %v3550 = vsub.f32 0.0, %v3518
        %v3551 = vsub.f32 0.0, %v3519
        %v3552 = vsub.f32 0.0, %v3520
        %v3553 = vmul.f32 %v3521, 1.442695
        %v3554 = vpow.pop %v3553
        %v3555 = vmul.f32 %v3522, 1.442695
        %v3556 = vpow.pop %v3555
        %v3557 = vmul.f32 %v3523, 1.442695
        %v3558 = vpow.pop %v3557
        %v3559 = vmul.f32 %v3524, 1.442695
        %v3560 = vpow.pop %v3559
        %v3561 = vmul.f32 %v3525, 1.442695
        %v3562 = vpow.pop %v3561
        %v3563 = vmul.f32 %v3526, 1.442695
        %v3564 = vpow.pop %v3563
        %v3565 = vmul.f32 %v3527, 1.442695
        %v3566 = vpow.pop %v3565
        %v3567 = vmul.f32 %v3528, 1.442695
        %v3568 = vpow.pop %v3567
        %v3569 = vmul.f32 %v3529, 1.442695
        %v3570 = vpow.pop %v3569
        %v3571 = vmul.f32 %v3530, 1.442695
        %v3572 = vpow.pop %v3571
        %v3573 = vmul.f32 %v3531, 1.442695
        %v3574 = vpow.pop %v3573
        %v3575 = vmul.f32 %v3532, 1.442695
        %v3576 = vpow.pop %v3575
        %v3577 = vmul.f32 %v3533, 1.442695
        %v3578 = vpow.pop %v3577
        %v3579 = vmul.f32 %v3534, 1.442695
        %v3580 = vpow.pop %v3579
        %v3581 = vmul.f32 %v3535, 1.442695
        %v3582 = vpow.pop %v3581
        %v3583 = vmul.f32 %v3536, 1.442695
        %v3584 = vpow.pop %v3583
        %v3585 = vmul.f32 %v3537, 1.442695
        %v3586 = vpow.pop %v3585
        %v3587 = vmul.f32 %v3538, 1.442695
        %v3588 = vpow.pop %v3587
        %v3589 = vmul.f32 %v3539, 1.442695
        %v3590 = vpow.pop %v3589
        %v3591 = vmul.f32 %v3540, 1.442695
        %v3592 = vpow.pop %v3591
        %v3593 = vmul.f32 %v3541, 1.442695
        %v3594 = vpow.pop %v3593
        %v3595 = vmul.f32 %v3542, 1.442695
        %v3596 = vpow.pop %v3595
        %v3597 = vmul.f32 %v3543, 1.442695
        %v3598 = vpow.pop %v3597
        %v3599 = vmul.f32 %v3544, 1.442695
        %v3600 = vpow.pop %v3599
        %v3601 = vmul.f32 %v3545, 1.442695
        %v3602 = vpow.pop %v3601
        %v3603 = vmul.f32 %v3546, 1.442695
        %v3604 = vpow.pop %v3603
        %v3605 = vmul.f32 %v3547, 1.442695
        %v3606 = vpow.pop %v3605
        %v3607 = vmul.f32 %v3548, 1.442695
        %v3608 = vpow.pop %v3607
        %v3609 = vmul.f32 %v3549, 1.442695
        %v3610 = vpow.pop %v3609
        %v3611 = vmul.f32 %v3550, 1.442695
        %v3612 = vpow.pop %v3611
        %v3613 = vmul.f32 %v3551, 1.442695
        %v3614 = vpow.pop %v3613
        %v3615 = vmul.f32 %v3552, 1.442695
        %v3616 = vpow.pop %v3615
        %v3617 = vadd.f32 %v3554, 1.0
        %v3618 = vlog2.pop %v3617
        %v3619 = vmul.f32 %v3618, 0.6931472
        %v3620 = vmul.f32 -0.5, %v3554
        %v3621 = vadd.f32 %v3620, 1.0
        %v3622 = vmul.f32 %v3621, %v3554
        %v3623 = vand.u32 2147483647, %v3554
        %vm3624 = vcmp.lt.f32.partialorder %v3623, 0.0004427343
        %v3625 = vsel %vm3624, %v3622, %v3619
        %v3626 = vadd.f32 %v3556, 1.0
        %v3627 = vlog2.pop %v3626
        %v3628 = vmul.f32 %v3627, 0.6931472
        %v3629 = vmul.f32 -0.5, %v3556
        %v3630 = vadd.f32 %v3629, 1.0
        %v3631 = vmul.f32 %v3630, %v3556
        %v3632 = vand.u32 2147483647, %v3556
        %vm3633 = vcmp.lt.f32.partialorder %v3632, 0.0004427343
        %v3634 = vsel %vm3633, %v3631, %v3628
        %v3635 = vadd.f32 %v3558, 1.0
        %v3636 = vlog2.pop %v3635
        %v3637 = vmul.f32 %v3636, 0.6931472
        %v3638 = vmul.f32 -0.5, %v3558
        %v3639 = vadd.f32 %v3638, 1.0
        %v3640 = vmul.f32 %v3639, %v3558
        %v3641 = vand.u32 2147483647, %v3558
        %vm3642 = vcmp.lt.f32.partialorder %v3641, 0.0004427343
        %v3643 = vsel %vm3642, %v3640, %v3637
        %v3644 = vadd.f32 %v3560, 1.0
        %v3645 = vlog2.pop %v3644
        %v3646 = vmul.f32 %v3645, 0.6931472
        %v3647 = vmul.f32 -0.5, %v3560
        %v3648 = vadd.f32 %v3647, 1.0
        %v3649 = vmul.f32 %v3648, %v3560
        %v3650 = vand.u32 2147483647, %v3560
        %vm3651 = vcmp.lt.f32.partialorder %v3650, 0.0004427343
        %v3652 = vsel %vm3651, %v3649, %v3646
        %v3653 = vadd.f32 %v3562, 1.0
        %v3654 = vlog2.pop %v3653
        %v3655 = vmul.f32 %v3654, 0.6931472
        %v3656 = vmul.f32 -0.5, %v3562
        %v3657 = vadd.f32 %v3656, 1.0
        %v3658 = vmul.f32 %v3657, %v3562
        %v3659 = vand.u32 2147483647, %v3562
        %vm3660 = vcmp.lt.f32.partialorder %v3659, 0.0004427343
        %v3661 = vsel %vm3660, %v3658, %v3655
        %v3662 = vadd.f32 %v3564, 1.0
        %v3663 = vlog2.pop %v3662
        %v3664 = vmul.f32 %v3663, 0.6931472
        %v3665 = vmul.f32 -0.5, %v3564
        %v3666 = vadd.f32 %v3665, 1.0
        %v3667 = vmul.f32 %v3666, %v3564
        %v3668 = vand.u32 2147483647, %v3564
        %vm3669 = vcmp.lt.f32.partialorder %v3668, 0.0004427343
        %v3670 = vsel %vm3669, %v3667, %v3664
        %v3671 = vadd.f32 %v3566, 1.0
        %v3672 = vlog2.pop %v3671
        %v3673 = vmul.f32 %v3672, 0.6931472
        %v3674 = vmul.f32 -0.5, %v3566
        %v3675 = vadd.f32 %v3674, 1.0
        %v3676 = vmul.f32 %v3675, %v3566
        %v3677 = vand.u32 2147483647, %v3566
        %vm3678 = vcmp.lt.f32.partialorder %v3677, 0.0004427343
        %v3679 = vsel %vm3678, %v3676, %v3673
        %v3680 = vadd.f32 %v3568, 1.0
        %v3681 = vlog2.pop %v3680
        %v3682 = vmul.f32 %v3681, 0.6931472
        %v3683 = vmul.f32 -0.5, %v3568
        %v3684 = vadd.f32 %v3683, 1.0
        %v3685 = vmul.f32 %v3684, %v3568
        %v3686 = vand.u32 2147483647, %v3568
        %vm3687 = vcmp.lt.f32.partialorder %v3686, 0.0004427343
        %v3688 = vsel %vm3687, %v3685, %v3682
        %v3689 = vadd.f32 %v3570, 1.0
        %v3690 = vlog2.pop %v3689
        %v3691 = vmul.f32 %v3690, 0.6931472
        %v3692 = vmul.f32 -0.5, %v3570
        %v3693 = vadd.f32 %v3692, 1.0
        %v3694 = vmul.f32 %v3693, %v3570
        %v3695 = vand.u32 2147483647, %v3570
        %vm3696 = vcmp.lt.f32.partialorder %v3695, 0.0004427343
        %v3697 = vsel %vm3696, %v3694, %v3691
        %v3698 = vadd.f32 %v3572, 1.0
        %v3699 = vlog2.pop %v3698
        %v3700 = vmul.f32 %v3699, 0.6931472
        %v3701 = vmul.f32 -0.5, %v3572
        %v3702 = vadd.f32 %v3701, 1.0
        %v3703 = vmul.f32 %v3702, %v3572
        %v3704 = vand.u32 2147483647, %v3572
        %vm3705 = vcmp.lt.f32.partialorder %v3704, 0.0004427343
        %v3706 = vsel %vm3705, %v3703, %v3700
        %v3707 = vadd.f32 %v3574, 1.0
        %v3708 = vlog2.pop %v3707
        %v3709 = vmul.f32 %v3708, 0.6931472
        %v3710 = vmul.f32 -0.5, %v3574
        %v3711 = vadd.f32 %v3710, 1.0
        %v3712 = vmul.f32 %v3711, %v3574
        %v3713 = vand.u32 2147483647, %v3574
        %vm3714 = vcmp.lt.f32.partialorder %v3713, 0.0004427343
        %v3715 = vsel %vm3714, %v3712, %v3709
        %v3716 = vadd.f32 %v3576, 1.0
        %v3717 = vlog2.pop %v3716
        %v3718 = vmul.f32 %v3717, 0.6931472
        %v3719 = vmul.f32 -0.5, %v3576
        %v3720 = vadd.f32 %v3719, 1.0
        %v3721 = vmul.f32 %v3720, %v3576
        %v3722 = vand.u32 2147483647, %v3576
        %vm3723 = vcmp.lt.f32.partialorder %v3722, 0.0004427343
        %v3724 = vsel %vm3723, %v3721, %v3718
        %v3725 = vadd.f32 %v3578, 1.0
        %v3726 = vlog2.pop %v3725
        %v3727 = vmul.f32 %v3726, 0.6931472
        %v3728 = vmul.f32 -0.5, %v3578
        %v3729 = vadd.f32 %v3728, 1.0
        %v3730 = vmul.f32 %v3729, %v3578
        %v3731 = vand.u32 2147483647, %v3578
        %vm3732 = vcmp.lt.f32.partialorder %v3731, 0.0004427343
        %v3733 = vsel %vm3732, %v3730, %v3727
        %v3734 = vadd.f32 %v3580, 1.0
        %v3735 = vlog2.pop %v3734
        %v3736 = vmul.f32 %v3735, 0.6931472
        %v3737 = vmul.f32 -0.5, %v3580
        %v3738 = vadd.f32 %v3737, 1.0
        %v3739 = vmul.f32 %v3738, %v3580
        %v3740 = vand.u32 2147483647, %v3580
        %vm3741 = vcmp.lt.f32.partialorder %v3740, 0.0004427343
        %v3742 = vsel %vm3741, %v3739, %v3736
        %v3743 = vadd.f32 %v3582, 1.0
        %v3744 = vlog2.pop %v3743
        %v3745 = vmul.f32 %v3744, 0.6931472
        %v3746 = vmul.f32 -0.5, %v3582
        %v3747 = vadd.f32 %v3746, 1.0
        %v3748 = vmul.f32 %v3747, %v3582
        %v3749 = vand.u32 2147483647, %v3582
        %vm3750 = vcmp.lt.f32.partialorder %v3749, 0.0004427343
        %v3751 = vsel %vm3750, %v3748, %v3745
        %v3752 = vadd.f32 %v3584, 1.0
        %v3753 = vlog2.pop %v3752
        %v3754 = vmul.f32 %v3753, 0.6931472
        %v3755 = vmul.f32 -0.5, %v3584
        %v3756 = vadd.f32 %v3755, 1.0
        %v3757 = vmul.f32 %v3756, %v3584
        %v3758 = vand.u32 2147483647, %v3584
        %vm3759 = vcmp.lt.f32.partialorder %v3758, 0.0004427343
        %v3760 = vsel %vm3759, %v3757, %v3754
        %v3761 = vadd.f32 %v3586, 1.0
        %v3762 = vlog2.pop %v3761
        %v3763 = vmul.f32 %v3762, 0.6931472
        %v3764 = vmul.f32 -0.5, %v3586
        %v3765 = vadd.f32 %v3764, 1.0
        %v3766 = vmul.f32 %v3765, %v3586
        %v3767 = vand.u32 2147483647, %v3586
        %vm3768 = vcmp.lt.f32.partialorder %v3767, 0.0004427343
        %v3769 = vsel %vm3768, %v3766, %v3763
        %v3770 = vadd.f32 %v3588, 1.0
        %v3771 = vlog2.pop %v3770
        %v3772 = vmul.f32 %v3771, 0.6931472
        %v3773 = vmul.f32 -0.5, %v3588
        %v3774 = vadd.f32 %v3773, 1.0
        %v3775 = vmul.f32 %v3774, %v3588
        %v3776 = vand.u32 2147483647, %v3588
        %vm3777 = vcmp.lt.f32.partialorder %v3776, 0.0004427343
        %v3778 = vsel %vm3777, %v3775, %v3772
        %v3779 = vadd.f32 %v3590, 1.0
        %v3780 = vlog2.pop %v3779
        %v3781 = vmul.f32 %v3780, 0.6931472
        %v3782 = vmul.f32 -0.5, %v3590
        %v3783 = vadd.f32 %v3782, 1.0
        %v3784 = vmul.f32 %v3783, %v3590
        %v3785 = vand.u32 2147483647, %v3590
        %vm3786 = vcmp.lt.f32.partialorder %v3785, 0.0004427343
        %v3787 = vsel %vm3786, %v3784, %v3781
        %v3788 = vadd.f32 %v3592, 1.0
        %v3789 = vlog2.pop %v3788
        %v3790 = vmul.f32 %v3789, 0.6931472
        %v3791 = vmul.f32 -0.5, %v3592
        %v3792 = vadd.f32 %v3791, 1.0
        %v3793 = vmul.f32 %v3792, %v3592
        %v3794 = vand.u32 2147483647, %v3592
        %vm3795 = vcmp.lt.f32.partialorder %v3794, 0.0004427343
        %v3796 = vsel %vm3795, %v3793, %v3790
        %v3797 = vadd.f32 %v3594, 1.0
        %v3798 = vlog2.pop %v3797
        %v3799 = vmul.f32 %v3798, 0.6931472
        %v3800 = vmul.f32 -0.5, %v3594
        %v3801 = vadd.f32 %v3800, 1.0
        %v3802 = vmul.f32 %v3801, %v3594
        %v3803 = vand.u32 2147483647, %v3594
        %vm3804 = vcmp.lt.f32.partialorder %v3803, 0.0004427343
        %v3805 = vsel %vm3804, %v3802, %v3799
        %v3806 = vadd.f32 %v3596, 1.0
        %v3807 = vlog2.pop %v3806
        %v3808 = vmul.f32 %v3807, 0.6931472
        %v3809 = vmul.f32 -0.5, %v3596
        %v3810 = vadd.f32 %v3809, 1.0
        %v3811 = vmul.f32 %v3810, %v3596
        %v3812 = vand.u32 2147483647, %v3596
        %vm3813 = vcmp.lt.f32.partialorder %v3812, 0.0004427343
        %v3814 = vsel %vm3813, %v3811, %v3808
        %v3815 = vadd.f32 %v3598, 1.0
        %v3816 = vlog2.pop %v3815
        %v3817 = vmul.f32 %v3816, 0.6931472
        %v3818 = vmul.f32 -0.5, %v3598
        %v3819 = vadd.f32 %v3818, 1.0
        %v3820 = vmul.f32 %v3819, %v3598
        %v3821 = vand.u32 2147483647, %v3598
        %vm3822 = vcmp.lt.f32.partialorder %v3821, 0.0004427343
        %v3823 = vsel %vm3822, %v3820, %v3817
        %v3824 = vadd.f32 %v3600, 1.0
        %v3825 = vlog2.pop %v3824
        %v3826 = vmul.f32 %v3825, 0.6931472
        %v3827 = vmul.f32 -0.5, %v3600
        %v3828 = vadd.f32 %v3827, 1.0
        %v3829 = vmul.f32 %v3828, %v3600
        %v3830 = vand.u32 2147483647, %v3600
        %vm3831 = vcmp.lt.f32.partialorder %v3830, 0.0004427343
        %v3832 = vsel %vm3831, %v3829, %v3826
        %v3833 = vadd.f32 %v3602, 1.0
        %v3834 = vlog2.pop %v3833
        %v3835 = vmul.f32 %v3834, 0.6931472
        %v3836 = vmul.f32 -0.5, %v3602
        %v3837 = vadd.f32 %v3836, 1.0
        %v3838 = vmul.f32 %v3837, %v3602
        %v3839 = vand.u32 2147483647, %v3602
        %vm3840 = vcmp.lt.f32.partialorder %v3839, 0.0004427343
        %v3841 = vsel %vm3840, %v3838, %v3835
        %v3842 = vadd.f32 %v3604, 1.0
        %v3843 = vlog2.pop %v3842
        %v3844 = vmul.f32 %v3843, 0.6931472
        %v3845 = vmul.f32 -0.5, %v3604
        %v3846 = vadd.f32 %v3845, 1.0
        %v3847 = vmul.f32 %v3846, %v3604
        %v3848 = vand.u32 2147483647, %v3604
        %vm3849 = vcmp.lt.f32.partialorder %v3848, 0.0004427343
        %v3850 = vsel %vm3849, %v3847, %v3844
        %v3851 = vadd.f32 %v3606, 1.0
        %v3852 = vlog2.pop %v3851
        %v3853 = vmul.f32 %v3852, 0.6931472
        %v3854 = vmul.f32 -0.5, %v3606
        %v3855 = vadd.f32 %v3854, 1.0
        %v3856 = vmul.f32 %v3855, %v3606
        %v3857 = vand.u32 2147483647, %v3606
        %vm3858 = vcmp.lt.f32.partialorder %v3857, 0.0004427343
        %v3859 = vsel %vm3858, %v3856, %v3853
        %v3860 = vadd.f32 %v3608, 1.0
        %v3861 = vlog2.pop %v3860
        %v3862 = vmul.f32 %v3861, 0.6931472
        %v3863 = vmul.f32 -0.5, %v3608
        %v3864 = vadd.f32 %v3863, 1.0
        %v3865 = vmul.f32 %v3864, %v3608
        %v3866 = vand.u32 2147483647, %v3608
        %vm3867 = vcmp.lt.f32.partialorder %v3866, 0.0004427343
        %v3868 = vsel %vm3867, %v3865, %v3862
        %v3869 = vadd.f32 %v3610, 1.0
        %v3870 = vlog2.pop %v3869
        %v3871 = vmul.f32 %v3870, 0.6931472
        %v3872 = vmul.f32 -0.5, %v3610
        %v3873 = vadd.f32 %v3872, 1.0
        %v3874 = vmul.f32 %v3873, %v3610
        %v3875 = vand.u32 2147483647, %v3610
        %vm3876 = vcmp.lt.f32.partialorder %v3875, 0.0004427343
        %v3877 = vsel %vm3876, %v3874, %v3871
        %v3878 = vadd.f32 %v3612, 1.0
        %v3879 = vlog2.pop %v3878
        %v3880 = vmul.f32 %v3879, 0.6931472
        %v3881 = vmul.f32 -0.5, %v3612
        %v3882 = vadd.f32 %v3881, 1.0
        %v3883 = vmul.f32 %v3882, %v3612
        %v3884 = vand.u32 2147483647, %v3612
        %vm3885 = vcmp.lt.f32.partialorder %v3884, 0.0004427343
        %v3886 = vsel %vm3885, %v3883, %v3880
        %v3887 = vadd.f32 %v3614, 1.0
        %v3888 = vlog2.pop %v3887
        %v3889 = vmul.f32 %v3888, 0.6931472
        %v3890 = vmul.f32 -0.5, %v3614
        %v3891 = vadd.f32 %v3890, 1.0
        %v3892 = vmul.f32 %v3891, %v3614
        %v3893 = vand.u32 2147483647, %v3614
        %vm3894 = vcmp.lt.f32.partialorder %v3893, 0.0004427343
        %v3895 = vsel %vm3894, %v3892, %v3889
        %v3896 = vadd.f32 %v3616, 1.0
        %v3897 = vlog2.pop %v3896
        %v3898 = vmul.f32 %v3897, 0.6931472
        %v3899 = vmul.f32 -0.5, %v3616
        %v3900 = vadd.f32 %v3899, 1.0
        %v3901 = vmul.f32 %v3900, %v3616
        %v3902 = vand.u32 2147483647, %v3616
        %vm3903 = vcmp.lt.f32.partialorder %v3902, 0.0004427343
        %v3904 = vsel %vm3903, %v3901, %v3898
        %v3905 = vadd.f32 %v3361, %v3625
        %v3906 = vadd.f32 %v3362, %v3634
        %v3907 = vadd.f32 %v3363, %v3643
        %v3908 = vadd.f32 %v3364, %v3652
        %v3909 = vadd.f32 %v3365, %v3661
        %v3910 = vadd.f32 %v3366, %v3670
        %v3911 = vadd.f32 %v3367, %v3679
        %v3912 = vadd.f32 %v3368, %v3688
        %v3913 = vadd.f32 %v3369, %v3697
        %v3914 = vadd.f32 %v3370, %v3706
        %v3915 = vadd.f32 %v3371, %v3715
        %v3916 = vadd.f32 %v3372, %v3724
        %v3917 = vadd.f32 %v3373, %v3733
        %v3918 = vadd.f32 %v3374, %v3742
        %v3919 = vadd.f32 %v3375, %v3751
        %v3920 = vadd.f32 %v3376, %v3760
        %v3921 = vadd.f32 %v3377, %v3769
        %v3922 = vadd.f32 %v3378, %v3778
        %v3923 = vadd.f32 %v3379, %v3787
        %v3924 = vadd.f32 %v3380, %v3796
        %v3925 = vadd.f32 %v3381, %v3805
        %v3926 = vadd.f32 %v3382, %v3814
        %v3927 = vadd.f32 %v3383, %v3823
        %v3928 = vadd.f32 %v3384, %v3832
        %v3929 = vadd.f32 %v3385, %v3841
        %v3930 = vadd.f32 %v3386, %v3850
        %v3931 = vadd.f32 %v3387, %v3859
        %v3932 = vadd.f32 %v3388, %v3868
        %v3933 = vadd.f32 %v3389, %v3877
        %v3934 = vadd.f32 %v3390, %v3886
        %v3935 = vadd.f32 %v3391, %v3895
        %v3936 = vadd.f32 %v3392, %v3904
        %v3937 = vsel %vm3425, %v3457, %v3905
        %v3938 = vsel %vm3426, %v3458, %v3906
        %v3939 = vsel %vm3427, %v3459, %v3907
        %v3940 = vsel %vm3428, %v3460, %v3908
        %v3941 = vsel %vm3429, %v3461, %v3909
        %v3942 = vsel %vm3430, %v3462, %v3910
        %v3943 = vsel %vm3431, %v3463, %v3911
        %v3944 = vsel %vm3432, %v3464, %v3912
        %v3945 = vsel %vm3433, %v3465, %v3913
        %v3946 = vsel %vm3434, %v3466, %v3914
        %v3947 = vsel %vm3435, %v3467, %v3915
        %v3948 = vsel %vm3436, %v3468, %v3916
        %v3949 = vsel %vm3437, %v3469, %v3917
        %v3950 = vsel %vm3438, %v3470, %v3918
        %v3951 = vsel %vm3439, %v3471, %v3919
        %v3952 = vsel %vm3440, %v3472, %v3920
        %v3953 = vsel %vm3441, %v3473, %v3921
        %v3954 = vsel %vm3442, %v3474, %v3922
        %v3955 = vsel %vm3443, %v3475, %v3923
        %v3956 = vsel %vm3444, %v3476, %v3924
        %v3957 = vsel %vm3445, %v3477, %v3925
        %v3958 = vsel %vm3446, %v3478, %v3926
        %v3959 = vsel %vm3447, %v3479, %v3927
        %v3960 = vsel %vm3448, %v3480, %v3928
        %v3961 = vsel %vm3449, %v3481, %v3929
        %v3962 = vsel %vm3450, %v3482, %v3930
        %v3963 = vsel %vm3451, %v3483, %v3931
        %v3964 = vsel %vm3452, %v3484, %v3932
        %v3965 = vsel %vm3453, %v3485, %v3933
        %v3966 = vsel %vm3454, %v3486, %v3934
        %v3967 = vsel %vm3455, %v3487, %v3935
        %v3968 = vsel %vm3456, %v3488, %v3936
        %v3969 = vsub.f32 0.0, %v3937
        %v3970 = vsub.f32 0.0, %v3938
        %v3971 = vsub.f32 0.0, %v3939
        %v3972 = vsub.f32 0.0, %v3940
        %v3973 = vsub.f32 0.0, %v3941
        %v3974 = vsub.f32 0.0, %v3942
        %v3975 = vsub.f32 0.0, %v3943
        %v3976 = vsub.f32 0.0, %v3944
        %v3977 = vsub.f32 0.0, %v3945
        %v3978 = vsub.f32 0.0, %v3946
        %v3979 = vsub.f32 0.0, %v3947
        %v3980 = vsub.f32 0.0, %v3948
        %v3981 = vsub.f32 0.0, %v3949
        %v3982 = vsub.f32 0.0, %v3950
        %v3983 = vsub.f32 0.0, %v3951
        %v3984 = vsub.f32 0.0, %v3952
        %v3985 = vsub.f32 0.0, %v3953
        %v3986 = vsub.f32 0.0, %v3954
        %v3987 = vsub.f32 0.0, %v3955
        %v3988 = vsub.f32 0.0, %v3956
        %v3989 = vsub.f32 0.0, %v3957
        %v3990 = vsub.f32 0.0, %v3958
        %v3991 = vsub.f32 0.0, %v3959
        %v3992 = vsub.f32 0.0, %v3960
        %v3993 = vsub.f32 0.0, %v3961
        %v3994 = vsub.f32 0.0, %v3962
        %v3995 = vsub.f32 0.0, %v3963
        %v3996 = vsub.f32 0.0, %v3964
        %v3997 = vsub.f32 0.0, %v3965
        %v3998 = vsub.f32 0.0, %v3966
        %v3999 = vsub.f32 0.0, %v3967
        %v4000 = vsub.f32 0.0, %v3968
        %v4001 = vsub.f32 %v3041, %v3969
        %v4002 = vsub.f32 %v3042, %v3970
        %v4003 = vsub.f32 %v3043, %v3971
        %v4004 = vsub.f32 %v3044, %v3972
        %v4005 = vsub.f32 %v3045, %v3973
        %v4006 = vsub.f32 %v3046, %v3974
        %v4007 = vsub.f32 %v3047, %v3975
        %v4008 = vsub.f32 %v3048, %v3976
        %v4009 = vsub.f32 %v3049, %v3977
        %v4010 = vsub.f32 %v3050, %v3978
        %v4011 = vsub.f32 %v3051, %v3979
        %v4012 = vsub.f32 %v3052, %v3980
        %v4013 = vsub.f32 %v3053, %v3981
        %v4014 = vsub.f32 %v3054, %v3982
        %v4015 = vsub.f32 %v3055, %v3983
        %v4016 = vsub.f32 %v3056, %v3984
        %v4017 = vsub.f32 %v3057, %v3985
        %v4018 = vsub.f32 %v3058, %v3986
        %v4019 = vsub.f32 %v3059, %v3987
        %v4020 = vsub.f32 %v3060, %v3988
        %v4021 = vsub.f32 %v3061, %v3989
        %v4022 = vsub.f32 %v3062, %v3990
        %v4023 = vsub.f32 %v3063, %v3991
        %v4024 = vsub.f32 %v3064, %v3992
        %v4025 = vsub.f32 %v3065, %v3993
        %v4026 = vsub.f32 %v3066, %v3994
        %v4027 = vsub.f32 %v3067, %v3995
        %v4028 = vsub.f32 %v3068, %v3996
        %v4029 = vsub.f32 %v3069, %v3997
        %v4030 = vsub.f32 %v3070, %v3998
        %v4031 = vsub.f32 %v3071, %v3999
        %v4032 = vsub.f32 %v3072, %v4000
        %4033 = vst.msk [vmem:[%s6] sm:$0xff] %vm2205, %v4001
        %4034 = vst.msk [vmem:[%s6 + $0x8] sm:$0xff] %vm2205, %v4002
        %4035 = vst.msk [vmem:[%s6 + $0x10] sm:$0xff] %vm2205, %v4003
        %4036 = vst.msk [vmem:[%s6 + $0x18] sm:$0xff] %vm2205, %v4004
        %4037 = vst.msk [vmem:[%s6 + $0x20] sm:$0xff] %vm2205, %v4005
        %4038 = vst.msk [vmem:[%s6 + $0x28] sm:$0xff] %vm2205, %v4006
        %4039 = vst.msk [vmem:[%s6 + $0x30] sm:$0xff] %vm2205, %v4007
        %4040 = vst.msk [vmem:[%s6 + $0x38] sm:$0xff] %vm2205, %v4008
        %4041 = vst.msk [vmem:[%s6 + $0x40] sm:$0xff] %vm2205, %v4009
        %4042 = vst.msk [vmem:[%s6 + $0x48] sm:$0xff] %vm2205, %v4010
        %4043 = vst.msk [vmem:[%s6 + $0x50] sm:$0xff] %vm2205, %v4011
        %4044 = vst.msk [vmem:[%s6 + $0x58] sm:$0xff] %vm2205, %v4012
        %4045 = vst.msk [vmem:[%s6 + $0x60] sm:$0xff] %vm2205, %v4013
        %4046 = vst.msk [vmem:[%s6 + $0x68] sm:$0xff] %vm2205, %v4014
        %4047 = vst.msk [vmem:[%s6 + $0x70] sm:$0xff] %vm2205, %v4015
        %4048 = vst.msk [vmem:[%s6 + $0x78] sm:$0xff] %vm2205, %v4016
        %4049 = vst.msk [vmem:[%s6 + $0x80] sm:$0xff] %vm2205, %v4017
        %4050 = vst.msk [vmem:[%s6 + $0x88] sm:$0xff] %vm2205, %v4018
        %4051 = vst.msk [vmem:[%s6 + $0x90] sm:$0xff] %vm2205, %v4019
        %4052 = vst.msk [vmem:[%s6 + $0x98] sm:$0xff] %vm2205, %v4020
        %4053 = vst.msk [vmem:[%s6 + $0xa0] sm:$0xff] %vm2205, %v4021
        %4054 = vst.msk [vmem:[%s6 + $0xa8] sm:$0xff] %vm2205, %v4022
        %4055 = vst.msk [vmem:[%s6 + $0xb0] sm:$0xff] %vm2205, %v4023
        %4056 = vst.msk [vmem:[%s6 + $0xb8] sm:$0xff] %vm2205, %v4024
        %4057 = vst.msk [vmem:[%s6 + $0xc0] sm:$0xff] %vm2205, %v4025
        %4058 = vst.msk [vmem:[%s6 + $0xc8] sm:$0xff] %vm2205, %v4026
        %4059 = vst.msk [vmem:[%s6 + $0xd0] sm:$0xff] %vm2205, %v4027
        %4060 = vst.msk [vmem:[%s6 + $0xd8] sm:$0xff] %vm2205, %v4028
        %4061 = vst.msk [vmem:[%s6 + $0xe0] sm:$0xff] %vm2205, %v4029
        %4062 = vst.msk [vmem:[%s6 + $0xe8] sm:$0xff] %vm2205, %v4030
        %4063 = vst.msk [vmem:[%s6 + $0xf0] sm:$0xff] %vm2205, %v4031
        %4064 = vst.msk [vmem:[%s6 + $0xf8] sm:$0xff] %vm2205, %v4032
      $region37: #{forward.1} parent=28 // pred_fallthru
        _
    $region29: #{forward.1} parent=1 // pred_fallthru
      _
    // Predicated region
    $region38: #{forward.1} parent=1 // pred_check
      _
    $region39: #{forward.1} parent=1 // pred_check_branch
      %4066 = sbr.rel (0) target = $region41
    $region40: #{forward.1} parent=1 // pred_region
      %s4068 = ssub.s32 4096, 4096
      %4069 = vsyncadd [#allocation9], %s4068
      %s4070 = sshll.u32 [#allocation8], 4
      %s4071 = int_to_ptr.vmem [resolvable:$true] %s4070
      %4076 = dma.vmem_to_hbm [thread:$0]  %s4071, 4096, %s5, [#allocation9], 128, 128, 8
    $region41: #{forward.1} parent=1 // pred_fallthru
      _
    // Predicated region
    $region42: #{forward.1} parent=1 // pred_check
      _
    $region43: #{forward.1} parent=1 // pred_check_branch
      %4078 = sbr.rel (0) target = $region45
    $region44: #{forward.1} parent=1 // pred_region
      _
    $region45: #{forward.1} parent=1 // pred_fallthru
      _
    // Predicated region
    $region46: #{forward.1} parent=1 // pred_check
      _
    $region47: #{forward.1} parent=1 // pred_check_branch
      %4080 = sbr.rel (0) target = $region49
    $region48: #{forward.1} parent=1 // pred_region
      %4081 = dma.done [#allocation9], 4096
    $region49: #{forward.1} parent=1 // pred_fallthru
      _
    // Predicated region
    $region50: #{forward.1} parent=1 // pred_check
      _
    $region51: #{forward.1} parent=1 // pred_check_branch
      %4083 = sbr.rel (0) target = $region53
    $region52: #{forward.1} parent=1 // pred_region
      _
    $region53: #{forward.1} parent=1 // pred_fallthru
      _
    %4084 = vsyncpa [#allocation9], 1

</llo_original>
